<compile_context>
chip_gen: v7x
topology: tpu7x:2x2x1
jax: 0.10.0
libtpu: 0.0.40
codegen_flags: <defaults>
</compile_context>

<pallas_src>
from functools import partial

import jax
import jax.numpy as jnp
from jax import lax
from jax.experimental import pallas as pl
from jax.experimental.pallas import tpu as pltpu


# Geometry for the module's default input_size=(32, 32), conv kernels 5x5.
# TODO(synk): derive these constants from input_size to support non-32x32 inputs.
K = 5
H_IN, W_IN, C_IN = 32, 32, 3
C_IN_PAD = 8                       # conv1 input channels padded 3 -> 8 (zero rows)
C1_PAD = 8                         # conv1 output channels padded 6 -> 8 (zero weight rows)
C2 = 16                            # conv2 output channels
S0 = 1152                          # padded flat input width (32*32=1024; conv1 taps reach col 1027)
S1 = (H_IN - K + 1) * W_IN         # 896: conv1 spread output width (28 rows x 32)
HP1 = (H_IN - K + 1) // 2          # 14
P1W = 512                          # pool1 half-spread width: 14*32 + 64 zero pad (conv2 taps reach 455)
HO2 = HP1 - K + 1                  # 10
S2 = HO2 * W_IN                    # 320: conv2 spread output width (10 rows x 32)
HP2 = HO2 // 2                     # 5
WP2 = ((W_IN - K + 1) // 2 - K + 1) // 2   # 5
FC_FEAT = HP2 * 4 * WP2            # 100: per-channel compacted pool2 feature width
D_PAD = 128                        # fc1/fc2/fc3 dims padded to one lane tile


# ----------------------------------------------------------------------------
# Fused kernel
# ----------------------------------------------------------------------------
def _simplenet_kernel(x_ref, w1_ref, b1_ref, w2_ref, b2_ref,
                      fc1w_ref, fc1b_ref, fc2w_ref, fc2b_ref,
                      fc3w_ref, fc3b_ref, out_ref, feat_ref):
    b_blk = x_ref.shape[0]

    def shift_left(v, s):
        """v shifted left by s lanes (tail filled with zeros)."""
        pad = jnp.zeros((v.shape[0], s), v.dtype)
        return jnp.concatenate([v[:, s:], pad], axis=1)

    def pool2x2(v, row_stride, col_stride):
        # 2x2 / stride-2 max pool on a spread layout: pooled value for (ph, pw)
        # lands at column 2*row_stride*ph + 2*col_stride*pw (other columns: junk
        # that is never read by a valid downstream position).
        h = jnp.maximum(v, shift_left(v, row_stride))
        return jnp.maximum(h, shift_left(h, col_stride))

    def conv_relu(x, w_ref_, b_ref_, out_w, row_stride, col_stride):
        # Valid 5x5 conv + bias + ReLU on a spread layout.
        #   x      : (cin_pad, in_w) f32, pixel (h, w) at column h*row_stride + w*col_stride
        #   w_ref_ : (K, cout, K*cin_pad) with [i, co, j*cin_pad + ci]
        #   result : (cout, out_w) f32, output (oh, ow) at column oh*row_stride + ow*col_stride
        cout = w_ref_.shape[1]
        acc = jnp.zeros((cout, out_w), jnp.float32)
        for i in range(K):               # one matmul per kernel row (contraction = K*cin_pad)
            base = i * row_stride
            patch = jnp.concatenate(
                [x[:, base + j * col_stride: base + j * col_stride + out_w]
                 for j in range(K)], axis=0)          # (K*cin_pad, out_w), tile-aligned concat
            acc = acc + jnp.dot(w_ref_[i], patch,
                                preferred_element_type=jnp.float32)
        return jnp.maximum(acc + b_ref_[...], 0.0)

    def per_image(b, carry):
        x = x_ref[b]                                              # (8, 1152) f32
        # conv1 + ReLU: (8, 896); output (oh, ow) at column 32*oh + ow
        y1 = conv_relu(x, w1_ref, b1_ref, S1, W_IN, 1)
        # pool1: pooled (ph, pw) at column 64*ph + 2*pw
        p1 = pool2x2(y1, W_IN, 1)
        # compact along H only (contiguous 32-lane blocks) -> (8, 512);
        # pooled (ph, pw) now at column 32*ph + 2*pw
        p1h = jnp.concatenate(
            [p1[:, 2 * W_IN * ph: 2 * W_IN * ph + W_IN] for ph in range(HP1)]
            + [jnp.zeros((C1_PAD, P1W - HP1 * W_IN), jnp.float32)], axis=1)
        # conv2 + ReLU: (16, 320); output (oh2, ow2) at column 32*oh2 + 2*ow2
        y2 = conv_relu(p1h, w2_ref, b2_ref, S2, W_IN, 2)
        # pool2: pooled (qh, qw) at column 64*qh + 4*qw
        p2 = pool2x2(y2, W_IN, 2)
        # compact along H -> (16, 100); pooled (qh, qw) at column 20*qh + 4*qw
        feat = jnp.concatenate(
            [p2[:, 2 * W_IN * qh: 2 * W_IN * qh + 4 * WP2] for qh in range(HP2)],
            axis=1)
        feat_ref[b] = feat
        return carry

    lax.fori_loop(0, b_blk, per_image, 0)

    # ---- fused fc1 -> ReLU -> fc2 -> ReLU -> fc3 on the whole batch block ----
    # fc1's weight was host-scattered into the spread feature order (zeros at the
    # junk columns), so the conv features are consumed without any flatten/transpose.
    h = jnp.zeros((b_blk, D_PAD), jnp.float32) + fc1b_ref[...]
    for c in range(C2):
        h = h + jnp.dot(feat_ref[:, c, :], fc1w_ref[c],
                        preferred_element_type=jnp.float32)
    h = jnp.maximum(h, 0.0)
    h = jnp.maximum(
        jnp.dot(h, fc2w_ref[...], preferred_element_type=jnp.float32) + fc2b_ref[...],
        0.0)
    h = jnp.dot(h, fc3w_ref[...], preferred_element_type=jnp.float32) + fc3b_ref[...]
    out_ref[0] = h[:, :out_ref.shape[-1]]


# ----------------------------------------------------------------------------
# Pallas wrapper
# ----------------------------------------------------------------------------
def _pick_block(n):
    """Batch-block size: amortize per-grid-step overhead but keep >= 2 grid steps
    so both v7x TensorCores get work on the 'parallel' batch axis."""
    for b in (8, 4, 2, 1):
        if n % b == 0 and n // b >= 2:
            return b
    return 1


def simplenet_pallas(x_pad, prepped, num_classes, b_blk):
    n = x_pad.shape[0]
    n_blk = n // b_blk

    def full(shape):  # whole-array block, constant index -> DMA'd to VMEM once
        return pl.BlockSpec(shape, lambda g, _s=shape: (0,) * len(_s))

    out = pl.pallas_call(
        _simplenet_kernel,
        out_shape=jax.ShapeDtypeStruct((n_blk, b_blk, num_classes), jnp.float32),
        grid=(n_blk,),
        in_specs=[
            pl.BlockSpec((b_blk, C_IN_PAD, S0), lambda g: (g, 0, 0)),
            full((K, C1_PAD, K * C_IN_PAD)),
            full((C1_PAD, 1)),
            full((K, C2, K * C1_PAD)),
            full((C2, 1)),
            full((C2, FC_FEAT, D_PAD)),
            full((1, D_PAD)),
            full((D_PAD, D_PAD)),
            full((1, D_PAD)),
            full((D_PAD, D_PAD)),
            full((1, D_PAD)),
        ],
        out_specs=pl.BlockSpec((1, b_blk, num_classes), lambda g: (g, 0, 0)),
        scratch_shapes=[pltpu.VMEM((b_blk, C2, FC_FEAT), jnp.float32)],
        compiler_params=pltpu.CompilerParams(dimension_semantics=("parallel",)),
    )(x_pad, prepped["conv1_w"], prepped["conv1_b"], prepped["conv2_w"],
      prepped["conv2_b"], prepped["fc1_w"], prepped["fc1_b"], prepped["fc2_w"],
      prepped["fc2_b"], prepped["fc3_w"], prepped["fc3_b"])
    return out.reshape(n, num_classes)


@partial(jax.jit, static_argnames=("num_classes",))
def simplenet_forward(x_nchw, prepped, *, num_classes=10):
    n, c, h, w = x_nchw.shape
    assert (c, h, w) == (C_IN, H_IN, W_IN), "kernel geometry is built for 3x32x32 inputs"
    b_blk = _pick_block(n)
    xf = x_nchw.reshape(n, C_IN, H_IN * W_IN)
    xf = jnp.pad(xf, ((0, 0), (0, C_IN_PAD - C_IN), (0, S0 - H_IN * W_IN)))
    return simplenet_pallas(xf, prepped, num_classes, b_blk)


# ----------------------------------------------------------------------------
# Parameters (PyTorch layouts) + one-time kernel-friendly relayout
# ----------------------------------------------------------------------------
def init_params(key, num_classes=10, input_size=(32, 32)):
    """PyTorch-layout parameters (Conv2d OIHW, Linear (out, in)), f32."""
    h = (input_size[0] - 4) // 2
    h = (h - 4) // 2
    w = (input_size[1] - 4) // 2
    w = (w - 4) // 2
    fc_in = 16 * h * w
    ks = jax.random.split(key, 10)
    return {
        "conv1_w": jax.random.normal(ks[0], (6, 3, 5, 5), jnp.float32) * 0.1,
        "conv1_b": jax.random.normal(ks[1], (6,), jnp.float32) * 0.1,
        "conv2_w": jax.random.normal(ks[2], (16, 6, 5, 5), jnp.float32) * 0.1,
        "conv2_b": jax.random.normal(ks[3], (16,), jnp.float32) * 0.1,
        "fc1_w": jax.random.normal(ks[4], (120, fc_in), jnp.float32) * 0.05,
        "fc1_b": jax.random.normal(ks[5], (120,), jnp.float32) * 0.05,
        "fc2_w": jax.random.normal(ks[6], (84, 120), jnp.float32) * 0.05,
        "fc2_b": jax.random.normal(ks[7], (84,), jnp.float32) * 0.05,
        "fc3_w": jax.random.normal(ks[8], (num_classes, 84), jnp.float32) * 0.05,
        "fc3_b": jax.random.normal(ks[9], (num_classes,), jnp.float32) * 0.05,
    }


def prepare_params(p):
    """One-time host-side relayout of PyTorch-layout params into kernel layouts."""
    def conv_w(w, cin_pad, cout_pad):                # OIHW -> (K, cout_pad, K*cin_pad)
        o, i, kh, kw = w.shape
        t = jnp.transpose(w, (2, 3, 1, 0))                        # (kh, kw, ci, co)
        t = jnp.pad(t, ((0, 0), (0, 0), (0, cin_pad - i), (0, cout_pad - o)))
        t = jnp.transpose(t, (0, 3, 1, 2))                        # (kh, co, kw, ci)
        return t.reshape(kh, cout_pad, kw * cin_pad).astype(jnp.float32)

    def conv_b(b, cout_pad):
        return jnp.pad(b, (0, cout_pad - b.shape[0]))[:, None].astype(jnp.float32)

    def fc_w(w, in_pad):                             # torch (out, in) -> (in_pad, 128)
        o, i = w.shape
        return jnp.pad(w.T, ((0, in_pad - i), (0, D_PAD - o))).astype(jnp.float32)

    def fc_b(b):
        return jnp.pad(b, (0, D_PAD - b.shape[0]))[None, :].astype(jnp.float32)

    # fc1: scatter the torch (c, qh, qw)-ordered columns into the kernel's spread
    # feature layout: per channel, feature (qh, qw) lives at column 20*qh + 4*qw.
    w1 = p["fc1_w"]                                               # (120, 400)
    d1 = w1.shape[0]
    w1 = w1.reshape(d1, C2, HP2, WP2)
    w1 = jnp.transpose(w1, (1, 2, 3, 0))                          # (16, 5, 5, 120)
    w1 = jnp.pad(w1, ((0, 0), (0, 0), (0, 0), (0, D_PAD - d1)))   # (16, 5, 5, 128)
    w1 = jnp.pad(w1[:, :, :, None, :], ((0, 0), (0, 0), (0, 0), (0, 3), (0, 0)))
    fc1_w = w1.reshape(C2, FC_FEAT, D_PAD).astype(jnp.float32)    # (16, 100, 128)

    return {
        "conv1_w": conv_w(p["conv1_w"], C_IN_PAD, C1_PAD),
        "conv1_b": conv_b(p["conv1_b"], C1_PAD),
        "conv2_w": conv_w(p["conv2_w"], C1_PAD, C2),
        "conv2_b": conv_b(p["conv2_b"], C2),
        "fc1_w": fc1_w,
        "fc1_b": fc_b(p["fc1_b"]),
        "fc2_w": fc_w(p["fc2_w"], D_PAD),
        "fc2_b": fc_b(p["fc2_b"]),
        "fc3_w": fc_w(p["fc3_w"], D_PAD),
        "fc3_b": fc_b(p["fc3_b"]),
    }


# ----------------------------------------------------------------------------
# Pure-JAX reference (mirrors SimpleNet.forward) for a numeric sanity check
# ----------------------------------------------------------------------------
def reference_forward(x_nchw, p):
    dn = ("NCHW", "OIHW", "NCHW")
    y = lax.conv_general_dilated(x_nchw, p["conv1_w"], (1, 1), "VALID", dimension_numbers=dn)
    y = jax.nn.relu(y + p["conv1_b"][None, :, None, None])
    y = lax.reduce_window(y, -jnp.inf, lax.max, (1, 1, 2, 2), (1, 1, 2, 2), "VALID")
    y = lax.conv_general_dilated(y, p["conv2_w"], (1, 1), "VALID", dimension_numbers=dn)
    y = jax.nn.relu(y + p["conv2_b"][None, :, None, None])
    y = lax.reduce_window(y, -jnp.inf, lax.max, (1, 1, 2, 2), (1, 1, 2, 2), "VALID")
    y = y.reshape(y.shape[0], -1)
    y = jax.nn.relu(y @ p["fc1_w"].T + p["fc1_b"])
    y = jax.nn.relu(y @ p["fc2_w"].T + p["fc2_b"])
    return y @ p["fc3_w"].T + p["fc3_b"]


if __name__ == "__main__":
    key = jax.random.PRNGKey(0)
    k_x, k_p = jax.random.split(key)
    x = jax.random.normal(k_x, (2, 3, 32, 32), jnp.float32)   # NCHW, like PyTorch
    params = init_params(k_p, num_classes=10, input_size=(32, 32))
    prepped = prepare_params(params)

    out = jax.block_until_ready(simplenet_forward(x, prepped, num_classes=10))
    assert out.shape == (2, 10) and out.dtype == jnp.float32

    ref = jax.block_until_ready(reference_forward(x, params))
    err = float(jnp.max(jnp.abs(out - ref)))
    assert bool(jnp.allclose(out, ref, atol=2e-2, rtol=2e-2)), f"max abs err {err:.5f}"

    print("KERNEL_OK")
</pallas_src>

<mosaic_0001>
module attributes {stable_mosaic.version = 11 : i64} {
  func.func @_simplenet_kernel(%arg0: i32, %arg1: memref<1x8x1152xf32, #tpu.memory_space<vmem>>, %arg2: memref<5x8x40xf32, #tpu.memory_space<vmem>>, %arg3: memref<8x1xf32, #tpu.memory_space<vmem>>, %arg4: memref<5x16x40xf32, #tpu.memory_space<vmem>>, %arg5: memref<16x1xf32, #tpu.memory_space<vmem>>, %arg6: memref<16x100x128xf32, #tpu.memory_space<vmem>>, %arg7: memref<1x128xf32, #tpu.memory_space<vmem>>, %arg8: memref<128x128xf32, #tpu.memory_space<vmem>>, %arg9: memref<1x128xf32, #tpu.memory_space<vmem>>, %arg10: memref<128x128xf32, #tpu.memory_space<vmem>>, %arg11: memref<1x128xf32, #tpu.memory_space<vmem>>, %arg12: memref<1x1x10xf32, #tpu.memory_space<vmem>>, %arg13: memref<1x16x100xf32, #tpu.memory_space<vmem>>) attributes {dimension_semantics = [#tpu.dimension_semantics<parallel>], iteration_bounds = array<i64: 2>, scalar_prefetch = 0 : i64, scratch_operands = 1 : i64, tpu.core_type = #tpu.core_type<tc>, window_params = [{transform_indices = @transform_0, window_bounds = array<i64: 1, 8, 1152>}, {pipeline_mode = #tpu.pipeline_mode<synchronous>, transform_indices = @transform_1, window_bounds = array<i64: 5, 8, 40>}, {pipeline_mode = #tpu.pipeline_mode<synchronous>, transform_indices = @transform_2, window_bounds = array<i64: 8, 1>}, {pipeline_mode = #tpu.pipeline_mode<synchronous>, transform_indices = @transform_3, window_bounds = array<i64: 5, 16, 40>}, {pipeline_mode = #tpu.pipeline_mode<synchronous>, transform_indices = @transform_4, window_bounds = array<i64: 16, 1>}, {pipeline_mode = #tpu.pipeline_mode<synchronous>, transform_indices = @transform_5, window_bounds = array<i64: 16, 100, 128>}, {pipeline_mode = #tpu.pipeline_mode<synchronous>, transform_indices = @transform_6, window_bounds = array<i64: 1, 128>}, {pipeline_mode = #tpu.pipeline_mode<synchronous>, transform_indices = @transform_7, window_bounds = array<i64: 128, 128>}, {pipeline_mode = #tpu.pipeline_mode<synchronous>, transform_indices = @transform_8, window_bounds = array<i64: 1, 128>}, {pipeline_mode = #tpu.pipeline_mode<synchronous>, transform_indices = @transform_9, window_bounds = array<i64: 128, 128>}, {pipeline_mode = #tpu.pipeline_mode<synchronous>, transform_indices = @transform_10, window_bounds = array<i64: 1, 128>}, {transform_indices = @transform_11, window_bounds = array<i64: 1, 1, 10>}]} {
    %c0_i32 = arith.constant 0 : i32
    %0 = arith.index_cast %c0_i32 : i32 to index
    %c0 = arith.constant 0 : index
    %c0_0 = arith.constant 0 : index
    %1 = vector.load %arg1[%0, %c0, %c0_0] : memref<1x8x1152xf32, #tpu.memory_space<vmem>>, vector<1x8x1152xf32>
    %2 = vector.shape_cast %1 : vector<1x8x1152xf32> to vector<8x1152xf32>
    %cst = arith.constant 0.000000e+00 : f32
    %3 = vector.broadcast %cst : f32 to vector<8x896xf32>
    %4 = vector.extract_strided_slice %2 {offsets = [0, 0], sizes = [8, 896], strides = [1, 1]} : vector<8x1152xf32> to vector<8x896xf32>
    %5 = vector.extract_strided_slice %2 {offsets = [0, 1], sizes = [8, 896], strides = [1, 1]} : vector<8x1152xf32> to vector<8x896xf32>
    %6 = vector.extract_strided_slice %2 {offsets = [0, 2], sizes = [8, 896], strides = [1, 1]} : vector<8x1152xf32> to vector<8x896xf32>
    %7 = vector.extract_strided_slice %2 {offsets = [0, 3], sizes = [8, 896], strides = [1, 1]} : vector<8x1152xf32> to vector<8x896xf32>
    %8 = vector.extract_strided_slice %2 {offsets = [0, 4], sizes = [8, 896], strides = [1, 1]} : vector<8x1152xf32> to vector<8x896xf32>
    %9 = tpu.concatenate %4, %5, %6, %7, %8 in 0 : vector<8x896xf32>, vector<8x896xf32>, vector<8x896xf32>, vector<8x896xf32>, vector<8x896xf32> -> vector<40x896xf32>
    %c0_1 = arith.constant 0 : index
    %c0_2 = arith.constant 0 : index
    %c0_3 = arith.constant 0 : index
    %10 = vector.load %arg2[%c0_1, %c0_2, %c0_3] : memref<5x8x40xf32, #tpu.memory_space<vmem>>, vector<1x8x40xf32>
    %11 = vector.shape_cast %10 : vector<1x8x40xf32> to vector<8x40xf32>
    %cst_4 = arith.constant dense<0.000000e+00> : vector<8x896xf32>
    %12 = tpu.matmul %11, %9, %cst_4 {dimension_numbers = #tpu.dot_dimension_numbers<[1], [0], [0], [1], [0, 0, 1, 1], [], []>} : vector<8x40xf32>, vector<40x896xf32>, vector<8x896xf32> -> vector<8x896xf32>
    %13 = arith.addf %3, %12 : vector<8x896xf32>
    %14 = vector.extract_strided_slice %2 {offsets = [0, 32], sizes = [8, 896], strides = [1, 1]} : vector<8x1152xf32> to vector<8x896xf32>
    %15 = vector.extract_strided_slice %2 {offsets = [0, 33], sizes = [8, 896], strides = [1, 1]} : vector<8x1152xf32> to vector<8x896xf32>
    %16 = vector.extract_strided_slice %2 {offsets = [0, 34], sizes = [8, 896], strides = [1, 1]} : vector<8x1152xf32> to vector<8x896xf32>
    %17 = vector.extract_strided_slice %2 {offsets = [0, 35], sizes = [8, 896], strides = [1, 1]} : vector<8x1152xf32> to vector<8x896xf32>
    %18 = vector.extract_strided_slice %2 {offsets = [0, 36], sizes = [8, 896], strides = [1, 1]} : vector<8x1152xf32> to vector<8x896xf32>
    %19 = tpu.concatenate %14, %15, %16, %17, %18 in 0 : vector<8x896xf32>, vector<8x896xf32>, vector<8x896xf32>, vector<8x896xf32>, vector<8x896xf32> -> vector<40x896xf32>
    %c1 = arith.constant 1 : index
    %c0_5 = arith.constant 0 : index
    %c0_6 = arith.constant 0 : index
    %20 = vector.load %arg2[%c1, %c0_5, %c0_6] : memref<5x8x40xf32, #tpu.memory_space<vmem>>, vector<1x8x40xf32>
    %21 = vector.shape_cast %20 : vector<1x8x40xf32> to vector<8x40xf32>
    %cst_7 = arith.constant dense<0.000000e+00> : vector<8x896xf32>
    %22 = tpu.matmul %21, %19, %cst_7 {dimension_numbers = #tpu.dot_dimension_numbers<[1], [0], [0], [1], [0, 0, 1, 1], [], []>} : vector<8x40xf32>, vector<40x896xf32>, vector<8x896xf32> -> vector<8x896xf32>
    %23 = arith.addf %13, %22 : vector<8x896xf32>
    %24 = vector.extract_strided_slice %2 {offsets = [0, 64], sizes = [8, 896], strides = [1, 1]} : vector<8x1152xf32> to vector<8x896xf32>
    %25 = vector.extract_strided_slice %2 {offsets = [0, 65], sizes = [8, 896], strides = [1, 1]} : vector<8x1152xf32> to vector<8x896xf32>
    %26 = vector.extract_strided_slice %2 {offsets = [0, 66], sizes = [8, 896], strides = [1, 1]} : vector<8x1152xf32> to vector<8x896xf32>
    %27 = vector.extract_strided_slice %2 {offsets = [0, 67], sizes = [8, 896], strides = [1, 1]} : vector<8x1152xf32> to vector<8x896xf32>
    %28 = vector.extract_strided_slice %2 {offsets = [0, 68], sizes = [8, 896], strides = [1, 1]} : vector<8x1152xf32> to vector<8x896xf32>
    %29 = tpu.concatenate %24, %25, %26, %27, %28 in 0 : vector<8x896xf32>, vector<8x896xf32>, vector<8x896xf32>, vector<8x896xf32>, vector<8x896xf32> -> vector<40x896xf32>
    %c2 = arith.constant 2 : index
    %c0_8 = arith.constant 0 : index
    %c0_9 = arith.constant 0 : index
    %30 = vector.load %arg2[%c2, %c0_8, %c0_9] : memref<5x8x40xf32, #tpu.memory_space<vmem>>, vector<1x8x40xf32>
    %31 = vector.shape_cast %30 : vector<1x8x40xf32> to vector<8x40xf32>
    %cst_10 = arith.constant dense<0.000000e+00> : vector<8x896xf32>
    %32 = tpu.matmul %31, %29, %cst_10 {dimension_numbers = #tpu.dot_dimension_numbers<[1], [0], [0], [1], [0, 0, 1, 1], [], []>} : vector<8x40xf32>, vector<40x896xf32>, vector<8x896xf32> -> vector<8x896xf32>
    %33 = arith.addf %23, %32 : vector<8x896xf32>
    %34 = vector.extract_strided_slice %2 {offsets = [0, 96], sizes = [8, 896], strides = [1, 1]} : vector<8x1152xf32> to vector<8x896xf32>
    %35 = vector.extract_strided_slice %2 {offsets = [0, 97], sizes = [8, 896], strides = [1, 1]} : vector<8x1152xf32> to vector<8x896xf32>
    %36 = vector.extract_strided_slice %2 {offsets = [0, 98], sizes = [8, 896], strides = [1, 1]} : vector<8x1152xf32> to vector<8x896xf32>
    %37 = vector.extract_strided_slice %2 {offsets = [0, 99], sizes = [8, 896], strides = [1, 1]} : vector<8x1152xf32> to vector<8x896xf32>
    %38 = vector.extract_strided_slice %2 {offsets = [0, 100], sizes = [8, 896], strides = [1, 1]} : vector<8x1152xf32> to vector<8x896xf32>
    %39 = tpu.concatenate %34, %35, %36, %37, %38 in 0 : vector<8x896xf32>, vector<8x896xf32>, vector<8x896xf32>, vector<8x896xf32>, vector<8x896xf32> -> vector<40x896xf32>
    %c3 = arith.constant 3 : index
    %c0_11 = arith.constant 0 : index
    %c0_12 = arith.constant 0 : index
    %40 = vector.load %arg2[%c3, %c0_11, %c0_12] : memref<5x8x40xf32, #tpu.memory_space<vmem>>, vector<1x8x40xf32>
    %41 = vector.shape_cast %40 : vector<1x8x40xf32> to vector<8x40xf32>
    %cst_13 = arith.constant dense<0.000000e+00> : vector<8x896xf32>
    %42 = tpu.matmul %41, %39, %cst_13 {dimension_numbers = #tpu.dot_dimension_numbers<[1], [0], [0], [1], [0, 0, 1, 1], [], []>} : vector<8x40xf32>, vector<40x896xf32>, vector<8x896xf32> -> vector<8x896xf32>
    %43 = arith.addf %33, %42 : vector<8x896xf32>
    %44 = vector.extract_strided_slice %2 {offsets = [0, 128], sizes = [8, 896], strides = [1, 1]} : vector<8x1152xf32> to vector<8x896xf32>
    %45 = vector.extract_strided_slice %2 {offsets = [0, 129], sizes = [8, 896], strides = [1, 1]} : vector<8x1152xf32> to vector<8x896xf32>
    %46 = vector.extract_strided_slice %2 {offsets = [0, 130], sizes = [8, 896], strides = [1, 1]} : vector<8x1152xf32> to vector<8x896xf32>
    %47 = vector.extract_strided_slice %2 {offsets = [0, 131], sizes = [8, 896], strides = [1, 1]} : vector<8x1152xf32> to vector<8x896xf32>
    %48 = vector.extract_strided_slice %2 {offsets = [0, 132], sizes = [8, 896], strides = [1, 1]} : vector<8x1152xf32> to vector<8x896xf32>
    %49 = tpu.concatenate %44, %45, %46, %47, %48 in 0 : vector<8x896xf32>, vector<8x896xf32>, vector<8x896xf32>, vector<8x896xf32>, vector<8x896xf32> -> vector<40x896xf32>
    %c4 = arith.constant 4 : index
    %c0_14 = arith.constant 0 : index
    %c0_15 = arith.constant 0 : index
    %50 = vector.load %arg2[%c4, %c0_14, %c0_15] : memref<5x8x40xf32, #tpu.memory_space<vmem>>, vector<1x8x40xf32>
    %51 = vector.shape_cast %50 : vector<1x8x40xf32> to vector<8x40xf32>
    %cst_16 = arith.constant dense<0.000000e+00> : vector<8x896xf32>
    %52 = tpu.matmul %51, %49, %cst_16 {dimension_numbers = #tpu.dot_dimension_numbers<[1], [0], [0], [1], [0, 0, 1, 1], [], []>} : vector<8x40xf32>, vector<40x896xf32>, vector<8x896xf32> -> vector<8x896xf32>
    %53 = arith.addf %43, %52 : vector<8x896xf32>
    %c0_17 = arith.constant 0 : index
    %c0_18 = arith.constant 0 : index
    %54 = vector.load %arg3[%c0_17, %c0_18] : memref<8x1xf32, #tpu.memory_space<vmem>>, vector<8x1xf32>
    %55 = vector.broadcast %54 : vector<8x1xf32> to vector<8x896xf32>
    %56 = arith.addf %53, %55 : vector<8x896xf32>
    %cst_19 = arith.constant 0.000000e+00 : f32
    %57 = vector.broadcast %cst_19 : f32 to vector<8x896xf32>
    %58 = arith.maximumf %56, %57 : vector<8x896xf32>
    %cst_20 = arith.constant 0.000000e+00 : f32
    %59 = vector.broadcast %cst_20 : f32 to vector<8x32xf32>
    %60 = vector.extract_strided_slice %58 {offsets = [0, 32], sizes = [8, 864], strides = [1, 1]} : vector<8x896xf32> to vector<8x864xf32>
    %61 = tpu.concatenate %60, %59 in 1 : vector<8x864xf32>, vector<8x32xf32> -> vector<8x896xf32>
    %62 = arith.maximumf %58, %61 : vector<8x896xf32>
    %cst_21 = arith.constant 0.000000e+00 : f32
    %63 = vector.broadcast %cst_21 : f32 to vector<8x1xf32>
    %64 = vector.extract_strided_slice %62 {offsets = [0, 1], sizes = [8, 895], strides = [1, 1]} : vector<8x896xf32> to vector<8x895xf32>
    %65 = tpu.concatenate %64, %63 in 1 : vector<8x895xf32>, vector<8x1xf32> -> vector<8x896xf32>
    %66 = arith.maximumf %62, %65 : vector<8x896xf32>
    %67 = vector.extract_strided_slice %66 {offsets = [0, 0], sizes = [8, 32], strides = [1, 1]} : vector<8x896xf32> to vector<8x32xf32>
    %68 = vector.extract_strided_slice %66 {offsets = [0, 64], sizes = [8, 32], strides = [1, 1]} : vector<8x896xf32> to vector<8x32xf32>
    %69 = vector.extract_strided_slice %66 {offsets = [0, 128], sizes = [8, 32], strides = [1, 1]} : vector<8x896xf32> to vector<8x32xf32>
    %70 = vector.extract_strided_slice %66 {offsets = [0, 192], sizes = [8, 32], strides = [1, 1]} : vector<8x896xf32> to vector<8x32xf32>
    %71 = vector.extract_strided_slice %66 {offsets = [0, 256], sizes = [8, 32], strides = [1, 1]} : vector<8x896xf32> to vector<8x32xf32>
    %72 = vector.extract_strided_slice %66 {offsets = [0, 320], sizes = [8, 32], strides = [1, 1]} : vector<8x896xf32> to vector<8x32xf32>
    %73 = vector.extract_strided_slice %66 {offsets = [0, 384], sizes = [8, 32], strides = [1, 1]} : vector<8x896xf32> to vector<8x32xf32>
    %74 = vector.extract_strided_slice %66 {offsets = [0, 448], sizes = [8, 32], strides = [1, 1]} : vector<8x896xf32> to vector<8x32xf32>
    %75 = vector.extract_strided_slice %66 {offsets = [0, 512], sizes = [8, 32], strides = [1, 1]} : vector<8x896xf32> to vector<8x32xf32>
    %76 = vector.extract_strided_slice %66 {offsets = [0, 576], sizes = [8, 32], strides = [1, 1]} : vector<8x896xf32> to vector<8x32xf32>
    %77 = vector.extract_strided_slice %66 {offsets = [0, 640], sizes = [8, 32], strides = [1, 1]} : vector<8x896xf32> to vector<8x32xf32>
    %78 = vector.extract_strided_slice %66 {offsets = [0, 704], sizes = [8, 32], strides = [1, 1]} : vector<8x896xf32> to vector<8x32xf32>
    %79 = vector.extract_strided_slice %66 {offsets = [0, 768], sizes = [8, 32], strides = [1, 1]} : vector<8x896xf32> to vector<8x32xf32>
    %80 = vector.extract_strided_slice %66 {offsets = [0, 832], sizes = [8, 32], strides = [1, 1]} : vector<8x896xf32> to vector<8x32xf32>
    %cst_22 = arith.constant 0.000000e+00 : f32
    %81 = vector.broadcast %cst_22 : f32 to vector<8x64xf32>
    %82 = tpu.concatenate %67, %68, %69, %70, %71, %72, %73, %74, %75, %76, %77, %78, %79, %80, %81 in 1 : vector<8x32xf32>, vector<8x32xf32>, vector<8x32xf32>, vector<8x32xf32>, vector<8x32xf32>, vector<8x32xf32>, vector<8x32xf32>, vector<8x32xf32>, vector<8x32xf32>, vector<8x32xf32>, vector<8x32xf32>, vector<8x32xf32>, vector<8x32xf32>, vector<8x32xf32>, vector<8x64xf32> -> vector<8x512xf32>
    %cst_23 = arith.constant 0.000000e+00 : f32
    %83 = vector.broadcast %cst_23 : f32 to vector<16x320xf32>
    %84 = vector.extract_strided_slice %82 {offsets = [0, 0], sizes = [8, 320], strides = [1, 1]} : vector<8x512xf32> to vector<8x320xf32>
    %85 = vector.extract_strided_slice %82 {offsets = [0, 2], sizes = [8, 320], strides = [1, 1]} : vector<8x512xf32> to vector<8x320xf32>
    %86 = vector.extract_strided_slice %82 {offsets = [0, 4], sizes = [8, 320], strides = [1, 1]} : vector<8x512xf32> to vector<8x320xf32>
    %87 = vector.extract_strided_slice %82 {offsets = [0, 6], sizes = [8, 320], strides = [1, 1]} : vector<8x512xf32> to vector<8x320xf32>
    %88 = vector.extract_strided_slice %82 {offsets = [0, 8], sizes = [8, 320], strides = [1, 1]} : vector<8x512xf32> to vector<8x320xf32>
    %89 = tpu.concatenate %84, %85, %86, %87, %88 in 0 : vector<8x320xf32>, vector<8x320xf32>, vector<8x320xf32>, vector<8x320xf32>, vector<8x320xf32> -> vector<40x320xf32>
    %c0_24 = arith.constant 0 : index
    %c0_25 = arith.constant 0 : index
    %c0_26 = arith.constant 0 : index
    %90 = vector.load %arg4[%c0_24, %c0_25, %c0_26] : memref<5x16x40xf32, #tpu.memory_space<vmem>>, vector<1x16x40xf32>
    %91 = vector.shape_cast %90 : vector<1x16x40xf32> to vector<16x40xf32>
    %cst_27 = arith.constant dense<0.000000e+00> : vector<16x320xf32>
    %92 = tpu.matmul %91, %89, %cst_27 {dimension_numbers = #tpu.dot_dimension_numbers<[1], [0], [0], [1], [0, 0, 1, 1], [], []>} : vector<16x40xf32>, vector<40x320xf32>, vector<16x320xf32> -> vector<16x320xf32>
    %93 = arith.addf %83, %92 : vector<16x320xf32>
    %94 = vector.extract_strided_slice %82 {offsets = [0, 32], sizes = [8, 320], strides = [1, 1]} : vector<8x512xf32> to vector<8x320xf32>
    %95 = vector.extract_strided_slice %82 {offsets = [0, 34], sizes = [8, 320], strides = [1, 1]} : vector<8x512xf32> to vector<8x320xf32>
    %96 = vector.extract_strided_slice %82 {offsets = [0, 36], sizes = [8, 320], strides = [1, 1]} : vector<8x512xf32> to vector<8x320xf32>
    %97 = vector.extract_strided_slice %82 {offsets = [0, 38], sizes = [8, 320], strides = [1, 1]} : vector<8x512xf32> to vector<8x320xf32>
    %98 = vector.extract_strided_slice %82 {offsets = [0, 40], sizes = [8, 320], strides = [1, 1]} : vector<8x512xf32> to vector<8x320xf32>
    %99 = tpu.concatenate %94, %95, %96, %97, %98 in 0 : vector<8x320xf32>, vector<8x320xf32>, vector<8x320xf32>, vector<8x320xf32>, vector<8x320xf32> -> vector<40x320xf32>
    %c1_28 = arith.constant 1 : index
    %c0_29 = arith.constant 0 : index
    %c0_30 = arith.constant 0 : index
    %100 = vector.load %arg4[%c1_28, %c0_29, %c0_30] : memref<5x16x40xf32, #tpu.memory_space<vmem>>, vector<1x16x40xf32>
    %101 = vector.shape_cast %100 : vector<1x16x40xf32> to vector<16x40xf32>
    %cst_31 = arith.constant dense<0.000000e+00> : vector<16x320xf32>
    %102 = tpu.matmul %101, %99, %cst_31 {dimension_numbers = #tpu.dot_dimension_numbers<[1], [0], [0], [1], [0, 0, 1, 1], [], []>} : vector<16x40xf32>, vector<40x320xf32>, vector<16x320xf32> -> vector<16x320xf32>
    %103 = arith.addf %93, %102 : vector<16x320xf32>
    %104 = vector.extract_strided_slice %82 {offsets = [0, 64], sizes = [8, 320], strides = [1, 1]} : vector<8x512xf32> to vector<8x320xf32>
    %105 = vector.extract_strided_slice %82 {offsets = [0, 66], sizes = [8, 320], strides = [1, 1]} : vector<8x512xf32> to vector<8x320xf32>
    %106 = vector.extract_strided_slice %82 {offsets = [0, 68], sizes = [8, 320], strides = [1, 1]} : vector<8x512xf32> to vector<8x320xf32>
    %107 = vector.extract_strided_slice %82 {offsets = [0, 70], sizes = [8, 320], strides = [1, 1]} : vector<8x512xf32> to vector<8x320xf32>
    %108 = vector.extract_strided_slice %82 {offsets = [0, 72], sizes = [8, 320], strides = [1, 1]} : vector<8x512xf32> to vector<8x320xf32>
    %109 = tpu.concatenate %104, %105, %106, %107, %108 in 0 : vector<8x320xf32>, vector<8x320xf32>, vector<8x320xf32>, vector<8x320xf32>, vector<8x320xf32> -> vector<40x320xf32>
    %c2_32 = arith.constant 2 : index
    %c0_33 = arith.constant 0 : index
    %c0_34 = arith.constant 0 : index
    %110 = vector.load %arg4[%c2_32, %c0_33, %c0_34] : memref<5x16x40xf32, #tpu.memory_space<vmem>>, vector<1x16x40xf32>
    %111 = vector.shape_cast %110 : vector<1x16x40xf32> to vector<16x40xf32>
    %cst_35 = arith.constant dense<0.000000e+00> : vector<16x320xf32>
    %112 = tpu.matmul %111, %109, %cst_35 {dimension_numbers = #tpu.dot_dimension_numbers<[1], [0], [0], [1], [0, 0, 1, 1], [], []>} : vector<16x40xf32>, vector<40x320xf32>, vector<16x320xf32> -> vector<16x320xf32>
    %113 = arith.addf %103, %112 : vector<16x320xf32>
    %114 = vector.extract_strided_slice %82 {offsets = [0, 96], sizes = [8, 320], strides = [1, 1]} : vector<8x512xf32> to vector<8x320xf32>
    %115 = vector.extract_strided_slice %82 {offsets = [0, 98], sizes = [8, 320], strides = [1, 1]} : vector<8x512xf32> to vector<8x320xf32>
    %116 = vector.extract_strided_slice %82 {offsets = [0, 100], sizes = [8, 320], strides = [1, 1]} : vector<8x512xf32> to vector<8x320xf32>
    %117 = vector.extract_strided_slice %82 {offsets = [0, 102], sizes = [8, 320], strides = [1, 1]} : vector<8x512xf32> to vector<8x320xf32>
    %118 = vector.extract_strided_slice %82 {offsets = [0, 104], sizes = [8, 320], strides = [1, 1]} : vector<8x512xf32> to vector<8x320xf32>
    %119 = tpu.concatenate %114, %115, %116, %117, %118 in 0 : vector<8x320xf32>, vector<8x320xf32>, vector<8x320xf32>, vector<8x320xf32>, vector<8x320xf32> -> vector<40x320xf32>
    %c3_36 = arith.constant 3 : index
    %c0_37 = arith.constant 0 : index
    %c0_38 = arith.constant 0 : index
    %120 = vector.load %arg4[%c3_36, %c0_37, %c0_38] : memref<5x16x40xf32, #tpu.memory_space<vmem>>, vector<1x16x40xf32>
    %121 = vector.shape_cast %120 : vector<1x16x40xf32> to vector<16x40xf32>
    %cst_39 = arith.constant dense<0.000000e+00> : vector<16x320xf32>
    %122 = tpu.matmul %121, %119, %cst_39 {dimension_numbers = #tpu.dot_dimension_numbers<[1], [0], [0], [1], [0, 0, 1, 1], [], []>} : vector<16x40xf32>, vector<40x320xf32>, vector<16x320xf32> -> vector<16x320xf32>
    %123 = arith.addf %113, %122 : vector<16x320xf32>
    %124 = vector.extract_strided_slice %82 {offsets = [0, 128], sizes = [8, 320], strides = [1, 1]} : vector<8x512xf32> to vector<8x320xf32>
    %125 = vector.extract_strided_slice %82 {offsets = [0, 130], sizes = [8, 320], strides = [1, 1]} : vector<8x512xf32> to vector<8x320xf32>
    %126 = vector.extract_strided_slice %82 {offsets = [0, 132], sizes = [8, 320], strides = [1, 1]} : vector<8x512xf32> to vector<8x320xf32>
    %127 = vector.extract_strided_slice %82 {offsets = [0, 134], sizes = [8, 320], strides = [1, 1]} : vector<8x512xf32> to vector<8x320xf32>
    %128 = vector.extract_strided_slice %82 {offsets = [0, 136], sizes = [8, 320], strides = [1, 1]} : vector<8x512xf32> to vector<8x320xf32>
    %129 = tpu.concatenate %124, %125, %126, %127, %128 in 0 : vector<8x320xf32>, vector<8x320xf32>, vector<8x320xf32>, vector<8x320xf32>, vector<8x320xf32> -> vector<40x320xf32>
    %c4_40 = arith.constant 4 : index
    %c0_41 = arith.constant 0 : index
    %c0_42 = arith.constant 0 : index
    %130 = vector.load %arg4[%c4_40, %c0_41, %c0_42] : memref<5x16x40xf32, #tpu.memory_space<vmem>>, vector<1x16x40xf32>
    %131 = vector.shape_cast %130 : vector<1x16x40xf32> to vector<16x40xf32>
    %cst_43 = arith.constant dense<0.000000e+00> : vector<16x320xf32>
    %132 = tpu.matmul %131, %129, %cst_43 {dimension_numbers = #tpu.dot_dimension_numbers<[1], [0], [0], [1], [0, 0, 1, 1], [], []>} : vector<16x40xf32>, vector<40x320xf32>, vector<16x320xf32> -> vector<16x320xf32>
    %133 = arith.addf %123, %132 : vector<16x320xf32>
    %c0_44 = arith.constant 0 : index
    %c0_45 = arith.constant 0 : index
    %134 = vector.load %arg5[%c0_44, %c0_45] : memref<16x1xf32, #tpu.memory_space<vmem>>, vector<16x1xf32>
    %135 = vector.broadcast %134 : vector<16x1xf32> to vector<16x320xf32>
    %136 = arith.addf %133, %135 : vector<16x320xf32>
    %cst_46 = arith.constant 0.000000e+00 : f32
    %137 = vector.broadcast %cst_46 : f32 to vector<16x320xf32>
    %138 = arith.maximumf %136, %137 : vector<16x320xf32>
    %cst_47 = arith.constant 0.000000e+00 : f32
    %139 = vector.broadcast %cst_47 : f32 to vector<16x32xf32>
    %140 = vector.extract_strided_slice %138 {offsets = [0, 32], sizes = [16, 288], strides = [1, 1]} : vector<16x320xf32> to vector<16x288xf32>
    %141 = tpu.concatenate %140, %139 in 1 : vector<16x288xf32>, vector<16x32xf32> -> vector<16x320xf32>
    %142 = arith.maximumf %138, %141 : vector<16x320xf32>
    %cst_48 = arith.constant 0.000000e+00 : f32
    %143 = vector.broadcast %cst_48 : f32 to vector<16x2xf32>
    %144 = vector.extract_strided_slice %142 {offsets = [0, 2], sizes = [16, 318], strides = [1, 1]} : vector<16x320xf32> to vector<16x318xf32>
    %145 = tpu.concatenate %144, %143 in 1 : vector<16x318xf32>, vector<16x2xf32> -> vector<16x320xf32>
    %146 = arith.maximumf %142, %145 : vector<16x320xf32>
    %147 = vector.extract_strided_slice %146 {offsets = [0, 0], sizes = [16, 20], strides = [1, 1]} : vector<16x320xf32> to vector<16x20xf32>
    %148 = vector.extract_strided_slice %146 {offsets = [0, 64], sizes = [16, 20], strides = [1, 1]} : vector<16x320xf32> to vector<16x20xf32>
    %149 = vector.extract_strided_slice %146 {offsets = [0, 128], sizes = [16, 20], strides = [1, 1]} : vector<16x320xf32> to vector<16x20xf32>
    %150 = vector.extract_strided_slice %146 {offsets = [0, 192], sizes = [16, 20], strides = [1, 1]} : vector<16x320xf32> to vector<16x20xf32>
    %151 = vector.extract_strided_slice %146 {offsets = [0, 256], sizes = [16, 20], strides = [1, 1]} : vector<16x320xf32> to vector<16x20xf32>
    %152 = tpu.concatenate %147, %148, %149, %150, %151 in 1 : vector<16x20xf32>, vector<16x20xf32>, vector<16x20xf32>, vector<16x20xf32>, vector<16x20xf32> -> vector<16x100xf32>
    %153 = arith.index_cast %c0_i32 : i32 to index
    %c0_49 = arith.constant 0 : index
    %c0_50 = arith.constant 0 : index
    %154 = vector.load %arg13[%153, %c0_49, %c0_50] : memref<1x16x100xf32, #tpu.memory_space<vmem>>, vector<1x16x100xf32>
    %155 = vector.shape_cast %154 : vector<1x16x100xf32> to vector<16x100xf32>
    %156 = vector.shape_cast %152 : vector<16x100xf32> to vector<1x16x100xf32>
    tpu.vector_store %arg13[%153, %c0_49, %c0_50], %156 {strides = array<i32>} : memref<1x16x100xf32, #tpu.memory_space<vmem>>, vector<1x16x100xf32>,
    %c1_i32 = arith.constant 1 : i32
    %cst_51 = arith.constant 0.000000e+00 : f32
    %157 = vector.broadcast %cst_51 : f32 to vector<1x128xf32>
    %c0_52 = arith.constant 0 : index
    %c0_53 = arith.constant 0 : index
    %158 = vector.load %arg7[%c0_52, %c0_53] : memref<1x128xf32, #tpu.memory_space<vmem>>, vector<1x128xf32>
    %159 = arith.addf %157, %158 : vector<1x128xf32>
    %c0_54 = arith.constant 0 : index
    %c0_55 = arith.constant 0 : index
    %c0_56 = arith.constant 0 : index
    %160 = vector.load %arg13[%c0_54, %c0_55, %c0_56] : memref<1x16x100xf32, #tpu.memory_space<vmem>>, vector<1x1x100xf32>
    %161 = vector.shape_cast %160 : vector<1x1x100xf32> to vector<1x100xf32>
    %c0_57 = arith.constant 0 : index
    %c0_58 = arith.constant 0 : index
    %c0_59 = arith.constant 0 : index
    %162 = vector.load %arg6[%c0_57, %c0_58, %c0_59] : memref<16x100x128xf32, #tpu.memory_space<vmem>>, vector<1x100x128xf32>
    %163 = vector.shape_cast %162 : vector<1x100x128xf32> to vector<100x128xf32>
    %cst_60 = arith.constant dense<0.000000e+00> : vector<1x128xf32>
    %164 = tpu.matmul %161, %163, %cst_60 {dimension_numbers = #tpu.dot_dimension_numbers<[1], [0], [0], [1], [0, 0, 1, 1], [], []>} : vector<1x100xf32>, vector<100x128xf32>, vector<1x128xf32> -> vector<1x128xf32>
    %165 = arith.addf %159, %164 : vector<1x128xf32>
    %c0_61 = arith.constant 0 : index
    %c1_62 = arith.constant 1 : index
    %c0_63 = arith.constant 0 : index
    %166 = vector.load %arg13[%c0_61, %c1_62, %c0_63] : memref<1x16x100xf32, #tpu.memory_space<vmem>>, vector<1x1x100xf32>
    %167 = vector.shape_cast %166 : vector<1x1x100xf32> to vector<1x100xf32>
    %c1_64 = arith.constant 1 : index
    %c0_65 = arith.constant 0 : index
    %c0_66 = arith.constant 0 : index
    %168 = vector.load %arg6[%c1_64, %c0_65, %c0_66] : memref<16x100x128xf32, #tpu.memory_space<vmem>>, vector<1x100x128xf32>
    %169 = vector.shape_cast %168 : vector<1x100x128xf32> to vector<100x128xf32>
    %cst_67 = arith.constant dense<0.000000e+00> : vector<1x128xf32>
    %170 = tpu.matmul %167, %169, %cst_67 {dimension_numbers = #tpu.dot_dimension_numbers<[1], [0], [0], [1], [0, 0, 1, 1], [], []>} : vector<1x100xf32>, vector<100x128xf32>, vector<1x128xf32> -> vector<1x128xf32>
    %171 = arith.addf %165, %170 : vector<1x128xf32>
    %c0_68 = arith.constant 0 : index
    %c2_69 = arith.constant 2 : index
    %c0_70 = arith.constant 0 : index
    %172 = vector.load %arg13[%c0_68, %c2_69, %c0_70] : memref<1x16x100xf32, #tpu.memory_space<vmem>>, vector<1x1x100xf32>
    %173 = vector.shape_cast %172 : vector<1x1x100xf32> to vector<1x100xf32>
    %c2_71 = arith.constant 2 : index
    %c0_72 = arith.constant 0 : index
    %c0_73 = arith.constant 0 : index
    %174 = vector.load %arg6[%c2_71, %c0_72, %c0_73] : memref<16x100x128xf32, #tpu.memory_space<vmem>>, vector<1x100x128xf32>
    %175 = vector.shape_cast %174 : vector<1x100x128xf32> to vector<100x128xf32>
    %cst_74 = arith.constant dense<0.000000e+00> : vector<1x128xf32>
    %176 = tpu.matmul %173, %175, %cst_74 {dimension_numbers = #tpu.dot_dimension_numbers<[1], [0], [0], [1], [0, 0, 1, 1], [], []>} : vector<1x100xf32>, vector<100x128xf32>, vector<1x128xf32> -> vector<1x128xf32>
    %177 = arith.addf %171, %176 : vector<1x128xf32>
    %c0_75 = arith.constant 0 : index
    %c3_76 = arith.constant 3 : index
    %c0_77 = arith.constant 0 : index
    %178 = vector.load %arg13[%c0_75, %c3_76, %c0_77] : memref<1x16x100xf32, #tpu.memory_space<vmem>>, vector<1x1x100xf32>
    %179 = vector.shape_cast %178 : vector<1x1x100xf32> to vector<1x100xf32>
    %c3_78 = arith.constant 3 : index
    %c0_79 = arith.constant 0 : index
    %c0_80 = arith.constant 0 : index
    %180 = vector.load %arg6[%c3_78, %c0_79, %c0_80] : memref<16x100x128xf32, #tpu.memory_space<vmem>>, vector<1x100x128xf32>
    %181 = vector.shape_cast %180 : vector<1x100x128xf32> to vector<100x128xf32>
    %cst_81 = arith.constant dense<0.000000e+00> : vector<1x128xf32>
    %182 = tpu.matmul %179, %181, %cst_81 {dimension_numbers = #tpu.dot_dimension_numbers<[1], [0], [0], [1], [0, 0, 1, 1], [], []>} : vector<1x100xf32>, vector<100x128xf32>, vector<1x128xf32> -> vector<1x128xf32>
    %183 = arith.addf %177, %182 : vector<1x128xf32>
    %c0_82 = arith.constant 0 : index
    %c4_83 = arith.constant 4 : index
    %c0_84 = arith.constant 0 : index
    %184 = vector.load %arg13[%c0_82, %c4_83, %c0_84] : memref<1x16x100xf32, #tpu.memory_space<vmem>>, vector<1x1x100xf32>
    %185 = vector.shape_cast %184 : vector<1x1x100xf32> to vector<1x100xf32>
    %c4_85 = arith.constant 4 : index
    %c0_86 = arith.constant 0 : index
    %c0_87 = arith.constant 0 : index
    %186 = vector.load %arg6[%c4_85, %c0_86, %c0_87] : memref<16x100x128xf32, #tpu.memory_space<vmem>>, vector<1x100x128xf32>
    %187 = vector.shape_cast %186 : vector<1x100x128xf32> to vector<100x128xf32>
    %cst_88 = arith.constant dense<0.000000e+00> : vector<1x128xf32>
    %188 = tpu.matmul %185, %187, %cst_88 {dimension_numbers = #tpu.dot_dimension_numbers<[1], [0], [0], [1], [0, 0, 1, 1], [], []>} : vector<1x100xf32>, vector<100x128xf32>, vector<1x128xf32> -> vector<1x128xf32>
    %189 = arith.addf %183, %188 : vector<1x128xf32>
    %c0_89 = arith.constant 0 : index
    %c5 = arith.constant 5 : index
    %c0_90 = arith.constant 0 : index
    %190 = vector.load %arg13[%c0_89, %c5, %c0_90] : memref<1x16x100xf32, #tpu.memory_space<vmem>>, vector<1x1x100xf32>
    %191 = vector.shape_cast %190 : vector<1x1x100xf32> to vector<1x100xf32>
    %c5_91 = arith.constant 5 : index
    %c0_92 = arith.constant 0 : index
    %c0_93 = arith.constant 0 : index
    %192 = vector.load %arg6[%c5_91, %c0_92, %c0_93] : memref<16x100x128xf32, #tpu.memory_space<vmem>>, vector<1x100x128xf32>
    %193 = vector.shape_cast %192 : vector<1x100x128xf32> to vector<100x128xf32>
    %cst_94 = arith.constant dense<0.000000e+00> : vector<1x128xf32>
    %194 = tpu.matmul %191, %193, %cst_94 {dimension_numbers = #tpu.dot_dimension_numbers<[1], [0], [0], [1], [0, 0, 1, 1], [], []>} : vector<1x100xf32>, vector<100x128xf32>, vector<1x128xf32> -> vector<1x128xf32>
    %195 = arith.addf %189, %194 : vector<1x128xf32>
    %c0_95 = arith.constant 0 : index
    %c6 = arith.constant 6 : index
    %c0_96 = arith.constant 0 : index
    %196 = vector.load %arg13[%c0_95, %c6, %c0_96] : memref<1x16x100xf32, #tpu.memory_space<vmem>>, vector<1x1x100xf32>
    %197 = vector.shape_cast %196 : vector<1x1x100xf32> to vector<1x100xf32>
    %c6_97 = arith.constant 6 : index
    %c0_98 = arith.constant 0 : index
    %c0_99 = arith.constant 0 : index
    %198 = vector.load %arg6[%c6_97, %c0_98, %c0_99] : memref<16x100x128xf32, #tpu.memory_space<vmem>>, vector<1x100x128xf32>
    %199 = vector.shape_cast %198 : vector<1x100x128xf32> to vector<100x128xf32>
    %cst_100 = arith.constant dense<0.000000e+00> : vector<1x128xf32>
    %200 = tpu.matmul %197, %199, %cst_100 {dimension_numbers = #tpu.dot_dimension_numbers<[1], [0], [0], [1], [0, 0, 1, 1], [], []>} : vector<1x100xf32>, vector<100x128xf32>, vector<1x128xf32> -> vector<1x128xf32>
    %201 = arith.addf %195, %200 : vector<1x128xf32>
    %c0_101 = arith.constant 0 : index
    %c7 = arith.constant 7 : index
    %c0_102 = arith.constant 0 : index
    %202 = vector.load %arg13[%c0_101, %c7, %c0_102] : memref<1x16x100xf32, #tpu.memory_space<vmem>>, vector<1x1x100xf32>
    %203 = vector.shape_cast %202 : vector<1x1x100xf32> to vector<1x100xf32>
    %c7_103 = arith.constant 7 : index
    %c0_104 = arith.constant 0 : index
    %c0_105 = arith.constant 0 : index
    %204 = vector.load %arg6[%c7_103, %c0_104, %c0_105] : memref<16x100x128xf32, #tpu.memory_space<vmem>>, vector<1x100x128xf32>
    %205 = vector.shape_cast %204 : vector<1x100x128xf32> to vector<100x128xf32>
    %cst_106 = arith.constant dense<0.000000e+00> : vector<1x128xf32>
    %206 = tpu.matmul %203, %205, %cst_106 {dimension_numbers = #tpu.dot_dimension_numbers<[1], [0], [0], [1], [0, 0, 1, 1], [], []>} : vector<1x100xf32>, vector<100x128xf32>, vector<1x128xf32> -> vector<1x128xf32>
    %207 = arith.addf %201, %206 : vector<1x128xf32>
    %c0_107 = arith.constant 0 : index
    %c8 = arith.constant 8 : index
    %c0_108 = arith.constant 0 : index
    %208 = vector.load %arg13[%c0_107, %c8, %c0_108] : memref<1x16x100xf32, #tpu.memory_space<vmem>>, vector<1x1x100xf32>
    %209 = vector.shape_cast %208 : vector<1x1x100xf32> to vector<1x100xf32>
    %c8_109 = arith.constant 8 : index
    %c0_110 = arith.constant 0 : index
    %c0_111 = arith.constant 0 : index
    %210 = vector.load %arg6[%c8_109, %c0_110, %c0_111] : memref<16x100x128xf32, #tpu.memory_space<vmem>>, vector<1x100x128xf32>
    %211 = vector.shape_cast %210 : vector<1x100x128xf32> to vector<100x128xf32>
    %cst_112 = arith.constant dense<0.000000e+00> : vector<1x128xf32>
    %212 = tpu.matmul %209, %211, %cst_112 {dimension_numbers = #tpu.dot_dimension_numbers<[1], [0], [0], [1], [0, 0, 1, 1], [], []>} : vector<1x100xf32>, vector<100x128xf32>, vector<1x128xf32> -> vector<1x128xf32>
    %213 = arith.addf %207, %212 : vector<1x128xf32>
    %c0_113 = arith.constant 0 : index
    %c9 = arith.constant 9 : index
    %c0_114 = arith.constant 0 : index
    %214 = vector.load %arg13[%c0_113, %c9, %c0_114] : memref<1x16x100xf32, #tpu.memory_space<vmem>>, vector<1x1x100xf32>
    %215 = vector.shape_cast %214 : vector<1x1x100xf32> to vector<1x100xf32>
    %c9_115 = arith.constant 9 : index
    %c0_116 = arith.constant 0 : index
    %c0_117 = arith.constant 0 : index
    %216 = vector.load %arg6[%c9_115, %c0_116, %c0_117] : memref<16x100x128xf32, #tpu.memory_space<vmem>>, vector<1x100x128xf32>
    %217 = vector.shape_cast %216 : vector<1x100x128xf32> to vector<100x128xf32>
    %cst_118 = arith.constant dense<0.000000e+00> : vector<1x128xf32>
    %218 = tpu.matmul %215, %217, %cst_118 {dimension_numbers = #tpu.dot_dimension_numbers<[1], [0], [0], [1], [0, 0, 1, 1], [], []>} : vector<1x100xf32>, vector<100x128xf32>, vector<1x128xf32> -> vector<1x128xf32>
    %219 = arith.addf %213, %218 : vector<1x128xf32>
    %c0_119 = arith.constant 0 : index
    %c10 = arith.constant 10 : index
    %c0_120 = arith.constant 0 : index
    %220 = vector.load %arg13[%c0_119, %c10, %c0_120] : memref<1x16x100xf32, #tpu.memory_space<vmem>>, vector<1x1x100xf32>
    %221 = vector.shape_cast %220 : vector<1x1x100xf32> to vector<1x100xf32>
    %c10_121 = arith.constant 10 : index
    %c0_122 = arith.constant 0 : index
    %c0_123 = arith.constant 0 : index
    %222 = vector.load %arg6[%c10_121, %c0_122, %c0_123] : memref<16x100x128xf32, #tpu.memory_space<vmem>>, vector<1x100x128xf32>
    %223 = vector.shape_cast %222 : vector<1x100x128xf32> to vector<100x128xf32>
    %cst_124 = arith.constant dense<0.000000e+00> : vector<1x128xf32>
    %224 = tpu.matmul %221, %223, %cst_124 {dimension_numbers = #tpu.dot_dimension_numbers<[1], [0], [0], [1], [0, 0, 1, 1], [], []>} : vector<1x100xf32>, vector<100x128xf32>, vector<1x128xf32> -> vector<1x128xf32>
    %225 = arith.addf %219, %224 : vector<1x128xf32>
    %c0_125 = arith.constant 0 : index
    %c11 = arith.constant 11 : index
    %c0_126 = arith.constant 0 : index
    %226 = vector.load %arg13[%c0_125, %c11, %c0_126] : memref<1x16x100xf32, #tpu.memory_space<vmem>>, vector<1x1x100xf32>
    %227 = vector.shape_cast %226 : vector<1x1x100xf32> to vector<1x100xf32>
    %c11_127 = arith.constant 11 : index
    %c0_128 = arith.constant 0 : index
    %c0_129 = arith.constant 0 : index
    %228 = vector.load %arg6[%c11_127, %c0_128, %c0_129] : memref<16x100x128xf32, #tpu.memory_space<vmem>>, vector<1x100x128xf32>
    %229 = vector.shape_cast %228 : vector<1x100x128xf32> to vector<100x128xf32>
    %cst_130 = arith.constant dense<0.000000e+00> : vector<1x128xf32>
    %230 = tpu.matmul %227, %229, %cst_130 {dimension_numbers = #tpu.dot_dimension_numbers<[1], [0], [0], [1], [0, 0, 1, 1], [], []>} : vector<1x100xf32>, vector<100x128xf32>, vector<1x128xf32> -> vector<1x128xf32>
    %231 = arith.addf %225, %230 : vector<1x128xf32>
    %c0_131 = arith.constant 0 : index
    %c12 = arith.constant 12 : index
    %c0_132 = arith.constant 0 : index
    %232 = vector.load %arg13[%c0_131, %c12, %c0_132] : memref<1x16x100xf32, #tpu.memory_space<vmem>>, vector<1x1x100xf32>
    %233 = vector.shape_cast %232 : vector<1x1x100xf32> to vector<1x100xf32>
    %c12_133 = arith.constant 12 : index
    %c0_134 = arith.constant 0 : index
    %c0_135 = arith.constant 0 : index
    %234 = vector.load %arg6[%c12_133, %c0_134, %c0_135] : memref<16x100x128xf32, #tpu.memory_space<vmem>>, vector<1x100x128xf32>
    %235 = vector.shape_cast %234 : vector<1x100x128xf32> to vector<100x128xf32>
    %cst_136 = arith.constant dense<0.000000e+00> : vector<1x128xf32>
    %236 = tpu.matmul %233, %235, %cst_136 {dimension_numbers = #tpu.dot_dimension_numbers<[1], [0], [0], [1], [0, 0, 1, 1], [], []>} : vector<1x100xf32>, vector<100x128xf32>, vector<1x128xf32> -> vector<1x128xf32>
    %237 = arith.addf %231, %236 : vector<1x128xf32>
    %c0_137 = arith.constant 0 : index
    %c13 = arith.constant 13 : index
    %c0_138 = arith.constant 0 : index
    %238 = vector.load %arg13[%c0_137, %c13, %c0_138] : memref<1x16x100xf32, #tpu.memory_space<vmem>>, vector<1x1x100xf32>
    %239 = vector.shape_cast %238 : vector<1x1x100xf32> to vector<1x100xf32>
    %c13_139 = arith.constant 13 : index
    %c0_140 = arith.constant 0 : index
    %c0_141 = arith.constant 0 : index
    %240 = vector.load %arg6[%c13_139, %c0_140, %c0_141] : memref<16x100x128xf32, #tpu.memory_space<vmem>>, vector<1x100x128xf32>
    %241 = vector.shape_cast %240 : vector<1x100x128xf32> to vector<100x128xf32>
    %cst_142 = arith.constant dense<0.000000e+00> : vector<1x128xf32>
    %242 = tpu.matmul %239, %241, %cst_142 {dimension_numbers = #tpu.dot_dimension_numbers<[1], [0], [0], [1], [0, 0, 1, 1], [], []>} : vector<1x100xf32>, vector<100x128xf32>, vector<1x128xf32> -> vector<1x128xf32>
    %243 = arith.addf %237, %242 : vector<1x128xf32>
    %c0_143 = arith.constant 0 : index
    %c14 = arith.constant 14 : index
    %c0_144 = arith.constant 0 : index
    %244 = vector.load %arg13[%c0_143, %c14, %c0_144] : memref<1x16x100xf32, #tpu.memory_space<vmem>>, vector<1x1x100xf32>
    %245 = vector.shape_cast %244 : vector<1x1x100xf32> to vector<1x100xf32>
    %c14_145 = arith.constant 14 : index
    %c0_146 = arith.constant 0 : index
    %c0_147 = arith.constant 0 : index
    %246 = vector.load %arg6[%c14_145, %c0_146, %c0_147] : memref<16x100x128xf32, #tpu.memory_space<vmem>>, vector<1x100x128xf32>
    %247 = vector.shape_cast %246 : vector<1x100x128xf32> to vector<100x128xf32>
    %cst_148 = arith.constant dense<0.000000e+00> : vector<1x128xf32>
    %248 = tpu.matmul %245, %247, %cst_148 {dimension_numbers = #tpu.dot_dimension_numbers<[1], [0], [0], [1], [0, 0, 1, 1], [], []>} : vector<1x100xf32>, vector<100x128xf32>, vector<1x128xf32> -> vector<1x128xf32>
    %249 = arith.addf %243, %248 : vector<1x128xf32>
    %c0_149 = arith.constant 0 : index
    %c15 = arith.constant 15 : index
    %c0_150 = arith.constant 0 : index
    %250 = vector.load %arg13[%c0_149, %c15, %c0_150] : memref<1x16x100xf32, #tpu.memory_space<vmem>>, vector<1x1x100xf32>
    %251 = vector.shape_cast %250 : vector<1x1x100xf32> to vector<1x100xf32>
    %c15_151 = arith.constant 15 : index
    %c0_152 = arith.constant 0 : index
    %c0_153 = arith.constant 0 : index
    %252 = vector.load %arg6[%c15_151, %c0_152, %c0_153] : memref<16x100x128xf32, #tpu.memory_space<vmem>>, vector<1x100x128xf32>
    %253 = vector.shape_cast %252 : vector<1x100x128xf32> to vector<100x128xf32>
    %cst_154 = arith.constant dense<0.000000e+00> : vector<1x128xf32>
    %254 = tpu.matmul %251, %253, %cst_154 {dimension_numbers = #tpu.dot_dimension_numbers<[1], [0], [0], [1], [0, 0, 1, 1], [], []>} : vector<1x100xf32>, vector<100x128xf32>, vector<1x128xf32> -> vector<1x128xf32>
    %255 = arith.addf %249, %254 : vector<1x128xf32>
    %cst_155 = arith.constant 0.000000e+00 : f32
    %256 = vector.broadcast %cst_155 : f32 to vector<1x128xf32>
    %257 = arith.maximumf %255, %256 : vector<1x128xf32>
    %c0_156 = arith.constant 0 : index
    %c0_157 = arith.constant 0 : index
    %258 = vector.load %arg8[%c0_156, %c0_157] : memref<128x128xf32, #tpu.memory_space<vmem>>, vector<128x128xf32>
    %cst_158 = arith.constant dense<0.000000e+00> : vector<1x128xf32>
    %259 = tpu.matmul %257, %258, %cst_158 {dimension_numbers = #tpu.dot_dimension_numbers<[1], [0], [0], [1], [0, 0, 1, 1], [], []>} : vector<1x128xf32>, vector<128x128xf32>, vector<1x128xf32> -> vector<1x128xf32>
    %c0_159 = arith.constant 0 : index
    %c0_160 = arith.constant 0 : index
    %260 = vector.load %arg9[%c0_159, %c0_160] : memref<1x128xf32, #tpu.memory_space<vmem>>, vector<1x128xf32>
    %261 = arith.addf %259, %260 : vector<1x128xf32>
    %cst_161 = arith.constant 0.000000e+00 : f32
    %262 = vector.broadcast %cst_161 : f32 to vector<1x128xf32>
    %263 = arith.maximumf %261, %262 : vector<1x128xf32>
    %c0_162 = arith.constant 0 : index
    %c0_163 = arith.constant 0 : index
    %264 = vector.load %arg10[%c0_162, %c0_163] : memref<128x128xf32, #tpu.memory_space<vmem>>, vector<128x128xf32>
    %cst_164 = arith.constant dense<0.000000e+00> : vector<1x128xf32>
    %265 = tpu.matmul %263, %264, %cst_164 {dimension_numbers = #tpu.dot_dimension_numbers<[1], [0], [0], [1], [0, 0, 1, 1], [], []>} : vector<1x128xf32>, vector<128x128xf32>, vector<1x128xf32> -> vector<1x128xf32>
    %c0_165 = arith.constant 0 : index
    %c0_166 = arith.constant 0 : index
    %266 = vector.load %arg11[%c0_165, %c0_166] : memref<1x128xf32, #tpu.memory_space<vmem>>, vector<1x128xf32>
    %267 = arith.addf %265, %266 : vector<1x128xf32>
    %268 = vector.extract_strided_slice %267 {offsets = [0, 0], sizes = [1, 10], strides = [1, 1]} : vector<1x128xf32> to vector<1x10xf32>
    %c0_167 = arith.constant 0 : index
    %c0_168 = arith.constant 0 : index
    %c0_169 = arith.constant 0 : index
    %269 = vector.load %arg12[%c0_167, %c0_168, %c0_169] : memref<1x1x10xf32, #tpu.memory_space<vmem>>, vector<1x1x10xf32>
    %270 = vector.shape_cast %269 : vector<1x1x10xf32> to vector<1x10xf32>
    %271 = vector.shape_cast %268 : vector<1x10xf32> to vector<1x1x10xf32>
    tpu.vector_store %arg12[%c0_167, %c0_168, %c0_169], %271 {strides = array<i32>} : memref<1x1x10xf32, #tpu.memory_space<vmem>>, vector<1x1x10xf32>,
    return
  }
  func.func @transform_0(%arg0: i32) -> (i32, i32, i32) {
    %c0_i32 = arith.constant 0 : i32
    %c0_i32_0 = arith.constant 0 : i32
    %c0_i32_1 = arith.constant 0 : i32
    return %arg0, %c0_i32, %c0_i32_0 : i32, i32, i32
  }
  func.func @transform_1(%arg0: i32) -> (i32, i32, i32) {
    %c0_i32 = arith.constant 0 : i32
    %c0_i32_0 = arith.constant 0 : i32
    %c0_i32_1 = arith.constant 0 : i32
    %c0_i32_2 = arith.constant 0 : i32
    return %c0_i32, %c0_i32_0, %c0_i32_1 : i32, i32, i32
  }
  func.func @transform_2(%arg0: i32) -> (i32, i32) {
    %c0_i32 = arith.constant 0 : i32
    %c0_i32_0 = arith.constant 0 : i32
    %c0_i32_1 = arith.constant 0 : i32
    return %c0_i32, %c0_i32_0 : i32, i32
  }
  func.func @transform_3(%arg0: i32) -> (i32, i32, i32) {
    %c0_i32 = arith.constant 0 : i32
    %c0_i32_0 = arith.constant 0 : i32
    %c0_i32_1 = arith.constant 0 : i32
    %c0_i32_2 = arith.constant 0 : i32
    return %c0_i32, %c0_i32_0, %c0_i32_1 : i32, i32, i32
  }
  func.func @transform_4(%arg0: i32) -> (i32, i32) {
    %c0_i32 = arith.constant 0 : i32
    %c0_i32_0 = arith.constant 0 : i32
    %c0_i32_1 = arith.constant 0 : i32
    return %c0_i32, %c0_i32_0 : i32, i32
  }
  func.func @transform_5(%arg0: i32) -> (i32, i32, i32) {
    %c0_i32 = arith.constant 0 : i32
    %c0_i32_0 = arith.constant 0 : i32
    %c0_i32_1 = arith.constant 0 : i32
    %c0_i32_2 = arith.constant 0 : i32
    return %c0_i32, %c0_i32_0, %c0_i32_1 : i32, i32, i32
  }
  func.func @transform_6(%arg0: i32) -> (i32, i32) {
    %c0_i32 = arith.constant 0 : i32
    %c0_i32_0 = arith.constant 0 : i32
    %c0_i32_1 = arith.constant 0 : i32
    return %c0_i32, %c0_i32_0 : i32, i32
  }
  func.func @transform_7(%arg0: i32) -> (i32, i32) {
    %c0_i32 = arith.constant 0 : i32
    %c0_i32_0 = arith.constant 0 : i32
    %c0_i32_1 = arith.constant 0 : i32
    return %c0_i32, %c0_i32_0 : i32, i32
  }
  func.func @transform_8(%arg0: i32) -> (i32, i32) {
    %c0_i32 = arith.constant 0 : i32
    %c0_i32_0 = arith.constant 0 : i32
    %c0_i32_1 = arith.constant 0 : i32
    return %c0_i32, %c0_i32_0 : i32, i32
  }
  func.func @transform_9(%arg0: i32) -> (i32, i32) {
    %c0_i32 = arith.constant 0 : i32
    %c0_i32_0 = arith.constant 0 : i32
    %c0_i32_1 = arith.constant 0 : i32
    return %c0_i32, %c0_i32_0 : i32, i32
  }
  func.func @transform_10(%arg0: i32) -> (i32, i32) {
    %c0_i32 = arith.constant 0 : i32
    %c0_i32_0 = arith.constant 0 : i32
    %c0_i32_1 = arith.constant 0 : i32
    return %c0_i32, %c0_i32_0 : i32, i32
  }
  func.func @transform_11(%arg0: i32) -> (i32, i32, i32) {
    %c0_i32 = arith.constant 0 : i32
    %c0_i32_0 = arith.constant 0 : i32
    %c0_i32_1 = arith.constant 0 : i32
    return %arg0, %c0_i32, %c0_i32_0 : i32, i32, i32
  }
}

</mosaic_0001>

<llo_original>
// kernel: simplenet_forward.1
$region0: #{simplenet_forward.1}
  #allocation0 [shape = 'u32[]', space=smem, size = 0x4, offset = 0x4, fixed_abs, tag = 'smem constant byte address 0x4 - core index']
  #allocation1 [shape = 'u32[144,128]{1,0:T(1,128)}', space=vmem, size = 0x12000, scoped, tag = 'internal scratch']
  #allocation2 [shape = 'f32[1,16,100]{2,1,0:T(8,128)}', space=vmem, size = 0x2000, scoped, tag = 'scratch operand']
  %s0 = inlined_call_operand.vmem [shape: f32[2,8,1152], index: 0, kind: input, shape index: {}]
  %s1 = inlined_call_operand.vmem [shape: f32[5,8,40], index: 1, kind: input, shape index: {}]
  %s2 = inlined_call_operand.vmem [shape: f32[8,1], index: 2, kind: input, shape index: {}]
  %s3 = inlined_call_operand.vmem [shape: f32[5,16,40], index: 3, kind: input, shape index: {}]
  %s4 = inlined_call_operand.vmem [shape: f32[16,1], index: 4, kind: input, shape index: {}]
  %s5 = inlined_call_operand.vmem [shape: f32[16,100,128], index: 5, kind: input, shape index: {}]
  %s6 = inlined_call_operand.vmem [shape: f32[1,128], index: 6, kind: input, shape index: {}]
  %s7 = inlined_call_operand.vmem [shape: f32[128,128], index: 7, kind: input, shape index: {}]
  %s8 = inlined_call_operand.vmem [shape: f32[1,128], index: 8, kind: input, shape index: {}]
  %s9 = inlined_call_operand.vmem [shape: f32[128,128], index: 9, kind: input, shape index: {}]
  %s10 = inlined_call_operand.vmem [shape: f32[1,128], index: 10, kind: input, shape index: {}]
  %s11 = inlined_call_operand.hbm [shape: f32[2,1,10], index: 11, kind: output, shape index: {}]
  %s12 = sld [smem:[#allocation0]]
  $region77: #{simplenet_forward.1} parent=0
    _
  %s14 = ssub.s32 1, %s12
  %s15 = scalar_select 0, %s14, %s12
  $region1: #{simplenet_forward.1} parent=0
    #allocation3 [shape = 'u8[1024]{0}', space=vmem, size = 0x400, scoped, tag = 'output window, operand 0']
    #allocation4 [shape = 's32[2]{0}', space=sflag, size = 0x8, scoped, tag = 'scoped memory for simplenet_forward.1']
    %16 = vsyncpa [#allocation4], 0
    %s17 = scalar_lea.sflag [#allocation4], 1
    %18 = vsyncpa %s17, 0
    loop: start=0, step=1, limit=4
    $region2: #{simplenet_forward.1} parent=1 // loop_pre_header
      _
    $region3: #{simplenet_forward.1} parent=1 // loop_header
      %s20 = sphi 0, %s24
      %p21 = scmp.ge.s32.totalorder %s20, 4
      %s30 = sphi 0, %s32
      %s33 = sphi 0, %s30
      %s34 = sphi 0, %s33
      %s50 = sphi 0, %s34
      %s54 = sphi 0, %s54
      %s56 = sphi 0, %s54
      %s57 = sphi 0, %s56
      %s71 = sphi 0, %s57
      %s75 = sphi 0, %s75
      %s77 = sphi 0, %s75
      %s78 = sphi 0, %s77
      %s92 = sphi 0, %s78
      %s96 = sphi 0, %s96
      %s98 = sphi 0, %s96
      %s99 = sphi 0, %s98
      %s113 = sphi 0, %s99
      %s117 = sphi 0, %s117
      %s119 = sphi 0, %s117
      %s120 = sphi 0, %s119
      %s134 = sphi 0, %s120
      %s138 = sphi 0, %s138
      %s140 = sphi 0, %s138
      %s141 = sphi 0, %s140
      %s155 = sphi 0, %s141
      %s159 = sphi 0, %s159
      %s161 = sphi 0, %s159
      %s162 = sphi 0, %s161
      %s176 = sphi 0, %s162
      %s180 = sphi 0, %s180
      %s182 = sphi 0, %s180
      %s183 = sphi 0, %s182
      %s197 = sphi 0, %s183
      %s201 = sphi 0, %s201
      %s203 = sphi 0, %s201
      %s204 = sphi 0, %s203
      %s218 = sphi 0, %s204
      %s222 = sphi 0, %s222
      %s224 = sphi 0, %s222
      %s225 = sphi 0, %s224
      %s239 = sphi 0, %s225
      %s243 = sphi 0, %s243
      %s245 = sphi 0, %s243
      %s246 = sphi 0, %s245
      %s260 = sphi 0, %s246
      %s266 = sphi 0, %s268
      %s269 = sphi 0, %s266
      %s270 = sphi 0, %s269
      %s286 = sphi 0, %s270
    $region4: #{simplenet_forward.1} parent=1 // loop_header_branch
      %23 = sbr.rel (%p21) target = $region8
    $region5: #{simplenet_forward.1} parent=1 // loop_body
      %s25 = ssub.s32 %s20, 1
      %s26 = ssub.s32 %s20, 2
      %s27 = sadd.s32 %s20, 1
      %s28 = ssub.s32 %s20, %s27
      %p29 = scmp.eq.s32.totalorder %s28, 0
      %s31 = sadd.s32 %s30, 1
      %s32 = scalar_select %p29, %s30, %s31
      %p35 = pneg %p29
      %p36 = scmp.eq.s32.totalorder %s20, 1
      %p37 = por %p35, %p36
      %p38 = scmp.ne.s32.totalorder %s30, %s33
      %p39 = scmp.eq.s32.totalorder %s20, 0
      %p40 = por %p38, %p39
      %p41 = scmp.ne.s32.totalorder %s30, %s33
      %p42 = scmp.eq.s32.totalorder %s25, 1
      %p43 = por %p41, %p42
      %p44 = scmp.ne.s32.totalorder %s33, %s34
      %p45 = scmp.eq.s32.totalorder %s25, 0
      %p46 = por %p44, %p45
      %p47 = scmp.ne.s32.totalorder %s33, %s34
      %p48 = scmp.eq.s32.totalorder %s26, 1
      %p49 = por %p47, %p48
      %p51 = scmp.ne.s32.totalorder %s34, %s50
      %p52 = scmp.eq.s32.totalorder %s26, 0
      %p53 = por %p51, %p52
      %s55 = sadd.s32 %s54, 1
      %p58 = scmp.eq.s32.totalorder %s20, 1
      %p59 = scmp.ne.s32.totalorder %s54, %s56
      %p60 = scmp.eq.s32.totalorder %s20, 0
      %p61 = por %p59, %p60
      %p62 = scmp.ne.s32.totalorder %s54, %s56
      %p63 = scmp.eq.s32.totalorder %s25, 1
      %p64 = por %p62, %p63
      %p65 = scmp.ne.s32.totalorder %s56, %s57
      %p66 = scmp.eq.s32.totalorder %s25, 0
      %p67 = por %p65, %p66
      %p68 = scmp.ne.s32.totalorder %s56, %s57
      %p69 = scmp.eq.s32.totalorder %s26, 1
      %p70 = por %p68, %p69
      %p72 = scmp.ne.s32.totalorder %s57, %s71
      %p73 = scmp.eq.s32.totalorder %s26, 0
      %p74 = por %p72, %p73
      %s76 = sadd.s32 %s75, 1
      %p79 = scmp.eq.s32.totalorder %s20, 1
      %p80 = scmp.ne.s32.totalorder %s75, %s77
      %p81 = scmp.eq.s32.totalorder %s20, 0
      %p82 = por %p80, %p81
      %p83 = scmp.ne.s32.totalorder %s75, %s77
      %p84 = scmp.eq.s32.totalorder %s25, 1
      %p85 = por %p83, %p84
      %p86 = scmp.ne.s32.totalorder %s77, %s78
      %p87 = scmp.eq.s32.totalorder %s25, 0
      %p88 = por %p86, %p87
      %p89 = scmp.ne.s32.totalorder %s77, %s78
      %p90 = scmp.eq.s32.totalorder %s26, 1
      %p91 = por %p89, %p90
      %p93 = scmp.ne.s32.totalorder %s78, %s92
      %p94 = scmp.eq.s32.totalorder %s26, 0
      %p95 = por %p93, %p94
      %s97 = sadd.s32 %s96, 1
      %p100 = scmp.eq.s32.totalorder %s20, 1
      %p101 = scmp.ne.s32.totalorder %s96, %s98
      %p102 = scmp.eq.s32.totalorder %s20, 0
      %p103 = por %p101, %p102
      %p104 = scmp.ne.s32.totalorder %s96, %s98
      %p105 = scmp.eq.s32.totalorder %s25, 1
      %p106 = por %p104, %p105
      %p107 = scmp.ne.s32.totalorder %s98, %s99
      %p108 = scmp.eq.s32.totalorder %s25, 0
      %p109 = por %p107, %p108
      %p110 = scmp.ne.s32.totalorder %s98, %s99
      %p111 = scmp.eq.s32.totalorder %s26, 1
      %p112 = por %p110, %p111
      %p114 = scmp.ne.s32.totalorder %s99, %s113
      %p115 = scmp.eq.s32.totalorder %s26, 0
      %p116 = por %p114, %p115
      %s118 = sadd.s32 %s117, 1
      %p121 = scmp.eq.s32.totalorder %s20, 1
      %p122 = scmp.ne.s32.totalorder %s117, %s119
      %p123 = scmp.eq.s32.totalorder %s20, 0
      %p124 = por %p122, %p123
      %p125 = scmp.ne.s32.totalorder %s117, %s119
      %p126 = scmp.eq.s32.totalorder %s25, 1
      %p127 = por %p125, %p126
      %p128 = scmp.ne.s32.totalorder %s119, %s120
      %p129 = scmp.eq.s32.totalorder %s25, 0
      %p130 = por %p128, %p129
      %p131 = scmp.ne.s32.totalorder %s119, %s120
      %p132 = scmp.eq.s32.totalorder %s26, 1
      %p133 = por %p131, %p132
      %p135 = scmp.ne.s32.totalorder %s120, %s134
      %p136 = scmp.eq.s32.totalorder %s26, 0
      %p137 = por %p135, %p136
      %s139 = sadd.s32 %s138, 1
      %p142 = scmp.eq.s32.totalorder %s20, 1
      %p143 = scmp.ne.s32.totalorder %s138, %s140
      %p144 = scmp.eq.s32.totalorder %s20, 0
      %p145 = por %p143, %p144
      %p146 = scmp.ne.s32.totalorder %s138, %s140
      %p147 = scmp.eq.s32.totalorder %s25, 1
      %p148 = por %p146, %p147
      %p149 = scmp.ne.s32.totalorder %s140, %s141
      %p150 = scmp.eq.s32.totalorder %s25, 0
      %p151 = por %p149, %p150
      %p152 = scmp.ne.s32.totalorder %s140, %s141
      %p153 = scmp.eq.s32.totalorder %s26, 1
      %p154 = por %p152, %p153
      %p156 = scmp.ne.s32.totalorder %s141, %s155
      %p157 = scmp.eq.s32.totalorder %s26, 0
      %p158 = por %p156, %p157
      %s160 = sadd.s32 %s159, 1
      %p163 = scmp.eq.s32.totalorder %s20, 1
      %p164 = scmp.ne.s32.totalorder %s159, %s161
      %p165 = scmp.eq.s32.totalorder %s20, 0
      %p166 = por %p164, %p165
      %p167 = scmp.ne.s32.totalorder %s159, %s161
      %p168 = scmp.eq.s32.totalorder %s25, 1
      %p169 = por %p167, %p168
      %p170 = scmp.ne.s32.totalorder %s161, %s162
      %p171 = scmp.eq.s32.totalorder %s25, 0
      %p172 = por %p170, %p171
      %p173 = scmp.ne.s32.totalorder %s161, %s162
      %p174 = scmp.eq.s32.totalorder %s26, 1
      %p175 = por %p173, %p174
      %p177 = scmp.ne.s32.totalorder %s162, %s176
      %p178 = scmp.eq.s32.totalorder %s26, 0
      %p179 = por %p177, %p178
      %s181 = sadd.s32 %s180, 1
      %p184 = scmp.eq.s32.totalorder %s20, 1
      %p185 = scmp.ne.s32.totalorder %s180, %s182
      %p186 = scmp.eq.s32.totalorder %s20, 0
      %p187 = por %p185, %p186
      %p188 = scmp.ne.s32.totalorder %s180, %s182
      %p189 = scmp.eq.s32.totalorder %s25, 1
      %p190 = por %p188, %p189
      %p191 = scmp.ne.s32.totalorder %s182, %s183
      %p192 = scmp.eq.s32.totalorder %s25, 0
      %p193 = por %p191, %p192
      %p194 = scmp.ne.s32.totalorder %s182, %s183
      %p195 = scmp.eq.s32.totalorder %s26, 1
      %p196 = por %p194, %p195
      %p198 = scmp.ne.s32.totalorder %s183, %s197
      %p199 = scmp.eq.s32.totalorder %s26, 0
      %p200 = por %p198, %p199
      %s202 = sadd.s32 %s201, 1
      %p205 = scmp.eq.s32.totalorder %s20, 1
      %p206 = scmp.ne.s32.totalorder %s201, %s203
      %p207 = scmp.eq.s32.totalorder %s20, 0
      %p208 = por %p206, %p207
      %p209 = scmp.ne.s32.totalorder %s201, %s203
      %p210 = scmp.eq.s32.totalorder %s25, 1
      %p211 = por %p209, %p210
      %p212 = scmp.ne.s32.totalorder %s203, %s204
      %p213 = scmp.eq.s32.totalorder %s25, 0
      %p214 = por %p212, %p213
      %p215 = scmp.ne.s32.totalorder %s203, %s204
      %p216 = scmp.eq.s32.totalorder %s26, 1
      %p217 = por %p215, %p216
      %p219 = scmp.ne.s32.totalorder %s204, %s218
      %p220 = scmp.eq.s32.totalorder %s26, 0
      %p221 = por %p219, %p220
      %s223 = sadd.s32 %s222, 1
      %p226 = scmp.eq.s32.totalorder %s20, 1
      %p227 = scmp.ne.s32.totalorder %s222, %s224
      %p228 = scmp.eq.s32.totalorder %s20, 0
      %p229 = por %p227, %p228
      %p230 = scmp.ne.s32.totalorder %s222, %s224
      %p231 = scmp.eq.s32.totalorder %s25, 1
      %p232 = por %p230, %p231
      %p233 = scmp.ne.s32.totalorder %s224, %s225
      %p234 = scmp.eq.s32.totalorder %s25, 0
      %p235 = por %p233, %p234
      %p236 = scmp.ne.s32.totalorder %s224, %s225
      %p237 = scmp.eq.s32.totalorder %s26, 1
      %p238 = por %p236, %p237
      %p240 = scmp.ne.s32.totalorder %s225, %s239
      %p241 = scmp.eq.s32.totalorder %s26, 0
      %p242 = por %p240, %p241
      %s244 = sadd.s32 %s243, 1
      %p247 = scmp.eq.s32.totalorder %s20, 1
      %p248 = scmp.ne.s32.totalorder %s243, %s245
      %p249 = scmp.eq.s32.totalorder %s20, 0
      %p250 = por %p248, %p249
      %p251 = scmp.ne.s32.totalorder %s243, %s245
      %p252 = scmp.eq.s32.totalorder %s25, 1
      %p253 = por %p251, %p252
      %p254 = scmp.ne.s32.totalorder %s245, %s246
      %p255 = scmp.eq.s32.totalorder %s25, 0
      %p256 = por %p254, %p255
      %p257 = scmp.ne.s32.totalorder %s245, %s246
      %p258 = scmp.eq.s32.totalorder %s26, 1
      %p259 = por %p257, %p258
      %p261 = scmp.ne.s32.totalorder %s246, %s260
      %p262 = scmp.eq.s32.totalorder %s26, 0
      %p263 = por %p261, %p262
      %s264 = ssub.s32 %s20, %s27
      %p265 = scmp.eq.s32.totalorder %s264, 0
      %s267 = sadd.s32 %s266, 1
      %s268 = scalar_select %p265, %s266, %s267
      %p271 = pneg %p265
      %p272 = scmp.eq.s32.totalorder %s20, 1
      %p273 = por %p271, %p272
      %p274 = scmp.ne.s32.totalorder %s266, %s269
      %p275 = scmp.eq.s32.totalorder %s20, 0
      %p276 = por %p274, %p275
      %p277 = scmp.ne.s32.totalorder %s266, %s269
      %p278 = scmp.eq.s32.totalorder %s25, 1
      %p279 = por %p277, %p278
      %p280 = scmp.ne.s32.totalorder %s269, %s270
      %p281 = scmp.eq.s32.totalorder %s25, 0
      %p282 = por %p280, %p281
      %p283 = scmp.ne.s32.totalorder %s269, %s270
      %p284 = scmp.eq.s32.totalorder %s26, 1
      %p285 = por %p283, %p284
      %p287 = scmp.ne.s32.totalorder %s270, %s286
      %p288 = scmp.eq.s32.totalorder %s26, 0
      %p289 = por %p287, %p288
      %p290 = scmp.le.s32.totalorder 1, %s20
      %p291 = scmp.lt.s32.totalorder %s20, 3
      %p292 = pnand %p290, %p291
      %p293 = pneg %p292
      // Predicated region
      $region9: #{simplenet_forward.1} parent=5 // pred_check
        _
      $region10: #{simplenet_forward.1} parent=5 // pred_check_branch
        %295 = sbr.rel (%p292) target = $region12
      $region11: #{simplenet_forward.1} parent=5 // pred_region
        %s296 = ssub.s32 %s20, 1
        // Predicated region
        $region13: #{simplenet_forward.1} parent=11 // pred_check
          %p297 = pneg %p67
        $region14: #{simplenet_forward.1} parent=11 // pred_check_branch
          %299 = sbr.rel (%p297) target = $region16
        $region15: #{simplenet_forward.1} parent=11 // pred_region
          _
        $region16: #{simplenet_forward.1} parent=11 // pred_fallthru
          _
        // Predicated region
        $region17: #{simplenet_forward.1} parent=11 // pred_check
          %p300 = pneg %p88
        $region18: #{simplenet_forward.1} parent=11 // pred_check_branch
          %302 = sbr.rel (%p300) target = $region20
        $region19: #{simplenet_forward.1} parent=11 // pred_region
          _
        $region20: #{simplenet_forward.1} parent=11 // pred_fallthru
          _
        // Predicated region
        $region21: #{simplenet_forward.1} parent=11 // pred_check
          %p303 = pneg %p109
        $region22: #{simplenet_forward.1} parent=11 // pred_check_branch
          %305 = sbr.rel (%p303) target = $region24
        $region23: #{simplenet_forward.1} parent=11 // pred_region
          _
        $region24: #{simplenet_forward.1} parent=11 // pred_fallthru
          _
        // Predicated region
        $region25: #{simplenet_forward.1} parent=11 // pred_check
          %p306 = pneg %p130
        $region26: #{simplenet_forward.1} parent=11 // pred_check_branch
          %308 = sbr.rel (%p306) target = $region28
        $region27: #{simplenet_forward.1} parent=11 // pred_region
          _
        $region28: #{simplenet_forward.1} parent=11 // pred_fallthru
          _
        // Predicated region
        $region29: #{simplenet_forward.1} parent=11 // pred_check
          %p309 = pneg %p151
        $region30: #{simplenet_forward.1} parent=11 // pred_check_branch
          %311 = sbr.rel (%p309) target = $region32
        $region31: #{simplenet_forward.1} parent=11 // pred_region
          _
        $region32: #{simplenet_forward.1} parent=11 // pred_fallthru
          _
        // Predicated region
        $region33: #{simplenet_forward.1} parent=11 // pred_check
          %p312 = pneg %p172
        $region34: #{simplenet_forward.1} parent=11 // pred_check_branch
          %314 = sbr.rel (%p312) target = $region36
        $region35: #{simplenet_forward.1} parent=11 // pred_region
          _
        $region36: #{simplenet_forward.1} parent=11 // pred_fallthru
          _
        // Predicated region
        $region37: #{simplenet_forward.1} parent=11 // pred_check
          %p315 = pneg %p193
        $region38: #{simplenet_forward.1} parent=11 // pred_check_branch
          %317 = sbr.rel (%p315) target = $region40
        $region39: #{simplenet_forward.1} parent=11 // pred_region
          _
        $region40: #{simplenet_forward.1} parent=11 // pred_fallthru
          _
        // Predicated region
        $region41: #{simplenet_forward.1} parent=11 // pred_check
          %p318 = pneg %p214
        $region42: #{simplenet_forward.1} parent=11 // pred_check_branch
          %320 = sbr.rel (%p318) target = $region44
        $region43: #{simplenet_forward.1} parent=11 // pred_region
          _
        $region44: #{simplenet_forward.1} parent=11 // pred_fallthru
          _
        // Predicated region
        $region45: #{simplenet_forward.1} parent=11 // pred_check
          %p321 = pneg %p235
        $region46: #{simplenet_forward.1} parent=11 // pred_check_branch
          %323 = sbr.rel (%p321) target = $region48
        $region47: #{simplenet_forward.1} parent=11 // pred_region
          _
        $region48: #{simplenet_forward.1} parent=11 // pred_fallthru
          _
        // Predicated region
        $region49: #{simplenet_forward.1} parent=11 // pred_check
          %p324 = pneg %p256
        $region50: #{simplenet_forward.1} parent=11 // pred_check_branch
          %326 = sbr.rel (%p324) target = $region52
        $region51: #{simplenet_forward.1} parent=11 // pred_region
          _
        $region52: #{simplenet_forward.1} parent=11 // pred_fallthru
          _
      $region12: #{simplenet_forward.1} parent=5 // pred_fallthru
        _
      %p327 = scmp.lt.s32.totalorder %s20, 2
      // Predicated region
      $region53: #{simplenet_forward.1} parent=5 // pred_check
        %p328 = pneg %p327
      $region54: #{simplenet_forward.1} parent=5 // pred_check_branch
        %330 = sbr.rel (%p328) target = $region56
      $region55: #{simplenet_forward.1} parent=5 // pred_region
        // Predicated region
        $region57: #{simplenet_forward.1} parent=55 // pred_check
          %p331 = pneg %p40
        $region58: #{simplenet_forward.1} parent=55 // pred_check_branch
          %333 = sbr.rel (%p331) target = $region60
        $region59: #{simplenet_forward.1} parent=55 // pred_region
          %p334 = scmp.lt.s32.totalorder %s20, 1
          %s335 = scalar_select %p334, %s20, 1
          %s336 = smul.addr %s335, 9
          %s337 = smul.addr %s336, 8
          %s338 = scalar_lea.vmem %s0, %s337
        $region60: #{simplenet_forward.1} parent=55 // pred_fallthru
          _
      $region56: #{simplenet_forward.1} parent=5 // pred_fallthru
        _
      %p339 = scmp.le.s32.totalorder 1, %s20
      %p340 = scmp.lt.s32.totalorder %s20, 3
      %p341 = pnand %p339, %p340
      %p342 = pneg %p341
      // Predicated region
      $region61: #{simplenet_forward.1} parent=5 // pred_check
        _
      $region62: #{simplenet_forward.1} parent=5 // pred_check_branch
        %344 = sbr.rel (%p341) target = $region64
      $region63: #{simplenet_forward.1} parent=5 // pred_region
        %s345 = ssub.s32 %s20, 1
        %p346 = scmp.lt.s32.totalorder %s25, 1
        %s347 = scalar_select %p346, %s25, 1
        %s348 = smul.addr %s347, 9
        %s349 = smul.addr %s348, 8
        %s350 = scalar_lea.vmem %s0, %s349
        %p351 = pneg %p46
        %p352 = pneg %p43
        %p353 = pneg %p67
        %p354 = pneg %p64
        %p355 = pneg %p88
        %p356 = pneg %p85
        %p357 = pneg %p109
        %p358 = pneg %p106
        %p359 = pneg %p130
        %p360 = pneg %p127
        %p361 = pneg %p151
        %p362 = pneg %p148
        %p363 = pneg %p172
        %p364 = pneg %p169
        %p365 = pneg %p193
        %p366 = pneg %p190
        %p367 = pneg %p214
        %p368 = pneg %p211
        %p369 = pneg %p235
        %p370 = pneg %p232
        %p371 = pneg %p256
        %p372 = pneg %p253
        %p373 = pneg %p282
        %p374 = pneg %p279
        %s375 = sand.u32 %s269, 1
        %s376 = scalar_lea.sflag [#allocation4], %s375
        %s377 = sand.u32 %s269, 1
        %s378 = scalar_lea.vmem [#allocation3], %s377
        %p379 = scmp.lt.s32.totalorder %s25, 1
        %s380 = scalar_select %p379, %s25, 1
        %s381 = smul.addr %s380, 9
        %s382 = smul.addr %s381, 8
        %s383 = scalar_lea.vmem %s0, %s382
        %v384 = vld [vmem:[%s383] sm:$0xff]
        %v385 = vld [vmem:[%s383 + $0x8] sm:$0xff]
        %v386 = vld [vmem:[%s383 + $0x10] sm:$0xff]
        %v387 = vld [vmem:[%s383 + $0x18] sm:$0xff]
        %v388 = vld [vmem:[%s383 + $0x20] sm:$0xff]
        %v389 = vld [vmem:[%s383 + $0x28] sm:$0xff]
        %v390 = vld [vmem:[%s383 + $0x30] sm:$0xff]
        %v391 = vld [vmem:[%s383 + $0x38] sm:$0xff]
        %v392 = vld [vmem:[%s383 + $0x40] sm:$0xff]
        %401 = vrot.lane.b32.xlu0 %v384, 127
        %v402 = vpop.permute.xlu0 %401
        %403 = vrot.lane.b32.xlu0 %v385, 127
        %v404 = vpop.permute.xlu0 %403
        %405 = vrot.lane.b32.xlu0 %v386, 127
        %v406 = vpop.permute.xlu0 %405
        %407 = vrot.lane.b32.xlu0 %v387, 127
        %v408 = vpop.permute.xlu0 %407
        %409 = vrot.lane.b32.xlu0 %v388, 127
        %v410 = vpop.permute.xlu0 %409
        %411 = vrot.lane.b32.xlu0 %v389, 127
        %v412 = vpop.permute.xlu0 %411
        %413 = vrot.lane.b32.xlu0 %v390, 127
        %v414 = vpop.permute.xlu0 %413
        %415 = vrot.lane.b32.xlu0 %v391, 127
        %v416 = vpop.permute.xlu0 %415
        %vm417 = vcmask 1039360
        %v418 = vsel %vm417, %v402, %v404
        %v419 = vsel %vm417, %v404, %v406
        %v420 = vsel %vm417, %v406, %v408
        %v421 = vsel %vm417, %v408, %v410
        %v422 = vsel %vm417, %v410, %v412
        %v423 = vsel %vm417, %v412, %v414
        %v424 = vsel %vm417, %v414, %v416
        %432 = vrot.lane.b32.xlu0 %v384, 126
        %v433 = vpop.permute.xlu0 %432
        %434 = vrot.lane.b32.xlu0 %v385, 126
        %v435 = vpop.permute.xlu0 %434
        %436 = vrot.lane.b32.xlu0 %v386, 126
        %v437 = vpop.permute.xlu0 %436
        %438 = vrot.lane.b32.xlu0 %v387, 126
        %v439 = vpop.permute.xlu0 %438
        %440 = vrot.lane.b32.xlu0 %v388, 126
        %v441 = vpop.permute.xlu0 %440
        %442 = vrot.lane.b32.xlu0 %v389, 126
        %v443 = vpop.permute.xlu0 %442
        %444 = vrot.lane.b32.xlu0 %v390, 126
        %v445 = vpop.permute.xlu0 %444
        %446 = vrot.lane.b32.xlu0 %v391, 126
        %v447 = vpop.permute.xlu0 %446
        %vm448 = vcmask 1031168
        %v449 = vsel %vm448, %v433, %v435
        %v450 = vsel %vm448, %v435, %v437
        %v451 = vsel %vm448, %v437, %v439
        %v452 = vsel %vm448, %v439, %v441
        %v453 = vsel %vm448, %v441, %v443
        %v454 = vsel %vm448, %v443, %v445
        %v455 = vsel %vm448, %v445, %v447
        %463 = vrot.lane.b32.xlu0 %v384, 125
        %v464 = vpop.permute.xlu0 %463
        %465 = vrot.lane.b32.xlu0 %v385, 125
        %v466 = vpop.permute.xlu0 %465
        %467 = vrot.lane.b32.xlu0 %v386, 125
        %v468 = vpop.permute.xlu0 %467
        %469 = vrot.lane.b32.xlu0 %v387, 125
        %v470 = vpop.permute.xlu0 %469
        %471 = vrot.lane.b32.xlu0 %v388, 125
        %v472 = vpop.permute.xlu0 %471
        %473 = vrot.lane.b32.xlu0 %v389, 125
        %v474 = vpop.permute.xlu0 %473
        %475 = vrot.lane.b32.xlu0 %v390, 125
        %v476 = vpop.permute.xlu0 %475
        %477 = vrot.lane.b32.xlu0 %v391, 125
        %v478 = vpop.permute.xlu0 %477
        %vm479 = vcmask 1022976
        %v480 = vsel %vm479, %v464, %v466
        %v481 = vsel %vm479, %v466, %v468
        %v482 = vsel %vm479, %v468, %v470
        %v483 = vsel %vm479, %v470, %v472
        %v484 = vsel %vm479, %v472, %v474
        %v485 = vsel %vm479, %v474, %v476
        %v486 = vsel %vm479, %v476, %v478
        %494 = vrot.lane.b32.xlu0 %v384, 124
        %v495 = vpop.permute.xlu0 %494
        %496 = vrot.lane.b32.xlu0 %v385, 124
        %v497 = vpop.permute.xlu0 %496
        %498 = vrot.lane.b32.xlu0 %v386, 124
        %v499 = vpop.permute.xlu0 %498
        %500 = vrot.lane.b32.xlu0 %v387, 124
        %v501 = vpop.permute.xlu0 %500
        %502 = vrot.lane.b32.xlu0 %v388, 124
        %v503 = vpop.permute.xlu0 %502
        %504 = vrot.lane.b32.xlu0 %v389, 124
        %v505 = vpop.permute.xlu0 %504
        %506 = vrot.lane.b32.xlu0 %v390, 124
        %v507 = vpop.permute.xlu0 %506
        %508 = vrot.lane.b32.xlu0 %v391, 124
        %v509 = vpop.permute.xlu0 %508
        %vm510 = vcmask 1014784
        %v511 = vsel %vm510, %v495, %v497
        %v512 = vsel %vm510, %v497, %v499
        %v513 = vsel %vm510, %v499, %v501
        %v514 = vsel %vm510, %v501, %v503
        %v515 = vsel %vm510, %v503, %v505
        %v516 = vsel %vm510, %v505, %v507
        %v517 = vsel %vm510, %v507, %v509
        %v525 = vld [vmem:[%s1] sm:$0xff]
        %s526 = scalar_lea.vmem %s1, 8
        %v527 = vld [vmem:[%s526] sm:$0xff]
        %528 = vrot.lane.b32.xlu0 %v384, 96
        %v529 = vpop.permute.xlu0 %528
        %530 = vrot.lane.b32.xlu0 %v385, 96
        %v531 = vpop.permute.xlu0 %530
        %532 = vrot.lane.b32.xlu0 %v386, 96
        %v533 = vpop.permute.xlu0 %532
        %534 = vrot.lane.b32.xlu0 %v387, 96
        %v535 = vpop.permute.xlu0 %534
        %536 = vrot.lane.b32.xlu0 %v388, 96
        %v537 = vpop.permute.xlu0 %536
        %538 = vrot.lane.b32.xlu0 %v389, 96
        %v539 = vpop.permute.xlu0 %538
        %540 = vrot.lane.b32.xlu0 %v390, 96
        %v541 = vpop.permute.xlu0 %540
        %542 = vrot.lane.b32.xlu0 %v391, 96
        %v543 = vpop.permute.xlu0 %542
        %544 = vrot.lane.b32.xlu0 %v418, 96
        %v545 = vpop.permute.xlu0 %544
        %546 = vrot.lane.b32.xlu0 %v419, 96
        %v547 = vpop.permute.xlu0 %546
        %548 = vrot.lane.b32.xlu0 %v420, 96
        %v549 = vpop.permute.xlu0 %548
        %550 = vrot.lane.b32.xlu0 %v421, 96
        %v551 = vpop.permute.xlu0 %550
        %552 = vrot.lane.b32.xlu0 %v422, 96
        %v553 = vpop.permute.xlu0 %552
        %554 = vrot.lane.b32.xlu0 %v423, 96
        %v555 = vpop.permute.xlu0 %554
        %556 = vrot.lane.b32.xlu0 %v424, 96
        %v557 = vpop.permute.xlu0 %556
        %558 = vrot.lane.b32.xlu0 %v416, 96
        %v559 = vpop.permute.xlu0 %558
        %560 = vrot.lane.b32.xlu0 %v449, 96
        %v561 = vpop.permute.xlu0 %560
        %562 = vrot.lane.b32.xlu0 %v450, 96
        %v563 = vpop.permute.xlu0 %562
        %564 = vrot.lane.b32.xlu0 %v451, 96
        %v565 = vpop.permute.xlu0 %564
        %566 = vrot.lane.b32.xlu0 %v452, 96
        %v567 = vpop.permute.xlu0 %566
        %568 = vrot.lane.b32.xlu0 %v453, 96
        %v569 = vpop.permute.xlu0 %568
        %570 = vrot.lane.b32.xlu0 %v454, 96
        %v571 = vpop.permute.xlu0 %570
        %572 = vrot.lane.b32.xlu0 %v455, 96
        %v573 = vpop.permute.xlu0 %572
        %574 = vrot.lane.b32.xlu0 %v447, 96
        %v575 = vpop.permute.xlu0 %574
        %576 = vrot.lane.b32.xlu0 %v480, 96
        %v577 = vpop.permute.xlu0 %576
        %578 = vrot.lane.b32.xlu0 %v481, 96
        %v579 = vpop.permute.xlu0 %578
        %580 = vrot.lane.b32.xlu0 %v482, 96
        %v581 = vpop.permute.xlu0 %580
        %582 = vrot.lane.b32.xlu0 %v483, 96
        %v583 = vpop.permute.xlu0 %582
        %584 = vrot.lane.b32.xlu0 %v484, 96
        %v585 = vpop.permute.xlu0 %584
        %586 = vrot.lane.b32.xlu0 %v485, 96
        %v587 = vpop.permute.xlu0 %586
        %588 = vrot.lane.b32.xlu0 %v486, 96
        %v589 = vpop.permute.xlu0 %588
        %590 = vrot.lane.b32.xlu0 %v478, 96
        %v591 = vpop.permute.xlu0 %590
        %592 = vrot.lane.b32.xlu0 %v511, 96
        %v593 = vpop.permute.xlu0 %592
        %594 = vrot.lane.b32.xlu0 %v512, 96
        %v595 = vpop.permute.xlu0 %594
        %596 = vrot.lane.b32.xlu0 %v513, 96
        %v597 = vpop.permute.xlu0 %596
        %598 = vrot.lane.b32.xlu0 %v514, 96
        %v599 = vpop.permute.xlu0 %598
        %600 = vrot.lane.b32.xlu0 %v515, 96
        %v601 = vpop.permute.xlu0 %600
        %602 = vrot.lane.b32.xlu0 %v516, 96
        %v603 = vpop.permute.xlu0 %602
        %604 = vrot.lane.b32.xlu0 %v517, 96
        %v605 = vpop.permute.xlu0 %604
        %606 = vrot.lane.b32.xlu0 %v509, 96
        %v607 = vpop.permute.xlu0 %606
        %vm608 = vcmask 785408
        %v609 = vsel %vm608, %v529, %v531
        %v610 = vsel %vm608, %v531, %v533
        %v611 = vsel %vm608, %v533, %v535
        %v612 = vsel %vm608, %v535, %v537
        %v613 = vsel %vm608, %v537, %v539
        %v614 = vsel %vm608, %v539, %v541
        %v615 = vsel %vm608, %v541, %v543
        %v616 = vsel %vm608, %v545, %v547
        %v617 = vsel %vm608, %v547, %v549
        %v618 = vsel %vm608, %v549, %v551
        %v619 = vsel %vm608, %v551, %v553
        %v620 = vsel %vm608, %v553, %v555
        %v621 = vsel %vm608, %v555, %v557
        %v622 = vsel %vm608, %v557, %v559
        %v623 = vsel %vm608, %v561, %v563
        %v624 = vsel %vm608, %v563, %v565
        %v625 = vsel %vm608, %v565, %v567
        %v626 = vsel %vm608, %v567, %v569
        %v627 = vsel %vm608, %v569, %v571
        %v628 = vsel %vm608, %v571, %v573
        %v629 = vsel %vm608, %v573, %v575
        %v630 = vsel %vm608, %v577, %v579
        %v631 = vsel %vm608, %v579, %v581
        %v632 = vsel %vm608, %v581, %v583
        %v633 = vsel %vm608, %v583, %v585
        %v634 = vsel %vm608, %v585, %v587
        %v635 = vsel %vm608, %v587, %v589
        %v636 = vsel %vm608, %v589, %v591
        %v637 = vsel %vm608, %v593, %v595
        %v638 = vsel %vm608, %v595, %v597
        %v639 = vsel %vm608, %v597, %v599
        %v640 = vsel %vm608, %v599, %v601
        %v641 = vsel %vm608, %v601, %v603
        %v642 = vsel %vm608, %v603, %v605
        %v643 = vsel %vm608, %v605, %v607
        %vm679 = vcmask 326656
        %v681 = vsel %vm679, %v527, 0
        %683 = vmatprep.subr.mxu0 %v610
        %684 = vmatpush1.msra.mxu0 %v609
        %685 = vmatprep.subr.mxu0 %v617
        %686 = vmatpush1.msra.mxu0 %v616
        %687 = vmatprep.subr.mxu0 %v624
        %688 = vmatpush1.msra.mxu0 %v623
        %689 = vmatprep.subr.mxu0 %v631
        %690 = vmatpush1.msra.mxu0 %v630
        %691 = vmatprep.subr.mxu0 %v638
        %692 = vmatpush1.msra.mxu0 %v637
        %693 = vmatprep.subr.mxu0 0.0
        %694 = vmatpush1.msra.mxu0 0.0
        %695 = vmatprep.subr.mxu0 0.0
        %696 = vmatpush1.msra.mxu0 0.0
        %697 = vmatprep.subr.mxu0 0.0
        %698 = vmatpush1.msra.mxu0 0.0
        %699 = vmatprep.subr.mxu0 0.0
        %700 = vmatpush1.msra.mxu0 0.0
        %701 = vmatprep.subr.mxu0 0.0
        %702 = vmatpush1.msra.mxu0 0.0
        %703 = vmatprep.subr.mxu0 0.0
        %704 = vmatpush1.msra.mxu0 0.0
        %705 = vmatprep.subr.mxu0 0.0
        %706 = vmatpush1.msra.mxu0 0.0
        %707 = vmatprep.subr.mxu0 0.0
        %708 = vmatpush1.msra.mxu0 0.0
        %709 = vmatprep.subr.mxu0 0.0
        %710 = vmatpush1.msra.mxu0 0.0
        %711 = vmatprep.subr.mxu0 0.0
        %712 = vmatpush1.msra.mxu0 0.0
        %713 = vmatprep.subr.mxu0 0.0
        %714 = vmatpush1.msra.mxu0 0.0
        %715 = vmatprep.subr.mxu0 0.0
        %716 = vmatpush1.msra.mxu0 0.0
        %717 = vmatprep.subr.mxu0 0.0
        %718 = vmatpush1.msra.mxu0 0.0
        %719 = vmatprep.subr.mxu0 0.0
        %720 = vmatpush1.msra.mxu0 0.0
        %721 = vmatprep.subr.mxu0 0.0
        %722 = vmatpush1.msra.mxu0 0.0
        %723 = vmatprep.subr.mxu0 0.0
        %724 = vmatpush1.msra.mxu0 0.0
        %725 = vmatprep.subr.mxu0 0.0
        %726 = vmatpush1.msra.mxu0 0.0
        %727 = vmatprep.subr.mxu0 0.0
        %728 = vmatpush1.msra.mxu0 0.0
        %729 = vmatprep.subr.mxu0 0.0
        %730 = vmatpush1.msra.mxu0 0.0
        %731 = vmatprep.subr.mxu0 0.0
        %732 = vmatpush1.msra.mxu0 0.0
        %733 = vmatprep.subr.mxu0 0.0
        %734 = vmatpush1.msra.mxu0 0.0
        %735 = vmatprep.subr.mxu0 0.0
        %736 = vmatpush1.msra.mxu0 0.0
        %737 = vmatprep.subr.mxu0 0.0
        %738 = vmatpush1.msra.mxu0 0.0
        %739 = vmatprep.subr.mxu0 0.0
        %740 = vmatpush1.msra.mxu0 0.0
        %741 = vmatprep.subr.mxu0 0.0
        %742 = vmatpush1.msra.mxu0 0.0
        %743 = vmatprep.subr.mxu0 0.0
        %744 = vmatpush1.msra.mxu0 0.0
        %745 = vmatprep.subr.mxu0 0.0
        %746 = vmatpush1.msra.mxu0 0.0
        %747 = vmatprep.mubr.f32.mxu0 0.0
        %748 = vmatmul.mubr.f32.gmra.mrb[0].mxu0 %v681
        %v749 = vpop.f32.mrb[0].mxu0
        %v750 = vadd.f32 0.0, %v749
        %v751 = vpop.f32.mrb[0].mxu0
        %v752 = vadd.f32 0.0, %v751
        %753 = vdwg.mxu0
        %754 = vmatprep.subr.mxu0 %v612
        %755 = vmatpush1.msra.mxu0 %v611
        %756 = vmatprep.subr.mxu0 %v619
        %757 = vmatpush1.msra.mxu0 %v618
        %758 = vmatprep.subr.mxu0 %v626
        %759 = vmatpush1.msra.mxu0 %v625
        %760 = vmatprep.subr.mxu0 %v633
        %761 = vmatpush1.msra.mxu0 %v632
        %762 = vmatprep.subr.mxu0 %v640
        %763 = vmatpush1.msra.mxu0 %v639
        %764 = vmatprep.subr.mxu0 0.0
        %765 = vmatpush1.msra.mxu0 0.0
        %766 = vmatprep.subr.mxu0 0.0
        %767 = vmatpush1.msra.mxu0 0.0
        %768 = vmatprep.subr.mxu0 0.0
        %769 = vmatpush1.msra.mxu0 0.0
        %770 = vmatprep.subr.mxu0 0.0
        %771 = vmatpush1.msra.mxu0 0.0
        %772 = vmatprep.subr.mxu0 0.0
        %773 = vmatpush1.msra.mxu0 0.0
        %774 = vmatprep.subr.mxu0 0.0
        %775 = vmatpush1.msra.mxu0 0.0
        %776 = vmatprep.subr.mxu0 0.0
        %777 = vmatpush1.msra.mxu0 0.0
        %778 = vmatprep.subr.mxu0 0.0
        %779 = vmatpush1.msra.mxu0 0.0
        %780 = vmatprep.subr.mxu0 0.0
        %781 = vmatpush1.msra.mxu0 0.0
        %782 = vmatprep.subr.mxu0 0.0
        %783 = vmatpush1.msra.mxu0 0.0
        %784 = vmatprep.subr.mxu0 0.0
        %785 = vmatpush1.msra.mxu0 0.0
        %786 = vmatprep.subr.mxu0 0.0
        %787 = vmatpush1.msra.mxu0 0.0
        %788 = vmatprep.subr.mxu0 0.0
        %789 = vmatpush1.msra.mxu0 0.0
        %790 = vmatprep.subr.mxu0 0.0
        %791 = vmatpush1.msra.mxu0 0.0
        %792 = vmatprep.subr.mxu0 0.0
        %793 = vmatpush1.msra.mxu0 0.0
        %794 = vmatprep.subr.mxu0 0.0
        %795 = vmatpush1.msra.mxu0 0.0
        %796 = vmatprep.subr.mxu0 0.0
        %797 = vmatpush1.msra.mxu0 0.0
        %798 = vmatprep.subr.mxu0 0.0
        %799 = vmatpush1.msra.mxu0 0.0
        %800 = vmatprep.subr.mxu0 0.0
        %801 = vmatpush1.msra.mxu0 0.0
        %802 = vmatprep.subr.mxu0 0.0
        %803 = vmatpush1.msra.mxu0 0.0
        %804 = vmatprep.subr.mxu0 0.0
        %805 = vmatpush1.msra.mxu0 0.0
        %806 = vmatprep.subr.mxu0 0.0
        %807 = vmatpush1.msra.mxu0 0.0
        %808 = vmatprep.subr.mxu0 0.0
        %809 = vmatpush1.msra.mxu0 0.0
        %810 = vmatprep.subr.mxu0 0.0
        %811 = vmatpush1.msra.mxu0 0.0
        %812 = vmatprep.subr.mxu0 0.0
        %813 = vmatpush1.msra.mxu0 0.0
        %814 = vmatprep.subr.mxu0 0.0
        %815 = vmatpush1.msra.mxu0 0.0
        %816 = vmatprep.subr.mxu0 0.0
        %817 = vmatpush1.msra.mxu0 0.0
        %818 = vmatprep.mubr.f32.mxu0 0.0
        %819 = vmatmul.mubr.f32.gmra.mrb[0].mxu0 %v681
        %v820 = vpop.f32.mrb[0].mxu0
        %v821 = vadd.f32 0.0, %v820
        %v822 = vpop.f32.mrb[0].mxu0
        %v823 = vadd.f32 0.0, %v822
        %824 = vdwg.mxu0
        %825 = vmatprep.subr.mxu0 %v614
        %826 = vmatpush1.msra.mxu0 %v613
        %827 = vmatprep.subr.mxu0 %v621
        %828 = vmatpush1.msra.mxu0 %v620
        %829 = vmatprep.subr.mxu0 %v628
        %830 = vmatpush1.msra.mxu0 %v627
        %831 = vmatprep.subr.mxu0 %v635
        %832 = vmatpush1.msra.mxu0 %v634
        %833 = vmatprep.subr.mxu0 %v642
        %834 = vmatpush1.msra.mxu0 %v641
        %835 = vmatprep.subr.mxu0 0.0
        %836 = vmatpush1.msra.mxu0 0.0
        %837 = vmatprep.subr.mxu0 0.0
        %838 = vmatpush1.msra.mxu0 0.0
        %839 = vmatprep.subr.mxu0 0.0
        %840 = vmatpush1.msra.mxu0 0.0
        %841 = vmatprep.subr.mxu0 0.0
        %842 = vmatpush1.msra.mxu0 0.0
        %843 = vmatprep.subr.mxu0 0.0
        %844 = vmatpush1.msra.mxu0 0.0
        %845 = vmatprep.subr.mxu0 0.0
        %846 = vmatpush1.msra.mxu0 0.0
        %847 = vmatprep.subr.mxu0 0.0
        %848 = vmatpush1.msra.mxu0 0.0
        %849 = vmatprep.subr.mxu0 0.0
        %850 = vmatpush1.msra.mxu0 0.0
        %851 = vmatprep.subr.mxu0 0.0
        %852 = vmatpush1.msra.mxu0 0.0
        %853 = vmatprep.subr.mxu0 0.0
        %854 = vmatpush1.msra.mxu0 0.0
        %855 = vmatprep.subr.mxu0 0.0
        %856 = vmatpush1.msra.mxu0 0.0
        %857 = vmatprep.subr.mxu0 0.0
        %858 = vmatpush1.msra.mxu0 0.0
        %859 = vmatprep.subr.mxu0 0.0
        %860 = vmatpush1.msra.mxu0 0.0
        %861 = vmatprep.subr.mxu0 0.0
        %862 = vmatpush1.msra.mxu0 0.0
        %863 = vmatprep.subr.mxu0 0.0
        %864 = vmatpush1.msra.mxu0 0.0
        %865 = vmatprep.subr.mxu0 0.0
        %866 = vmatpush1.msra.mxu0 0.0
        %867 = vmatprep.subr.mxu0 0.0
        %868 = vmatpush1.msra.mxu0 0.0
        %869 = vmatprep.subr.mxu0 0.0
        %870 = vmatpush1.msra.mxu0 0.0
        %871 = vmatprep.subr.mxu0 0.0
        %872 = vmatpush1.msra.mxu0 0.0
        %873 = vmatprep.subr.mxu0 0.0
        %874 = vmatpush1.msra.mxu0 0.0
        %875 = vmatprep.subr.mxu0 0.0
        %876 = vmatpush1.msra.mxu0 0.0
        %877 = vmatprep.subr.mxu0 0.0
        %878 = vmatpush1.msra.mxu0 0.0
        %879 = vmatprep.subr.mxu0 0.0
        %880 = vmatpush1.msra.mxu0 0.0
        %881 = vmatprep.subr.mxu0 0.0
        %882 = vmatpush1.msra.mxu0 0.0
        %883 = vmatprep.subr.mxu0 0.0
        %884 = vmatpush1.msra.mxu0 0.0
        %885 = vmatprep.subr.mxu0 0.0
        %886 = vmatpush1.msra.mxu0 0.0
        %887 = vmatprep.subr.mxu0 0.0
        %888 = vmatpush1.msra.mxu0 0.0
        %889 = vmatprep.mubr.f32.mxu0 0.0
        %890 = vmatmul.mubr.f32.gmra.mrb[0].mxu0 %v681
        %v891 = vpop.f32.mrb[0].mxu0
        %v892 = vadd.f32 0.0, %v891
        %v893 = vpop.f32.mrb[0].mxu0
        %v894 = vadd.f32 0.0, %v893
        %895 = vdwg.mxu0
        %896 = vmatprep.subr.mxu0 0.0
        %897 = vmatpush1.msra.mxu0 %v615
        %898 = vmatprep.subr.mxu0 0.0
        %899 = vmatpush1.msra.mxu0 %v622
        %900 = vmatprep.subr.mxu0 0.0
        %901 = vmatpush1.msra.mxu0 %v629
        %902 = vmatprep.subr.mxu0 0.0
        %903 = vmatpush1.msra.mxu0 %v636
        %904 = vmatprep.subr.mxu0 0.0
        %905 = vmatpush1.msra.mxu0 %v643
        %906 = vmatprep.subr.mxu0 0.0
        %907 = vmatpush1.msra.mxu0 0.0
        %908 = vmatprep.subr.mxu0 0.0
        %909 = vmatpush1.msra.mxu0 0.0
        %910 = vmatprep.subr.mxu0 0.0
        %911 = vmatpush1.msra.mxu0 0.0
        %912 = vmatprep.subr.mxu0 0.0
        %913 = vmatpush1.msra.mxu0 0.0
        %914 = vmatprep.subr.mxu0 0.0
        %915 = vmatpush1.msra.mxu0 0.0
        %916 = vmatprep.subr.mxu0 0.0
        %917 = vmatpush1.msra.mxu0 0.0
        %918 = vmatprep.subr.mxu0 0.0
        %919 = vmatpush1.msra.mxu0 0.0
        %920 = vmatprep.subr.mxu0 0.0
        %921 = vmatpush1.msra.mxu0 0.0
        %922 = vmatprep.subr.mxu0 0.0
        %923 = vmatpush1.msra.mxu0 0.0
        %924 = vmatprep.subr.mxu0 0.0
        %925 = vmatpush1.msra.mxu0 0.0
        %926 = vmatprep.subr.mxu0 0.0
        %927 = vmatpush1.msra.mxu0 0.0
        %928 = vmatprep.subr.mxu0 0.0
        %929 = vmatpush1.msra.mxu0 0.0
        %930 = vmatprep.subr.mxu0 0.0
        %931 = vmatpush1.msra.mxu0 0.0
        %932 = vmatprep.subr.mxu0 0.0
        %933 = vmatpush1.msra.mxu0 0.0
        %934 = vmatprep.subr.mxu0 0.0
        %935 = vmatpush1.msra.mxu0 0.0
        %936 = vmatprep.subr.mxu0 0.0
        %937 = vmatpush1.msra.mxu0 0.0
        %938 = vmatprep.subr.mxu0 0.0
        %939 = vmatpush1.msra.mxu0 0.0
        %940 = vmatprep.subr.mxu0 0.0
        %941 = vmatpush1.msra.mxu0 0.0
        %942 = vmatprep.subr.mxu0 0.0
        %943 = vmatpush1.msra.mxu0 0.0
        %944 = vmatprep.subr.mxu0 0.0
        %945 = vmatpush1.msra.mxu0 0.0
        %946 = vmatprep.subr.mxu0 0.0
        %947 = vmatpush1.msra.mxu0 0.0
        %948 = vmatprep.subr.mxu0 0.0
        %949 = vmatpush1.msra.mxu0 0.0
        %950 = vmatprep.subr.mxu0 0.0
        %951 = vmatpush1.msra.mxu0 0.0
        %952 = vmatprep.subr.mxu0 0.0
        %953 = vmatpush1.msra.mxu0 0.0
        %954 = vmatprep.subr.mxu0 0.0
        %955 = vmatpush1.msra.mxu0 0.0
        %956 = vmatprep.subr.mxu0 0.0
        %957 = vmatpush1.msra.mxu0 0.0
        %958 = vmatprep.subr.mxu0 0.0
        %959 = vmatpush1.msra.mxu0 0.0
        %960 = vmatprep.mubr.f32.mxu0 0.0
        %961 = vmatmul.mubr.f32.gmra.mrb[0].mxu0 %v681
        %v962 = vpop.f32.mrb[0].mxu0
        %v963 = vadd.f32 0.0, %v962
        %v964 = vpop.f32.mrb[0].mxu0
        %965 = vdwg.mxu0
        %v967 = vsel %vm679, %v525, 0
        %969 = vmatprep.subr.mxu0 %v385
        %970 = vmatpush1.msra.mxu0 %v384
        %971 = vmatprep.subr.mxu0 %v419
        %972 = vmatpush1.msra.mxu0 %v418
        %973 = vmatprep.subr.mxu0 %v450
        %974 = vmatpush1.msra.mxu0 %v449
        %975 = vmatprep.subr.mxu0 %v481
        %976 = vmatpush1.msra.mxu0 %v480
        %977 = vmatprep.subr.mxu0 %v512
        %978 = vmatpush1.msra.mxu0 %v511
        %979 = vmatprep.subr.mxu0 0.0
        %980 = vmatpush1.msra.mxu0 0.0
        %981 = vmatprep.subr.mxu0 0.0
        %982 = vmatpush1.msra.mxu0 0.0
        %983 = vmatprep.subr.mxu0 0.0
        %984 = vmatpush1.msra.mxu0 0.0
        %985 = vmatprep.subr.mxu0 0.0
        %986 = vmatpush1.msra.mxu0 0.0
        %987 = vmatprep.subr.mxu0 0.0
        %988 = vmatpush1.msra.mxu0 0.0
        %989 = vmatprep.subr.mxu0 0.0
        %990 = vmatpush1.msra.mxu0 0.0
        %991 = vmatprep.subr.mxu0 0.0
        %992 = vmatpush1.msra.mxu0 0.0
        %993 = vmatprep.subr.mxu0 0.0
        %994 = vmatpush1.msra.mxu0 0.0
        %995 = vmatprep.subr.mxu0 0.0
        %996 = vmatpush1.msra.mxu0 0.0
        %997 = vmatprep.subr.mxu0 0.0
        %998 = vmatpush1.msra.mxu0 0.0
        %999 = vmatprep.subr.mxu0 0.0
        %1000 = vmatpush1.msra.mxu0 0.0
        %1001 = vmatprep.subr.mxu0 0.0
        %1002 = vmatpush1.msra.mxu0 0.0
        %1003 = vmatprep.subr.mxu0 0.0
        %1004 = vmatpush1.msra.mxu0 0.0
        %1005 = vmatprep.subr.mxu0 0.0
        %1006 = vmatpush1.msra.mxu0 0.0
        %1007 = vmatprep.subr.mxu0 0.0
        %1008 = vmatpush1.msra.mxu0 0.0
        %1009 = vmatprep.subr.mxu0 0.0
        %1010 = vmatpush1.msra.mxu0 0.0
        %1011 = vmatprep.subr.mxu0 0.0
        %1012 = vmatpush1.msra.mxu0 0.0
        %1013 = vmatprep.subr.mxu0 0.0
        %1014 = vmatpush1.msra.mxu0 0.0
        %1015 = vmatprep.subr.mxu0 0.0
        %1016 = vmatpush1.msra.mxu0 0.0
        %1017 = vmatprep.subr.mxu0 0.0
        %1018 = vmatpush1.msra.mxu0 0.0
        %1019 = vmatprep.subr.mxu0 0.0
        %1020 = vmatpush1.msra.mxu0 0.0
        %1021 = vmatprep.subr.mxu0 0.0
        %1022 = vmatpush1.msra.mxu0 0.0
        %1023 = vmatprep.subr.mxu0 0.0
        %1024 = vmatpush1.msra.mxu0 0.0
        %1025 = vmatprep.subr.mxu0 0.0
        %1026 = vmatpush1.msra.mxu0 0.0
        %1027 = vmatprep.subr.mxu0 0.0
        %1028 = vmatpush1.msra.mxu0 0.0
        %1029 = vmatprep.subr.mxu0 0.0
        %1030 = vmatpush1.msra.mxu0 0.0
        %1031 = vmatprep.subr.mxu0 0.0
        %1032 = vmatpush1.msra.mxu0 0.0
        %1033 = vmatprep.mubr.f32.mxu0 0.0
        %1034 = vmatmul.mubr.f32.gmra.mrb[0].mxu0 %v967
        %v1035 = vpop.f32.mrb[0].mxu0
        %v1036 = vadd.f32 %v750, %v1035
        %v1037 = vpop.f32.mrb[0].mxu0
        %v1038 = vadd.f32 %v752, %v1037
        %1039 = vdwg.mxu0
        %1040 = vmatprep.subr.mxu0 %v387
        %1041 = vmatpush1.msra.mxu0 %v386
        %1042 = vmatprep.subr.mxu0 %v421
        %1043 = vmatpush1.msra.mxu0 %v420
        %1044 = vmatprep.subr.mxu0 %v452
        %1045 = vmatpush1.msra.mxu0 %v451
        %1046 = vmatprep.subr.mxu0 %v483
        %1047 = vmatpush1.msra.mxu0 %v482
        %1048 = vmatprep.subr.mxu0 %v514
        %1049 = vmatpush1.msra.mxu0 %v513
        %1050 = vmatprep.subr.mxu0 0.0
        %1051 = vmatpush1.msra.mxu0 0.0
        %1052 = vmatprep.subr.mxu0 0.0
        %1053 = vmatpush1.msra.mxu0 0.0
        %1054 = vmatprep.subr.mxu0 0.0
        %1055 = vmatpush1.msra.mxu0 0.0
        %1056 = vmatprep.subr.mxu0 0.0
        %1057 = vmatpush1.msra.mxu0 0.0
        %1058 = vmatprep.subr.mxu0 0.0
        %1059 = vmatpush1.msra.mxu0 0.0
        %1060 = vmatprep.subr.mxu0 0.0
        %1061 = vmatpush1.msra.mxu0 0.0
        %1062 = vmatprep.subr.mxu0 0.0
        %1063 = vmatpush1.msra.mxu0 0.0
        %1064 = vmatprep.subr.mxu0 0.0
        %1065 = vmatpush1.msra.mxu0 0.0
        %1066 = vmatprep.subr.mxu0 0.0
        %1067 = vmatpush1.msra.mxu0 0.0
        %1068 = vmatprep.subr.mxu0 0.0
        %1069 = vmatpush1.msra.mxu0 0.0
        %1070 = vmatprep.subr.mxu0 0.0
        %1071 = vmatpush1.msra.mxu0 0.0
        %1072 = vmatprep.subr.mxu0 0.0
        %1073 = vmatpush1.msra.mxu0 0.0
        %1074 = vmatprep.subr.mxu0 0.0
        %1075 = vmatpush1.msra.mxu0 0.0
        %1076 = vmatprep.subr.mxu0 0.0
        %1077 = vmatpush1.msra.mxu0 0.0
        %1078 = vmatprep.subr.mxu0 0.0
        %1079 = vmatpush1.msra.mxu0 0.0
        %1080 = vmatprep.subr.mxu0 0.0
        %1081 = vmatpush1.msra.mxu0 0.0
        %1082 = vmatprep.subr.mxu0 0.0
        %1083 = vmatpush1.msra.mxu0 0.0
        %1084 = vmatprep.subr.mxu0 0.0
        %1085 = vmatpush1.msra.mxu0 0.0
        %1086 = vmatprep.subr.mxu0 0.0
        %1087 = vmatpush1.msra.mxu0 0.0
        %1088 = vmatprep.subr.mxu0 0.0
        %1089 = vmatpush1.msra.mxu0 0.0
        %1090 = vmatprep.subr.mxu0 0.0
        %1091 = vmatpush1.msra.mxu0 0.0
        %1092 = vmatprep.subr.mxu0 0.0
        %1093 = vmatpush1.msra.mxu0 0.0
        %1094 = vmatprep.subr.mxu0 0.0
        %1095 = vmatpush1.msra.mxu0 0.0
        %1096 = vmatprep.subr.mxu0 0.0
        %1097 = vmatpush1.msra.mxu0 0.0
        %1098 = vmatprep.subr.mxu0 0.0
        %1099 = vmatpush1.msra.mxu0 0.0
        %1100 = vmatprep.subr.mxu0 0.0
        %1101 = vmatpush1.msra.mxu0 0.0
        %1102 = vmatprep.subr.mxu0 0.0
        %1103 = vmatpush1.msra.mxu0 0.0
        %1104 = vmatprep.mubr.f32.mxu0 0.0
        %1105 = vmatmul.mubr.f32.gmra.mrb[0].mxu0 %v967
        %v1106 = vpop.f32.mrb[0].mxu0
        %v1107 = vadd.f32 %v821, %v1106
        %v1108 = vpop.f32.mrb[0].mxu0
        %v1109 = vadd.f32 %v823, %v1108
        %1110 = vdwg.mxu0
        %1111 = vmatprep.subr.mxu0 %v389
        %1112 = vmatpush1.msra.mxu0 %v388
        %1113 = vmatprep.subr.mxu0 %v423
        %1114 = vmatpush1.msra.mxu0 %v422
        %1115 = vmatprep.subr.mxu0 %v454
        %1116 = vmatpush1.msra.mxu0 %v453
        %1117 = vmatprep.subr.mxu0 %v485
        %1118 = vmatpush1.msra.mxu0 %v484
        %1119 = vmatprep.subr.mxu0 %v516
        %1120 = vmatpush1.msra.mxu0 %v515
        %1121 = vmatprep.subr.mxu0 0.0
        %1122 = vmatpush1.msra.mxu0 0.0
        %1123 = vmatprep.subr.mxu0 0.0
        %1124 = vmatpush1.msra.mxu0 0.0
        %1125 = vmatprep.subr.mxu0 0.0
        %1126 = vmatpush1.msra.mxu0 0.0
        %1127 = vmatprep.subr.mxu0 0.0
        %1128 = vmatpush1.msra.mxu0 0.0
        %1129 = vmatprep.subr.mxu0 0.0
        %1130 = vmatpush1.msra.mxu0 0.0
        %1131 = vmatprep.subr.mxu0 0.0
        %1132 = vmatpush1.msra.mxu0 0.0
        %1133 = vmatprep.subr.mxu0 0.0
        %1134 = vmatpush1.msra.mxu0 0.0
        %1135 = vmatprep.subr.mxu0 0.0
        %1136 = vmatpush1.msra.mxu0 0.0
        %1137 = vmatprep.subr.mxu0 0.0
        %1138 = vmatpush1.msra.mxu0 0.0
        %1139 = vmatprep.subr.mxu0 0.0
        %1140 = vmatpush1.msra.mxu0 0.0
        %1141 = vmatprep.subr.mxu0 0.0
        %1142 = vmatpush1.msra.mxu0 0.0
        %1143 = vmatprep.subr.mxu0 0.0
        %1144 = vmatpush1.msra.mxu0 0.0
        %1145 = vmatprep.subr.mxu0 0.0
        %1146 = vmatpush1.msra.mxu0 0.0
        %1147 = vmatprep.subr.mxu0 0.0
        %1148 = vmatpush1.msra.mxu0 0.0
        %1149 = vmatprep.subr.mxu0 0.0
        %1150 = vmatpush1.msra.mxu0 0.0
        %1151 = vmatprep.subr.mxu0 0.0
        %1152 = vmatpush1.msra.mxu0 0.0
        %1153 = vmatprep.subr.mxu0 0.0
        %1154 = vmatpush1.msra.mxu0 0.0
        %1155 = vmatprep.subr.mxu0 0.0
        %1156 = vmatpush1.msra.mxu0 0.0
        %1157 = vmatprep.subr.mxu0 0.0
        %1158 = vmatpush1.msra.mxu0 0.0
        %1159 = vmatprep.subr.mxu0 0.0
        %1160 = vmatpush1.msra.mxu0 0.0
        %1161 = vmatprep.subr.mxu0 0.0
        %1162 = vmatpush1.msra.mxu0 0.0
        %1163 = vmatprep.subr.mxu0 0.0
        %1164 = vmatpush1.msra.mxu0 0.0
        %1165 = vmatprep.subr.mxu0 0.0
        %1166 = vmatpush1.msra.mxu0 0.0
        %1167 = vmatprep.subr.mxu0 0.0
        %1168 = vmatpush1.msra.mxu0 0.0
        %1169 = vmatprep.subr.mxu0 0.0
        %1170 = vmatpush1.msra.mxu0 0.0
        %1171 = vmatprep.subr.mxu0 0.0
        %1172 = vmatpush1.msra.mxu0 0.0
        %1173 = vmatprep.subr.mxu0 0.0
        %1174 = vmatpush1.msra.mxu0 0.0
        %1175 = vmatprep.mubr.f32.mxu0 0.0
        %1176 = vmatmul.mubr.f32.gmra.mrb[0].mxu0 %v967
        %v1177 = vpop.f32.mrb[0].mxu0
        %v1178 = vadd.f32 %v892, %v1177
        %v1179 = vpop.f32.mrb[0].mxu0
        %v1180 = vadd.f32 %v894, %v1179
        %1181 = vdwg.mxu0
        %1182 = vmatprep.subr.mxu0 0.0
        %1183 = vmatpush1.msra.mxu0 %v390
        %1184 = vmatprep.subr.mxu0 0.0
        %1185 = vmatpush1.msra.mxu0 %v424
        %1186 = vmatprep.subr.mxu0 0.0
        %1187 = vmatpush1.msra.mxu0 %v455
        %1188 = vmatprep.subr.mxu0 0.0
        %1189 = vmatpush1.msra.mxu0 %v486
        %1190 = vmatprep.subr.mxu0 0.0
        %1191 = vmatpush1.msra.mxu0 %v517
        %1192 = vmatprep.subr.mxu0 0.0
        %1193 = vmatpush1.msra.mxu0 0.0
        %1194 = vmatprep.subr.mxu0 0.0
        %1195 = vmatpush1.msra.mxu0 0.0
        %1196 = vmatprep.subr.mxu0 0.0
        %1197 = vmatpush1.msra.mxu0 0.0
        %1198 = vmatprep.subr.mxu0 0.0
        %1199 = vmatpush1.msra.mxu0 0.0
        %1200 = vmatprep.subr.mxu0 0.0
        %1201 = vmatpush1.msra.mxu0 0.0
        %1202 = vmatprep.subr.mxu0 0.0
        %1203 = vmatpush1.msra.mxu0 0.0
        %1204 = vmatprep.subr.mxu0 0.0
        %1205 = vmatpush1.msra.mxu0 0.0
        %1206 = vmatprep.subr.mxu0 0.0
        %1207 = vmatpush1.msra.mxu0 0.0
        %1208 = vmatprep.subr.mxu0 0.0
        %1209 = vmatpush1.msra.mxu0 0.0
        %1210 = vmatprep.subr.mxu0 0.0
        %1211 = vmatpush1.msra.mxu0 0.0
        %1212 = vmatprep.subr.mxu0 0.0
        %1213 = vmatpush1.msra.mxu0 0.0
        %1214 = vmatprep.subr.mxu0 0.0
        %1215 = vmatpush1.msra.mxu0 0.0
        %1216 = vmatprep.subr.mxu0 0.0
        %1217 = vmatpush1.msra.mxu0 0.0
        %1218 = vmatprep.subr.mxu0 0.0
        %1219 = vmatpush1.msra.mxu0 0.0
        %1220 = vmatprep.subr.mxu0 0.0
        %1221 = vmatpush1.msra.mxu0 0.0
        %1222 = vmatprep.subr.mxu0 0.0
        %1223 = vmatpush1.msra.mxu0 0.0
        %1224 = vmatprep.subr.mxu0 0.0
        %1225 = vmatpush1.msra.mxu0 0.0
        %1226 = vmatprep.subr.mxu0 0.0
        %1227 = vmatpush1.msra.mxu0 0.0
        %1228 = vmatprep.subr.mxu0 0.0
        %1229 = vmatpush1.msra.mxu0 0.0
        %1230 = vmatprep.subr.mxu0 0.0
        %1231 = vmatpush1.msra.mxu0 0.0
        %1232 = vmatprep.subr.mxu0 0.0
        %1233 = vmatpush1.msra.mxu0 0.0
        %1234 = vmatprep.subr.mxu0 0.0
        %1235 = vmatpush1.msra.mxu0 0.0
        %1236 = vmatprep.subr.mxu0 0.0
        %1237 = vmatpush1.msra.mxu0 0.0
        %1238 = vmatprep.subr.mxu0 0.0
        %1239 = vmatpush1.msra.mxu0 0.0
        %1240 = vmatprep.subr.mxu0 0.0
        %1241 = vmatpush1.msra.mxu0 0.0
        %1242 = vmatprep.subr.mxu0 0.0
        %1243 = vmatpush1.msra.mxu0 0.0
        %1244 = vmatprep.subr.mxu0 0.0
        %1245 = vmatpush1.msra.mxu0 0.0
        %1246 = vmatprep.mubr.f32.mxu0 0.0
        %1247 = vmatmul.mubr.f32.gmra.mrb[0].mxu0 %v967
        %v1248 = vpop.f32.mrb[0].mxu0
        %v1249 = vadd.f32 %v963, %v1248
        %v1250 = vpop.f32.mrb[0].mxu0
        %1251 = vdwg.mxu0
        %s1252 = scalar_lea.vmem %s1, 16
        %v1253 = vld [vmem:[%s1252] sm:$0xff]
        %1254 = vrot.lane.b32.xlu0 %v384, 64
        %v1255 = vpop.permute.xlu0 %1254
        %1256 = vrot.lane.b32.xlu0 %v385, 64
        %v1257 = vpop.permute.xlu0 %1256
        %1258 = vrot.lane.b32.xlu0 %v386, 64
        %v1259 = vpop.permute.xlu0 %1258
        %1260 = vrot.lane.b32.xlu0 %v387, 64
        %v1261 = vpop.permute.xlu0 %1260
        %1262 = vrot.lane.b32.xlu0 %v388, 64
        %v1263 = vpop.permute.xlu0 %1262
        %1264 = vrot.lane.b32.xlu0 %v389, 64
        %v1265 = vpop.permute.xlu0 %1264
        %1266 = vrot.lane.b32.xlu0 %v390, 64
        %v1267 = vpop.permute.xlu0 %1266
        %1268 = vrot.lane.b32.xlu0 %v391, 64
        %v1269 = vpop.permute.xlu0 %1268
        %1270 = vrot.lane.b32.xlu0 %v418, 64
        %v1271 = vpop.permute.xlu0 %1270
        %1272 = vrot.lane.b32.xlu0 %v419, 64
        %v1273 = vpop.permute.xlu0 %1272
        %1274 = vrot.lane.b32.xlu0 %v420, 64
        %v1275 = vpop.permute.xlu0 %1274
        %1276 = vrot.lane.b32.xlu0 %v421, 64
        %v1277 = vpop.permute.xlu0 %1276
        %1278 = vrot.lane.b32.xlu0 %v422, 64
        %v1279 = vpop.permute.xlu0 %1278
        %1280 = vrot.lane.b32.xlu0 %v423, 64
        %v1281 = vpop.permute.xlu0 %1280
        %1282 = vrot.lane.b32.xlu0 %v424, 64
        %v1283 = vpop.permute.xlu0 %1282
        %1284 = vrot.lane.b32.xlu0 %v416, 64
        %v1285 = vpop.permute.xlu0 %1284
        %1286 = vrot.lane.b32.xlu0 %v449, 64
        %v1287 = vpop.permute.xlu0 %1286
        %1288 = vrot.lane.b32.xlu0 %v450, 64
        %v1289 = vpop.permute.xlu0 %1288
        %1290 = vrot.lane.b32.xlu0 %v451, 64
        %v1291 = vpop.permute.xlu0 %1290
        %1292 = vrot.lane.b32.xlu0 %v452, 64
        %v1293 = vpop.permute.xlu0 %1292
        %1294 = vrot.lane.b32.xlu0 %v453, 64
        %v1295 = vpop.permute.xlu0 %1294
        %1296 = vrot.lane.b32.xlu0 %v454, 64
        %v1297 = vpop.permute.xlu0 %1296
        %1298 = vrot.lane.b32.xlu0 %v455, 64
        %v1299 = vpop.permute.xlu0 %1298
        %1300 = vrot.lane.b32.xlu0 %v447, 64
        %v1301 = vpop.permute.xlu0 %1300
        %1302 = vrot.lane.b32.xlu0 %v480, 64
        %v1303 = vpop.permute.xlu0 %1302
        %1304 = vrot.lane.b32.xlu0 %v481, 64
        %v1305 = vpop.permute.xlu0 %1304
        %1306 = vrot.lane.b32.xlu0 %v482, 64
        %v1307 = vpop.permute.xlu0 %1306
        %1308 = vrot.lane.b32.xlu0 %v483, 64
        %v1309 = vpop.permute.xlu0 %1308
        %1310 = vrot.lane.b32.xlu0 %v484, 64
        %v1311 = vpop.permute.xlu0 %1310
        %1312 = vrot.lane.b32.xlu0 %v485, 64
        %v1313 = vpop.permute.xlu0 %1312
        %1314 = vrot.lane.b32.xlu0 %v486, 64
        %v1315 = vpop.permute.xlu0 %1314
        %1316 = vrot.lane.b32.xlu0 %v478, 64
        %v1317 = vpop.permute.xlu0 %1316
        %1318 = vrot.lane.b32.xlu0 %v511, 64
        %v1319 = vpop.permute.xlu0 %1318
        %1320 = vrot.lane.b32.xlu0 %v512, 64
        %v1321 = vpop.permute.xlu0 %1320
        %1322 = vrot.lane.b32.xlu0 %v513, 64
        %v1323 = vpop.permute.xlu0 %1322
        %1324 = vrot.lane.b32.xlu0 %v514, 64
        %v1325 = vpop.permute.xlu0 %1324
        %1326 = vrot.lane.b32.xlu0 %v515, 64
        %v1327 = vpop.permute.xlu0 %1326
        %1328 = vrot.lane.b32.xlu0 %v516, 64
        %v1329 = vpop.permute.xlu0 %1328
        %1330 = vrot.lane.b32.xlu0 %v517, 64
        %v1331 = vpop.permute.xlu0 %1330
        %1332 = vrot.lane.b32.xlu0 %v509, 64
        %v1333 = vpop.permute.xlu0 %1332
        %vm1334 = vcmask 523264
        %v1335 = vsel %vm1334, %v1255, %v1257
        %v1336 = vsel %vm1334, %v1257, %v1259
        %v1337 = vsel %vm1334, %v1259, %v1261
        %v1338 = vsel %vm1334, %v1261, %v1263
        %v1339 = vsel %vm1334, %v1263, %v1265
        %v1340 = vsel %vm1334, %v1265, %v1267
        %v1341 = vsel %vm1334, %v1267, %v1269
        %v1342 = vsel %vm1334, %v1271, %v1273
        %v1343 = vsel %vm1334, %v1273, %v1275
        %v1344 = vsel %vm1334, %v1275, %v1277
        %v1345 = vsel %vm1334, %v1277, %v1279
        %v1346 = vsel %vm1334, %v1279, %v1281
        %v1347 = vsel %vm1334, %v1281, %v1283
        %v1348 = vsel %vm1334, %v1283, %v1285
        %v1349 = vsel %vm1334, %v1287, %v1289
        %v1350 = vsel %vm1334, %v1289, %v1291
        %v1351 = vsel %vm1334, %v1291, %v1293
        %v1352 = vsel %vm1334, %v1293, %v1295
        %v1353 = vsel %vm1334, %v1295, %v1297
        %v1354 = vsel %vm1334, %v1297, %v1299
        %v1355 = vsel %vm1334, %v1299, %v1301
        %v1356 = vsel %vm1334, %v1303, %v1305
        %v1357 = vsel %vm1334, %v1305, %v1307
        %v1358 = vsel %vm1334, %v1307, %v1309
        %v1359 = vsel %vm1334, %v1309, %v1311
        %v1360 = vsel %vm1334, %v1311, %v1313
        %v1361 = vsel %vm1334, %v1313, %v1315
        %v1362 = vsel %vm1334, %v1315, %v1317
        %v1363 = vsel %vm1334, %v1319, %v1321
        %v1364 = vsel %vm1334, %v1321, %v1323
        %v1365 = vsel %vm1334, %v1323, %v1325
        %v1366 = vsel %vm1334, %v1325, %v1327
        %v1367 = vsel %vm1334, %v1327, %v1329
        %v1368 = vsel %vm1334, %v1329, %v1331
        %v1369 = vsel %vm1334, %v1331, %v1333
        %v1406 = vsel %vm679, %v1253, 0
        %1408 = vmatprep.subr.mxu0 %v1336
        %1409 = vmatpush1.msra.mxu0 %v1335
        %1410 = vmatprep.subr.mxu0 %v1343
        %1411 = vmatpush1.msra.mxu0 %v1342
        %1412 = vmatprep.subr.mxu0 %v1350
        %1413 = vmatpush1.msra.mxu0 %v1349
        %1414 = vmatprep.subr.mxu0 %v1357
        %1415 = vmatpush1.msra.mxu0 %v1356
        %1416 = vmatprep.subr.mxu0 %v1364
        %1417 = vmatpush1.msra.mxu0 %v1363
        %1418 = vmatprep.subr.mxu0 0.0
        %1419 = vmatpush1.msra.mxu0 0.0
        %1420 = vmatprep.subr.mxu0 0.0
        %1421 = vmatpush1.msra.mxu0 0.0
        %1422 = vmatprep.subr.mxu0 0.0
        %1423 = vmatpush1.msra.mxu0 0.0
        %1424 = vmatprep.subr.mxu0 0.0
        %1425 = vmatpush1.msra.mxu0 0.0
        %1426 = vmatprep.subr.mxu0 0.0
        %1427 = vmatpush1.msra.mxu0 0.0
        %1428 = vmatprep.subr.mxu0 0.0
        %1429 = vmatpush1.msra.mxu0 0.0
        %1430 = vmatprep.subr.mxu0 0.0
        %1431 = vmatpush1.msra.mxu0 0.0
        %1432 = vmatprep.subr.mxu0 0.0
        %1433 = vmatpush1.msra.mxu0 0.0
        %1434 = vmatprep.subr.mxu0 0.0
        %1435 = vmatpush1.msra.mxu0 0.0
        %1436 = vmatprep.subr.mxu0 0.0
        %1437 = vmatpush1.msra.mxu0 0.0
        %1438 = vmatprep.subr.mxu0 0.0
        %1439 = vmatpush1.msra.mxu0 0.0
        %1440 = vmatprep.subr.mxu0 0.0
        %1441 = vmatpush1.msra.mxu0 0.0
        %1442 = vmatprep.subr.mxu0 0.0
        %1443 = vmatpush1.msra.mxu0 0.0
        %1444 = vmatprep.subr.mxu0 0.0
        %1445 = vmatpush1.msra.mxu0 0.0
        %1446 = vmatprep.subr.mxu0 0.0
        %1447 = vmatpush1.msra.mxu0 0.0
        %1448 = vmatprep.subr.mxu0 0.0
        %1449 = vmatpush1.msra.mxu0 0.0
        %1450 = vmatprep.subr.mxu0 0.0
        %1451 = vmatpush1.msra.mxu0 0.0
        %1452 = vmatprep.subr.mxu0 0.0
        %1453 = vmatpush1.msra.mxu0 0.0
        %1454 = vmatprep.subr.mxu0 0.0
        %1455 = vmatpush1.msra.mxu0 0.0
        %1456 = vmatprep.subr.mxu0 0.0
        %1457 = vmatpush1.msra.mxu0 0.0
        %1458 = vmatprep.subr.mxu0 0.0
        %1459 = vmatpush1.msra.mxu0 0.0
        %1460 = vmatprep.subr.mxu0 0.0
        %1461 = vmatpush1.msra.mxu0 0.0
        %1462 = vmatprep.subr.mxu0 0.0
        %1463 = vmatpush1.msra.mxu0 0.0
        %1464 = vmatprep.subr.mxu0 0.0
        %1465 = vmatpush1.msra.mxu0 0.0
        %1466 = vmatprep.subr.mxu0 0.0
        %1467 = vmatpush1.msra.mxu0 0.0
        %1468 = vmatprep.subr.mxu0 0.0
        %1469 = vmatpush1.msra.mxu0 0.0
        %1470 = vmatprep.subr.mxu0 0.0
        %1471 = vmatpush1.msra.mxu0 0.0
        %1472 = vmatprep.mubr.f32.mxu0 0.0
        %1473 = vmatmul.mubr.f32.gmra.mrb[0].mxu0 %v1406
        %v1474 = vpop.f32.mrb[0].mxu0
        %v1475 = vadd.f32 0.0, %v1474
        %v1476 = vpop.f32.mrb[0].mxu0
        %v1477 = vadd.f32 0.0, %v1476
        %1478 = vdwg.mxu0
        %1479 = vmatprep.subr.mxu0 %v1338
        %1480 = vmatpush1.msra.mxu0 %v1337
        %1481 = vmatprep.subr.mxu0 %v1345
        %1482 = vmatpush1.msra.mxu0 %v1344
        %1483 = vmatprep.subr.mxu0 %v1352
        %1484 = vmatpush1.msra.mxu0 %v1351
        %1485 = vmatprep.subr.mxu0 %v1359
        %1486 = vmatpush1.msra.mxu0 %v1358
        %1487 = vmatprep.subr.mxu0 %v1366
        %1488 = vmatpush1.msra.mxu0 %v1365
        %1489 = vmatprep.subr.mxu0 0.0
        %1490 = vmatpush1.msra.mxu0 0.0
        %1491 = vmatprep.subr.mxu0 0.0
        %1492 = vmatpush1.msra.mxu0 0.0
        %1493 = vmatprep.subr.mxu0 0.0
        %1494 = vmatpush1.msra.mxu0 0.0
        %1495 = vmatprep.subr.mxu0 0.0
        %1496 = vmatpush1.msra.mxu0 0.0
        %1497 = vmatprep.subr.mxu0 0.0
        %1498 = vmatpush1.msra.mxu0 0.0
        %1499 = vmatprep.subr.mxu0 0.0
        %1500 = vmatpush1.msra.mxu0 0.0
        %1501 = vmatprep.subr.mxu0 0.0
        %1502 = vmatpush1.msra.mxu0 0.0
        %1503 = vmatprep.subr.mxu0 0.0
        %1504 = vmatpush1.msra.mxu0 0.0
        %1505 = vmatprep.subr.mxu0 0.0
        %1506 = vmatpush1.msra.mxu0 0.0
        %1507 = vmatprep.subr.mxu0 0.0
        %1508 = vmatpush1.msra.mxu0 0.0
        %1509 = vmatprep.subr.mxu0 0.0
        %1510 = vmatpush1.msra.mxu0 0.0
        %1511 = vmatprep.subr.mxu0 0.0
        %1512 = vmatpush1.msra.mxu0 0.0
        %1513 = vmatprep.subr.mxu0 0.0
        %1514 = vmatpush1.msra.mxu0 0.0
        %1515 = vmatprep.subr.mxu0 0.0
        %1516 = vmatpush1.msra.mxu0 0.0
        %1517 = vmatprep.subr.mxu0 0.0
        %1518 = vmatpush1.msra.mxu0 0.0
        %1519 = vmatprep.subr.mxu0 0.0
        %1520 = vmatpush1.msra.mxu0 0.0
        %1521 = vmatprep.subr.mxu0 0.0
        %1522 = vmatpush1.msra.mxu0 0.0
        %1523 = vmatprep.subr.mxu0 0.0
        %1524 = vmatpush1.msra.mxu0 0.0
        %1525 = vmatprep.subr.mxu0 0.0
        %1526 = vmatpush1.msra.mxu0 0.0
        %1527 = vmatprep.subr.mxu0 0.0
        %1528 = vmatpush1.msra.mxu0 0.0
        %1529 = vmatprep.subr.mxu0 0.0
        %1530 = vmatpush1.msra.mxu0 0.0
        %1531 = vmatprep.subr.mxu0 0.0
        %1532 = vmatpush1.msra.mxu0 0.0
        %1533 = vmatprep.subr.mxu0 0.0
        %1534 = vmatpush1.msra.mxu0 0.0
        %1535 = vmatprep.subr.mxu0 0.0
        %1536 = vmatpush1.msra.mxu0 0.0
        %1537 = vmatprep.subr.mxu0 0.0
        %1538 = vmatpush1.msra.mxu0 0.0
        %1539 = vmatprep.subr.mxu0 0.0
        %1540 = vmatpush1.msra.mxu0 0.0
        %1541 = vmatprep.subr.mxu0 0.0
        %1542 = vmatpush1.msra.mxu0 0.0
        %1543 = vmatprep.mubr.f32.mxu0 0.0
        %1544 = vmatmul.mubr.f32.gmra.mrb[0].mxu0 %v1406
        %v1545 = vpop.f32.mrb[0].mxu0
        %v1546 = vadd.f32 0.0, %v1545
        %v1547 = vpop.f32.mrb[0].mxu0
        %v1548 = vadd.f32 0.0, %v1547
        %1549 = vdwg.mxu0
        %1550 = vmatprep.subr.mxu0 %v1340
        %1551 = vmatpush1.msra.mxu0 %v1339
        %1552 = vmatprep.subr.mxu0 %v1347
        %1553 = vmatpush1.msra.mxu0 %v1346
        %1554 = vmatprep.subr.mxu0 %v1354
        %1555 = vmatpush1.msra.mxu0 %v1353
        %1556 = vmatprep.subr.mxu0 %v1361
        %1557 = vmatpush1.msra.mxu0 %v1360
        %1558 = vmatprep.subr.mxu0 %v1368
        %1559 = vmatpush1.msra.mxu0 %v1367
        %1560 = vmatprep.subr.mxu0 0.0
        %1561 = vmatpush1.msra.mxu0 0.0
        %1562 = vmatprep.subr.mxu0 0.0
        %1563 = vmatpush1.msra.mxu0 0.0
        %1564 = vmatprep.subr.mxu0 0.0
        %1565 = vmatpush1.msra.mxu0 0.0
        %1566 = vmatprep.subr.mxu0 0.0
        %1567 = vmatpush1.msra.mxu0 0.0
        %1568 = vmatprep.subr.mxu0 0.0
        %1569 = vmatpush1.msra.mxu0 0.0
        %1570 = vmatprep.subr.mxu0 0.0
        %1571 = vmatpush1.msra.mxu0 0.0
        %1572 = vmatprep.subr.mxu0 0.0
        %1573 = vmatpush1.msra.mxu0 0.0
        %1574 = vmatprep.subr.mxu0 0.0
        %1575 = vmatpush1.msra.mxu0 0.0
        %1576 = vmatprep.subr.mxu0 0.0
        %1577 = vmatpush1.msra.mxu0 0.0
        %1578 = vmatprep.subr.mxu0 0.0
        %1579 = vmatpush1.msra.mxu0 0.0
        %1580 = vmatprep.subr.mxu0 0.0
        %1581 = vmatpush1.msra.mxu0 0.0
        %1582 = vmatprep.subr.mxu0 0.0
        %1583 = vmatpush1.msra.mxu0 0.0
        %1584 = vmatprep.subr.mxu0 0.0
        %1585 = vmatpush1.msra.mxu0 0.0
        %1586 = vmatprep.subr.mxu0 0.0
        %1587 = vmatpush1.msra.mxu0 0.0
        %1588 = vmatprep.subr.mxu0 0.0
        %1589 = vmatpush1.msra.mxu0 0.0
        %1590 = vmatprep.subr.mxu0 0.0
        %1591 = vmatpush1.msra.mxu0 0.0
        %1592 = vmatprep.subr.mxu0 0.0
        %1593 = vmatpush1.msra.mxu0 0.0
        %1594 = vmatprep.subr.mxu0 0.0
        %1595 = vmatpush1.msra.mxu0 0.0
        %1596 = vmatprep.subr.mxu0 0.0
        %1597 = vmatpush1.msra.mxu0 0.0
        %1598 = vmatprep.subr.mxu0 0.0
        %1599 = vmatpush1.msra.mxu0 0.0
        %1600 = vmatprep.subr.mxu0 0.0
        %1601 = vmatpush1.msra.mxu0 0.0
        %1602 = vmatprep.subr.mxu0 0.0
        %1603 = vmatpush1.msra.mxu0 0.0
        %1604 = vmatprep.subr.mxu0 0.0
        %1605 = vmatpush1.msra.mxu0 0.0
        %1606 = vmatprep.subr.mxu0 0.0
        %1607 = vmatpush1.msra.mxu0 0.0
        %1608 = vmatprep.subr.mxu0 0.0
        %1609 = vmatpush1.msra.mxu0 0.0
        %1610 = vmatprep.subr.mxu0 0.0
        %1611 = vmatpush1.msra.mxu0 0.0
        %1612 = vmatprep.subr.mxu0 0.0
        %1613 = vmatpush1.msra.mxu0 0.0
        %1614 = vmatprep.mubr.f32.mxu0 0.0
        %1615 = vmatmul.mubr.f32.gmra.mrb[0].mxu0 %v1406
        %v1616 = vpop.f32.mrb[0].mxu0
        %v1617 = vadd.f32 0.0, %v1616
        %v1618 = vpop.f32.mrb[0].mxu0
        %v1619 = vadd.f32 0.0, %v1618
        %1620 = vdwg.mxu0
        %1621 = vmatprep.subr.mxu0 0.0
        %1622 = vmatpush1.msra.mxu0 %v1341
        %1623 = vmatprep.subr.mxu0 0.0
        %1624 = vmatpush1.msra.mxu0 %v1348
        %1625 = vmatprep.subr.mxu0 0.0
        %1626 = vmatpush1.msra.mxu0 %v1355
        %1627 = vmatprep.subr.mxu0 0.0
        %1628 = vmatpush1.msra.mxu0 %v1362
        %1629 = vmatprep.subr.mxu0 0.0
        %1630 = vmatpush1.msra.mxu0 %v1369
        %1631 = vmatprep.subr.mxu0 0.0
        %1632 = vmatpush1.msra.mxu0 0.0
        %1633 = vmatprep.subr.mxu0 0.0
        %1634 = vmatpush1.msra.mxu0 0.0
        %1635 = vmatprep.subr.mxu0 0.0
        %1636 = vmatpush1.msra.mxu0 0.0
        %1637 = vmatprep.subr.mxu0 0.0
        %1638 = vmatpush1.msra.mxu0 0.0
        %1639 = vmatprep.subr.mxu0 0.0
        %1640 = vmatpush1.msra.mxu0 0.0
        %1641 = vmatprep.subr.mxu0 0.0
        %1642 = vmatpush1.msra.mxu0 0.0
        %1643 = vmatprep.subr.mxu0 0.0
        %1644 = vmatpush1.msra.mxu0 0.0
        %1645 = vmatprep.subr.mxu0 0.0
        %1646 = vmatpush1.msra.mxu0 0.0
        %1647 = vmatprep.subr.mxu0 0.0
        %1648 = vmatpush1.msra.mxu0 0.0
        %1649 = vmatprep.subr.mxu0 0.0
        %1650 = vmatpush1.msra.mxu0 0.0
        %1651 = vmatprep.subr.mxu0 0.0
        %1652 = vmatpush1.msra.mxu0 0.0
        %1653 = vmatprep.subr.mxu0 0.0
        %1654 = vmatpush1.msra.mxu0 0.0
        %1655 = vmatprep.subr.mxu0 0.0
        %1656 = vmatpush1.msra.mxu0 0.0
        %1657 = vmatprep.subr.mxu0 0.0
        %1658 = vmatpush1.msra.mxu0 0.0
        %1659 = vmatprep.subr.mxu0 0.0
        %1660 = vmatpush1.msra.mxu0 0.0
        %1661 = vmatprep.subr.mxu0 0.0
        %1662 = vmatpush1.msra.mxu0 0.0
        %1663 = vmatprep.subr.mxu0 0.0
        %1664 = vmatpush1.msra.mxu0 0.0
        %1665 = vmatprep.subr.mxu0 0.0
        %1666 = vmatpush1.msra.mxu0 0.0
        %1667 = vmatprep.subr.mxu0 0.0
        %1668 = vmatpush1.msra.mxu0 0.0
        %1669 = vmatprep.subr.mxu0 0.0
        %1670 = vmatpush1.msra.mxu0 0.0
        %1671 = vmatprep.subr.mxu0 0.0
        %1672 = vmatpush1.msra.mxu0 0.0
        %1673 = vmatprep.subr.mxu0 0.0
        %1674 = vmatpush1.msra.mxu0 0.0
        %1675 = vmatprep.subr.mxu0 0.0
        %1676 = vmatpush1.msra.mxu0 0.0
        %1677 = vmatprep.subr.mxu0 0.0
        %1678 = vmatpush1.msra.mxu0 0.0
        %1679 = vmatprep.subr.mxu0 0.0
        %1680 = vmatpush1.msra.mxu0 0.0
        %1681 = vmatprep.subr.mxu0 0.0
        %1682 = vmatpush1.msra.mxu0 0.0
        %1683 = vmatprep.subr.mxu0 0.0
        %1684 = vmatpush1.msra.mxu0 0.0
        %1685 = vmatprep.mubr.f32.mxu0 0.0
        %1686 = vmatmul.mubr.f32.gmra.mrb[0].mxu0 %v1406
        %v1687 = vpop.f32.mrb[0].mxu0
        %v1688 = vadd.f32 0.0, %v1687
        %v1689 = vpop.f32.mrb[0].mxu0
        %1690 = vdwg.mxu0
        %v1691 = vadd.f32 %v1036, %v1475
        %v1692 = vadd.f32 %v1038, %v1477
        %v1693 = vadd.f32 %v1107, %v1546
        %v1694 = vadd.f32 %v1109, %v1548
        %v1695 = vadd.f32 %v1178, %v1617
        %v1696 = vadd.f32 %v1180, %v1619
        %v1697 = vadd.f32 %v1249, %v1688
        %s1698 = scalar_lea.vmem %s1, 24
        %v1699 = vld [vmem:[%s1698] sm:$0xff]
        %1700 = vrot.lane.b32.xlu0 %v384, 32
        %v1701 = vpop.permute.xlu0 %1700
        %1702 = vrot.lane.b32.xlu0 %v385, 32
        %v1703 = vpop.permute.xlu0 %1702
        %1704 = vrot.lane.b32.xlu0 %v386, 32
        %v1705 = vpop.permute.xlu0 %1704
        %1706 = vrot.lane.b32.xlu0 %v387, 32
        %v1707 = vpop.permute.xlu0 %1706
        %1708 = vrot.lane.b32.xlu0 %v388, 32
        %v1709 = vpop.permute.xlu0 %1708
        %1710 = vrot.lane.b32.xlu0 %v389, 32
        %v1711 = vpop.permute.xlu0 %1710
        %1712 = vrot.lane.b32.xlu0 %v390, 32
        %v1713 = vpop.permute.xlu0 %1712
        %1714 = vrot.lane.b32.xlu0 %v391, 32
        %v1715 = vpop.permute.xlu0 %1714
        %1716 = vrot.lane.b32.xlu0 %v418, 32
        %v1717 = vpop.permute.xlu0 %1716
        %1718 = vrot.lane.b32.xlu0 %v419, 32
        %v1719 = vpop.permute.xlu0 %1718
        %1720 = vrot.lane.b32.xlu0 %v420, 32
        %v1721 = vpop.permute.xlu0 %1720
        %1722 = vrot.lane.b32.xlu0 %v421, 32
        %v1723 = vpop.permute.xlu0 %1722
        %1724 = vrot.lane.b32.xlu0 %v422, 32
        %v1725 = vpop.permute.xlu0 %1724
        %1726 = vrot.lane.b32.xlu0 %v423, 32
        %v1727 = vpop.permute.xlu0 %1726
        %1728 = vrot.lane.b32.xlu0 %v424, 32
        %v1729 = vpop.permute.xlu0 %1728
        %1730 = vrot.lane.b32.xlu0 %v416, 32
        %v1731 = vpop.permute.xlu0 %1730
        %1732 = vrot.lane.b32.xlu0 %v449, 32
        %v1733 = vpop.permute.xlu0 %1732
        %1734 = vrot.lane.b32.xlu0 %v450, 32
        %v1735 = vpop.permute.xlu0 %1734
        %1736 = vrot.lane.b32.xlu0 %v451, 32
        %v1737 = vpop.permute.xlu0 %1736
        %1738 = vrot.lane.b32.xlu0 %v452, 32
        %v1739 = vpop.permute.xlu0 %1738
        %1740 = vrot.lane.b32.xlu0 %v453, 32
        %v1741 = vpop.permute.xlu0 %1740
        %1742 = vrot.lane.b32.xlu0 %v454, 32
        %v1743 = vpop.permute.xlu0 %1742
        %1744 = vrot.lane.b32.xlu0 %v455, 32
        %v1745 = vpop.permute.xlu0 %1744
        %1746 = vrot.lane.b32.xlu0 %v447, 32
        %v1747 = vpop.permute.xlu0 %1746
        %1748 = vrot.lane.b32.xlu0 %v480, 32
        %v1749 = vpop.permute.xlu0 %1748
        %1750 = vrot.lane.b32.xlu0 %v481, 32
        %v1751 = vpop.permute.xlu0 %1750
        %1752 = vrot.lane.b32.xlu0 %v482, 32
        %v1753 = vpop.permute.xlu0 %1752
        %1754 = vrot.lane.b32.xlu0 %v483, 32
        %v1755 = vpop.permute.xlu0 %1754
        %1756 = vrot.lane.b32.xlu0 %v484, 32
        %v1757 = vpop.permute.xlu0 %1756
        %1758 = vrot.lane.b32.xlu0 %v485, 32
        %v1759 = vpop.permute.xlu0 %1758
        %1760 = vrot.lane.b32.xlu0 %v486, 32
        %v1761 = vpop.permute.xlu0 %1760
        %1762 = vrot.lane.b32.xlu0 %v478, 32
        %v1763 = vpop.permute.xlu0 %1762
        %1764 = vrot.lane.b32.xlu0 %v511, 32
        %v1765 = vpop.permute.xlu0 %1764
        %1766 = vrot.lane.b32.xlu0 %v512, 32
        %v1767 = vpop.permute.xlu0 %1766
        %1768 = vrot.lane.b32.xlu0 %v513, 32
        %v1769 = vpop.permute.xlu0 %1768
        %1770 = vrot.lane.b32.xlu0 %v514, 32
        %v1771 = vpop.permute.xlu0 %1770
        %1772 = vrot.lane.b32.xlu0 %v515, 32
        %v1773 = vpop.permute.xlu0 %1772
        %1774 = vrot.lane.b32.xlu0 %v516, 32
        %v1775 = vpop.permute.xlu0 %1774
        %1776 = vrot.lane.b32.xlu0 %v517, 32
        %v1777 = vpop.permute.xlu0 %1776
        %1778 = vrot.lane.b32.xlu0 %v509, 32
        %v1779 = vpop.permute.xlu0 %1778
        %vm1780 = vcmask 261120
        %v1781 = vsel %vm1780, %v1701, %v1703
        %v1782 = vsel %vm1780, %v1703, %v1705
        %v1783 = vsel %vm1780, %v1705, %v1707
        %v1784 = vsel %vm1780, %v1707, %v1709
        %v1785 = vsel %vm1780, %v1709, %v1711
        %v1786 = vsel %vm1780, %v1711, %v1713
        %v1787 = vsel %vm1780, %v1713, %v1715
        %v1788 = vsel %vm1780, %v1717, %v1719
        %v1789 = vsel %vm1780, %v1719, %v1721
        %v1790 = vsel %vm1780, %v1721, %v1723
        %v1791 = vsel %vm1780, %v1723, %v1725
        %v1792 = vsel %vm1780, %v1725, %v1727
        %v1793 = vsel %vm1780, %v1727, %v1729
        %v1794 = vsel %vm1780, %v1729, %v1731
        %v1795 = vsel %vm1780, %v1733, %v1735
        %v1796 = vsel %vm1780, %v1735, %v1737
        %v1797 = vsel %vm1780, %v1737, %v1739
        %v1798 = vsel %vm1780, %v1739, %v1741
        %v1799 = vsel %vm1780, %v1741, %v1743
        %v1800 = vsel %vm1780, %v1743, %v1745
        %v1801 = vsel %vm1780, %v1745, %v1747
        %v1802 = vsel %vm1780, %v1749, %v1751
        %v1803 = vsel %vm1780, %v1751, %v1753
        %v1804 = vsel %vm1780, %v1753, %v1755
        %v1805 = vsel %vm1780, %v1755, %v1757
        %v1806 = vsel %vm1780, %v1757, %v1759
        %v1807 = vsel %vm1780, %v1759, %v1761
        %v1808 = vsel %vm1780, %v1761, %v1763
        %v1809 = vsel %vm1780, %v1765, %v1767
        %v1810 = vsel %vm1780, %v1767, %v1769
        %v1811 = vsel %vm1780, %v1769, %v1771
        %v1812 = vsel %vm1780, %v1771, %v1773
        %v1813 = vsel %vm1780, %v1773, %v1775
        %v1814 = vsel %vm1780, %v1775, %v1777
        %v1815 = vsel %vm1780, %v1777, %v1779
        %v1852 = vsel %vm679, %v1699, 0
        %1854 = vmatprep.subr.mxu0 %v1782
        %1855 = vmatpush1.msra.mxu0 %v1781
        %1856 = vmatprep.subr.mxu0 %v1789
        %1857 = vmatpush1.msra.mxu0 %v1788
        %1858 = vmatprep.subr.mxu0 %v1796
        %1859 = vmatpush1.msra.mxu0 %v1795
        %1860 = vmatprep.subr.mxu0 %v1803
        %1861 = vmatpush1.msra.mxu0 %v1802
        %1862 = vmatprep.subr.mxu0 %v1810
        %1863 = vmatpush1.msra.mxu0 %v1809
        %1864 = vmatprep.subr.mxu0 0.0
        %1865 = vmatpush1.msra.mxu0 0.0
        %1866 = vmatprep.subr.mxu0 0.0
        %1867 = vmatpush1.msra.mxu0 0.0
        %1868 = vmatprep.subr.mxu0 0.0
        %1869 = vmatpush1.msra.mxu0 0.0
        %1870 = vmatprep.subr.mxu0 0.0
        %1871 = vmatpush1.msra.mxu0 0.0
        %1872 = vmatprep.subr.mxu0 0.0
        %1873 = vmatpush1.msra.mxu0 0.0
        %1874 = vmatprep.subr.mxu0 0.0
        %1875 = vmatpush1.msra.mxu0 0.0
        %1876 = vmatprep.subr.mxu0 0.0
        %1877 = vmatpush1.msra.mxu0 0.0
        %1878 = vmatprep.subr.mxu0 0.0
        %1879 = vmatpush1.msra.mxu0 0.0
        %1880 = vmatprep.subr.mxu0 0.0
        %1881 = vmatpush1.msra.mxu0 0.0
        %1882 = vmatprep.subr.mxu0 0.0
        %1883 = vmatpush1.msra.mxu0 0.0
        %1884 = vmatprep.subr.mxu0 0.0
        %1885 = vmatpush1.msra.mxu0 0.0
        %1886 = vmatprep.subr.mxu0 0.0
        %1887 = vmatpush1.msra.mxu0 0.0
        %1888 = vmatprep.subr.mxu0 0.0
        %1889 = vmatpush1.msra.mxu0 0.0
        %1890 = vmatprep.subr.mxu0 0.0
        %1891 = vmatpush1.msra.mxu0 0.0
        %1892 = vmatprep.subr.mxu0 0.0
        %1893 = vmatpush1.msra.mxu0 0.0
        %1894 = vmatprep.subr.mxu0 0.0
        %1895 = vmatpush1.msra.mxu0 0.0
        %1896 = vmatprep.subr.mxu0 0.0
        %1897 = vmatpush1.msra.mxu0 0.0
        %1898 = vmatprep.subr.mxu0 0.0
        %1899 = vmatpush1.msra.mxu0 0.0
        %1900 = vmatprep.subr.mxu0 0.0
        %1901 = vmatpush1.msra.mxu0 0.0
        %1902 = vmatprep.subr.mxu0 0.0
        %1903 = vmatpush1.msra.mxu0 0.0
        %1904 = vmatprep.subr.mxu0 0.0
        %1905 = vmatpush1.msra.mxu0 0.0
        %1906 = vmatprep.subr.mxu0 0.0
        %1907 = vmatpush1.msra.mxu0 0.0
        %1908 = vmatprep.subr.mxu0 0.0
        %1909 = vmatpush1.msra.mxu0 0.0
        %1910 = vmatprep.subr.mxu0 0.0
        %1911 = vmatpush1.msra.mxu0 0.0
        %1912 = vmatprep.subr.mxu0 0.0
        %1913 = vmatpush1.msra.mxu0 0.0
        %1914 = vmatprep.subr.mxu0 0.0
        %1915 = vmatpush1.msra.mxu0 0.0
        %1916 = vmatprep.subr.mxu0 0.0
        %1917 = vmatpush1.msra.mxu0 0.0
        %1918 = vmatprep.mubr.f32.mxu0 0.0
        %1919 = vmatmul.mubr.f32.gmra.mrb[0].mxu0 %v1852
        %v1920 = vpop.f32.mrb[0].mxu0
        %v1921 = vadd.f32 0.0, %v1920
        %v1922 = vpop.f32.mrb[0].mxu0
        %v1923 = vadd.f32 0.0, %v1922
        %1924 = vdwg.mxu0
        %1925 = vmatprep.subr.mxu0 %v1784
        %1926 = vmatpush1.msra.mxu0 %v1783
        %1927 = vmatprep.subr.mxu0 %v1791
        %1928 = vmatpush1.msra.mxu0 %v1790
        %1929 = vmatprep.subr.mxu0 %v1798
        %1930 = vmatpush1.msra.mxu0 %v1797
        %1931 = vmatprep.subr.mxu0 %v1805
        %1932 = vmatpush1.msra.mxu0 %v1804
        %1933 = vmatprep.subr.mxu0 %v1812
        %1934 = vmatpush1.msra.mxu0 %v1811
        %1935 = vmatprep.subr.mxu0 0.0
        %1936 = vmatpush1.msra.mxu0 0.0
        %1937 = vmatprep.subr.mxu0 0.0
        %1938 = vmatpush1.msra.mxu0 0.0
        %1939 = vmatprep.subr.mxu0 0.0
        %1940 = vmatpush1.msra.mxu0 0.0
        %1941 = vmatprep.subr.mxu0 0.0
        %1942 = vmatpush1.msra.mxu0 0.0
        %1943 = vmatprep.subr.mxu0 0.0
        %1944 = vmatpush1.msra.mxu0 0.0
        %1945 = vmatprep.subr.mxu0 0.0
        %1946 = vmatpush1.msra.mxu0 0.0
        %1947 = vmatprep.subr.mxu0 0.0
        %1948 = vmatpush1.msra.mxu0 0.0
        %1949 = vmatprep.subr.mxu0 0.0
        %1950 = vmatpush1.msra.mxu0 0.0
        %1951 = vmatprep.subr.mxu0 0.0
        %1952 = vmatpush1.msra.mxu0 0.0
        %1953 = vmatprep.subr.mxu0 0.0
        %1954 = vmatpush1.msra.mxu0 0.0
        %1955 = vmatprep.subr.mxu0 0.0
        %1956 = vmatpush1.msra.mxu0 0.0
        %1957 = vmatprep.subr.mxu0 0.0
        %1958 = vmatpush1.msra.mxu0 0.0
        %1959 = vmatprep.subr.mxu0 0.0
        %1960 = vmatpush1.msra.mxu0 0.0
        %1961 = vmatprep.subr.mxu0 0.0
        %1962 = vmatpush1.msra.mxu0 0.0
        %1963 = vmatprep.subr.mxu0 0.0
        %1964 = vmatpush1.msra.mxu0 0.0
        %1965 = vmatprep.subr.mxu0 0.0
        %1966 = vmatpush1.msra.mxu0 0.0
        %1967 = vmatprep.subr.mxu0 0.0
        %1968 = vmatpush1.msra.mxu0 0.0
        %1969 = vmatprep.subr.mxu0 0.0
        %1970 = vmatpush1.msra.mxu0 0.0
        %1971 = vmatprep.subr.mxu0 0.0
        %1972 = vmatpush1.msra.mxu0 0.0
        %1973 = vmatprep.subr.mxu0 0.0
        %1974 = vmatpush1.msra.mxu0 0.0
        %1975 = vmatprep.subr.mxu0 0.0
        %1976 = vmatpush1.msra.mxu0 0.0
        %1977 = vmatprep.subr.mxu0 0.0
        %1978 = vmatpush1.msra.mxu0 0.0
        %1979 = vmatprep.subr.mxu0 0.0
        %1980 = vmatpush1.msra.mxu0 0.0
        %1981 = vmatprep.subr.mxu0 0.0
        %1982 = vmatpush1.msra.mxu0 0.0
        %1983 = vmatprep.subr.mxu0 0.0
        %1984 = vmatpush1.msra.mxu0 0.0
        %1985 = vmatprep.subr.mxu0 0.0
        %1986 = vmatpush1.msra.mxu0 0.0
        %1987 = vmatprep.subr.mxu0 0.0
        %1988 = vmatpush1.msra.mxu0 0.0
        %1989 = vmatprep.mubr.f32.mxu0 0.0
        %1990 = vmatmul.mubr.f32.gmra.mrb[0].mxu0 %v1852
        %v1991 = vpop.f32.mrb[0].mxu0
        %v1992 = vadd.f32 0.0, %v1991
        %v1993 = vpop.f32.mrb[0].mxu0
        %v1994 = vadd.f32 0.0, %v1993
        %1995 = vdwg.mxu0
        %1996 = vmatprep.subr.mxu0 %v1786
        %1997 = vmatpush1.msra.mxu0 %v1785
        %1998 = vmatprep.subr.mxu0 %v1793
        %1999 = vmatpush1.msra.mxu0 %v1792
        %2000 = vmatprep.subr.mxu0 %v1800
        %2001 = vmatpush1.msra.mxu0 %v1799
        %2002 = vmatprep.subr.mxu0 %v1807
        %2003 = vmatpush1.msra.mxu0 %v1806
        %2004 = vmatprep.subr.mxu0 %v1814
        %2005 = vmatpush1.msra.mxu0 %v1813
        %2006 = vmatprep.subr.mxu0 0.0
        %2007 = vmatpush1.msra.mxu0 0.0
        %2008 = vmatprep.subr.mxu0 0.0
        %2009 = vmatpush1.msra.mxu0 0.0
        %2010 = vmatprep.subr.mxu0 0.0
        %2011 = vmatpush1.msra.mxu0 0.0
        %2012 = vmatprep.subr.mxu0 0.0
        %2013 = vmatpush1.msra.mxu0 0.0
        %2014 = vmatprep.subr.mxu0 0.0
        %2015 = vmatpush1.msra.mxu0 0.0
        %2016 = vmatprep.subr.mxu0 0.0
        %2017 = vmatpush1.msra.mxu0 0.0
        %2018 = vmatprep.subr.mxu0 0.0
        %2019 = vmatpush1.msra.mxu0 0.0
        %2020 = vmatprep.subr.mxu0 0.0
        %2021 = vmatpush1.msra.mxu0 0.0
        %2022 = vmatprep.subr.mxu0 0.0
        %2023 = vmatpush1.msra.mxu0 0.0
        %2024 = vmatprep.subr.mxu0 0.0
        %2025 = vmatpush1.msra.mxu0 0.0
        %2026 = vmatprep.subr.mxu0 0.0
        %2027 = vmatpush1.msra.mxu0 0.0
        %2028 = vmatprep.subr.mxu0 0.0
        %2029 = vmatpush1.msra.mxu0 0.0
        %2030 = vmatprep.subr.mxu0 0.0
        %2031 = vmatpush1.msra.mxu0 0.0
        %2032 = vmatprep.subr.mxu0 0.0
        %2033 = vmatpush1.msra.mxu0 0.0
        %2034 = vmatprep.subr.mxu0 0.0
        %2035 = vmatpush1.msra.mxu0 0.0
        %2036 = vmatprep.subr.mxu0 0.0
        %2037 = vmatpush1.msra.mxu0 0.0
        %2038 = vmatprep.subr.mxu0 0.0
        %2039 = vmatpush1.msra.mxu0 0.0
        %2040 = vmatprep.subr.mxu0 0.0
        %2041 = vmatpush1.msra.mxu0 0.0
        %2042 = vmatprep.subr.mxu0 0.0
        %2043 = vmatpush1.msra.mxu0 0.0
        %2044 = vmatprep.subr.mxu0 0.0
        %2045 = vmatpush1.msra.mxu0 0.0
        %2046 = vmatprep.subr.mxu0 0.0
        %2047 = vmatpush1.msra.mxu0 0.0
        %2048 = vmatprep.subr.mxu0 0.0
        %2049 = vmatpush1.msra.mxu0 0.0
        %2050 = vmatprep.subr.mxu0 0.0
        %2051 = vmatpush1.msra.mxu0 0.0
        %2052 = vmatprep.subr.mxu0 0.0
        %2053 = vmatpush1.msra.mxu0 0.0
        %2054 = vmatprep.subr.mxu0 0.0
        %2055 = vmatpush1.msra.mxu0 0.0
        %2056 = vmatprep.subr.mxu0 0.0
        %2057 = vmatpush1.msra.mxu0 0.0
        %2058 = vmatprep.subr.mxu0 0.0
        %2059 = vmatpush1.msra.mxu0 0.0
        %2060 = vmatprep.mubr.f32.mxu0 0.0
        %2061 = vmatmul.mubr.f32.gmra.mrb[0].mxu0 %v1852
        %v2062 = vpop.f32.mrb[0].mxu0
        %v2063 = vadd.f32 0.0, %v2062
        %v2064 = vpop.f32.mrb[0].mxu0
        %v2065 = vadd.f32 0.0, %v2064
        %2066 = vdwg.mxu0
        %2067 = vmatprep.subr.mxu0 0.0
        %2068 = vmatpush1.msra.mxu0 %v1787
        %2069 = vmatprep.subr.mxu0 0.0
        %2070 = vmatpush1.msra.mxu0 %v1794
        %2071 = vmatprep.subr.mxu0 0.0
        %2072 = vmatpush1.msra.mxu0 %v1801
        %2073 = vmatprep.subr.mxu0 0.0
        %2074 = vmatpush1.msra.mxu0 %v1808
        %2075 = vmatprep.subr.mxu0 0.0
        %2076 = vmatpush1.msra.mxu0 %v1815
        %2077 = vmatprep.subr.mxu0 0.0
        %2078 = vmatpush1.msra.mxu0 0.0
        %2079 = vmatprep.subr.mxu0 0.0
        %2080 = vmatpush1.msra.mxu0 0.0
        %2081 = vmatprep.subr.mxu0 0.0
        %2082 = vmatpush1.msra.mxu0 0.0
        %2083 = vmatprep.subr.mxu0 0.0
        %2084 = vmatpush1.msra.mxu0 0.0
        %2085 = vmatprep.subr.mxu0 0.0
        %2086 = vmatpush1.msra.mxu0 0.0
        %2087 = vmatprep.subr.mxu0 0.0
        %2088 = vmatpush1.msra.mxu0 0.0
        %2089 = vmatprep.subr.mxu0 0.0
        %2090 = vmatpush1.msra.mxu0 0.0
        %2091 = vmatprep.subr.mxu0 0.0
        %2092 = vmatpush1.msra.mxu0 0.0
        %2093 = vmatprep.subr.mxu0 0.0
        %2094 = vmatpush1.msra.mxu0 0.0
        %2095 = vmatprep.subr.mxu0 0.0
        %2096 = vmatpush1.msra.mxu0 0.0
        %2097 = vmatprep.subr.mxu0 0.0
        %2098 = vmatpush1.msra.mxu0 0.0
        %2099 = vmatprep.subr.mxu0 0.0
        %2100 = vmatpush1.msra.mxu0 0.0
        %2101 = vmatprep.subr.mxu0 0.0
        %2102 = vmatpush1.msra.mxu0 0.0
        %2103 = vmatprep.subr.mxu0 0.0
        %2104 = vmatpush1.msra.mxu0 0.0
        %2105 = vmatprep.subr.mxu0 0.0
        %2106 = vmatpush1.msra.mxu0 0.0
        %2107 = vmatprep.subr.mxu0 0.0
        %2108 = vmatpush1.msra.mxu0 0.0
        %2109 = vmatprep.subr.mxu0 0.0
        %2110 = vmatpush1.msra.mxu0 0.0
        %2111 = vmatprep.subr.mxu0 0.0
        %2112 = vmatpush1.msra.mxu0 0.0
        %2113 = vmatprep.subr.mxu0 0.0
        %2114 = vmatpush1.msra.mxu0 0.0
        %2115 = vmatprep.subr.mxu0 0.0
        %2116 = vmatpush1.msra.mxu0 0.0
        %2117 = vmatprep.subr.mxu0 0.0
        %2118 = vmatpush1.msra.mxu0 0.0
        %2119 = vmatprep.subr.mxu0 0.0
        %2120 = vmatpush1.msra.mxu0 0.0
        %2121 = vmatprep.subr.mxu0 0.0
        %2122 = vmatpush1.msra.mxu0 0.0
        %2123 = vmatprep.subr.mxu0 0.0
        %2124 = vmatpush1.msra.mxu0 0.0
        %2125 = vmatprep.subr.mxu0 0.0
        %2126 = vmatpush1.msra.mxu0 0.0
        %2127 = vmatprep.subr.mxu0 0.0
        %2128 = vmatpush1.msra.mxu0 0.0
        %2129 = vmatprep.subr.mxu0 0.0
        %2130 = vmatpush1.msra.mxu0 0.0
        %2131 = vmatprep.mubr.f32.mxu0 0.0
        %2132 = vmatmul.mubr.f32.gmra.mrb[0].mxu0 %v1852
        %v2133 = vpop.f32.mrb[0].mxu0
        %v2134 = vadd.f32 0.0, %v2133
        %v2135 = vpop.f32.mrb[0].mxu0
        %2136 = vdwg.mxu0
        %v2137 = vadd.f32 %v1691, %v1921
        %v2138 = vadd.f32 %v1692, %v1923
        %v2139 = vadd.f32 %v1693, %v1992
        %v2140 = vadd.f32 %v1694, %v1994
        %v2141 = vadd.f32 %v1695, %v2063
        %v2142 = vadd.f32 %v1696, %v2065
        %v2143 = vadd.f32 %v1697, %v2134
        %2145 = vrot.lane.b32.xlu0 %v392, 127
        %v2146 = vpop.permute.xlu0 %2145
        %v2147 = vsel %vm417, %v416, %v2146
        %2149 = vrot.lane.b32.xlu0 %v392, 126
        %v2150 = vpop.permute.xlu0 %2149
        %v2151 = vsel %vm448, %v447, %v2150
        %2153 = vrot.lane.b32.xlu0 %v392, 125
        %v2154 = vpop.permute.xlu0 %2153
        %v2155 = vsel %vm479, %v478, %v2154
        %2157 = vrot.lane.b32.xlu0 %v392, 124
        %v2158 = vpop.permute.xlu0 %2157
        %v2159 = vsel %vm510, %v509, %v2158
        %s2161 = scalar_lea.vmem %s1, 32
        %v2162 = vld [vmem:[%s2161] sm:$0xff]
        %v2164 = vsel %vm679, %v2162, 0
        %2166 = vmatprep.subr.mxu0 %v386
        %2167 = vmatpush1.msra.mxu0 %v385
        %2168 = vmatprep.subr.mxu0 %v420
        %2169 = vmatpush1.msra.mxu0 %v419
        %2170 = vmatprep.subr.mxu0 %v451
        %2171 = vmatpush1.msra.mxu0 %v450
        %2172 = vmatprep.subr.mxu0 %v482
        %2173 = vmatpush1.msra.mxu0 %v481
        %2174 = vmatprep.subr.mxu0 %v513
        %2175 = vmatpush1.msra.mxu0 %v512
        %2176 = vmatprep.subr.mxu0 0.0
        %2177 = vmatpush1.msra.mxu0 0.0
        %2178 = vmatprep.subr.mxu0 0.0
        %2179 = vmatpush1.msra.mxu0 0.0
        %2180 = vmatprep.subr.mxu0 0.0
        %2181 = vmatpush1.msra.mxu0 0.0
        %2182 = vmatprep.subr.mxu0 0.0
        %2183 = vmatpush1.msra.mxu0 0.0
        %2184 = vmatprep.subr.mxu0 0.0
        %2185 = vmatpush1.msra.mxu0 0.0
        %2186 = vmatprep.subr.mxu0 0.0
        %2187 = vmatpush1.msra.mxu0 0.0
        %2188 = vmatprep.subr.mxu0 0.0
        %2189 = vmatpush1.msra.mxu0 0.0
        %2190 = vmatprep.subr.mxu0 0.0
        %2191 = vmatpush1.msra.mxu0 0.0
        %2192 = vmatprep.subr.mxu0 0.0
        %2193 = vmatpush1.msra.mxu0 0.0
        %2194 = vmatprep.subr.mxu0 0.0
        %2195 = vmatpush1.msra.mxu0 0.0
        %2196 = vmatprep.subr.mxu0 0.0
        %2197 = vmatpush1.msra.mxu0 0.0
        %2198 = vmatprep.subr.mxu0 0.0
        %2199 = vmatpush1.msra.mxu0 0.0
        %2200 = vmatprep.subr.mxu0 0.0
        %2201 = vmatpush1.msra.mxu0 0.0
        %2202 = vmatprep.subr.mxu0 0.0
        %2203 = vmatpush1.msra.mxu0 0.0
        %2204 = vmatprep.subr.mxu0 0.0
        %2205 = vmatpush1.msra.mxu0 0.0
        %2206 = vmatprep.subr.mxu0 0.0
        %2207 = vmatpush1.msra.mxu0 0.0
        %2208 = vmatprep.subr.mxu0 0.0
        %2209 = vmatpush1.msra.mxu0 0.0
        %2210 = vmatprep.subr.mxu0 0.0
        %2211 = vmatpush1.msra.mxu0 0.0
        %2212 = vmatprep.subr.mxu0 0.0
        %2213 = vmatpush1.msra.mxu0 0.0
        %2214 = vmatprep.subr.mxu0 0.0
        %2215 = vmatpush1.msra.mxu0 0.0
        %2216 = vmatprep.subr.mxu0 0.0
        %2217 = vmatpush1.msra.mxu0 0.0
        %2218 = vmatprep.subr.mxu0 0.0
        %2219 = vmatpush1.msra.mxu0 0.0
        %2220 = vmatprep.subr.mxu0 0.0
        %2221 = vmatpush1.msra.mxu0 0.0
        %2222 = vmatprep.subr.mxu0 0.0
        %2223 = vmatpush1.msra.mxu0 0.0
        %2224 = vmatprep.subr.mxu0 0.0
        %2225 = vmatpush1.msra.mxu0 0.0
        %2226 = vmatprep.subr.mxu0 0.0
        %2227 = vmatpush1.msra.mxu0 0.0
        %2228 = vmatprep.subr.mxu0 0.0
        %2229 = vmatpush1.msra.mxu0 0.0
        %2230 = vmatprep.mubr.f32.mxu0 0.0
        %2231 = vmatmul.mubr.f32.gmra.mrb[0].mxu0 %v2164
        %v2232 = vpop.f32.mrb[0].mxu0
        %v2233 = vadd.f32 0.0, %v2232
        %v2234 = vpop.f32.mrb[0].mxu0
        %v2235 = vadd.f32 0.0, %v2234
        %2236 = vdwg.mxu0
        %2237 = vmatprep.subr.mxu0 %v388
        %2238 = vmatpush1.msra.mxu0 %v387
        %2239 = vmatprep.subr.mxu0 %v422
        %2240 = vmatpush1.msra.mxu0 %v421
        %2241 = vmatprep.subr.mxu0 %v453
        %2242 = vmatpush1.msra.mxu0 %v452
        %2243 = vmatprep.subr.mxu0 %v484
        %2244 = vmatpush1.msra.mxu0 %v483
        %2245 = vmatprep.subr.mxu0 %v515
        %2246 = vmatpush1.msra.mxu0 %v514
        %2247 = vmatprep.subr.mxu0 0.0
        %2248 = vmatpush1.msra.mxu0 0.0
        %2249 = vmatprep.subr.mxu0 0.0
        %2250 = vmatpush1.msra.mxu0 0.0
        %2251 = vmatprep.subr.mxu0 0.0
        %2252 = vmatpush1.msra.mxu0 0.0
        %2253 = vmatprep.subr.mxu0 0.0
        %2254 = vmatpush1.msra.mxu0 0.0
        %2255 = vmatprep.subr.mxu0 0.0
        %2256 = vmatpush1.msra.mxu0 0.0
        %2257 = vmatprep.subr.mxu0 0.0
        %2258 = vmatpush1.msra.mxu0 0.0
        %2259 = vmatprep.subr.mxu0 0.0
        %2260 = vmatpush1.msra.mxu0 0.0
        %2261 = vmatprep.subr.mxu0 0.0
        %2262 = vmatpush1.msra.mxu0 0.0
        %2263 = vmatprep.subr.mxu0 0.0
        %2264 = vmatpush1.msra.mxu0 0.0
        %2265 = vmatprep.subr.mxu0 0.0
        %2266 = vmatpush1.msra.mxu0 0.0
        %2267 = vmatprep.subr.mxu0 0.0
        %2268 = vmatpush1.msra.mxu0 0.0
        %2269 = vmatprep.subr.mxu0 0.0
        %2270 = vmatpush1.msra.mxu0 0.0
        %2271 = vmatprep.subr.mxu0 0.0
        %2272 = vmatpush1.msra.mxu0 0.0
        %2273 = vmatprep.subr.mxu0 0.0
        %2274 = vmatpush1.msra.mxu0 0.0
        %2275 = vmatprep.subr.mxu0 0.0
        %2276 = vmatpush1.msra.mxu0 0.0
        %2277 = vmatprep.subr.mxu0 0.0
        %2278 = vmatpush1.msra.mxu0 0.0
        %2279 = vmatprep.subr.mxu0 0.0
        %2280 = vmatpush1.msra.mxu0 0.0
        %2281 = vmatprep.subr.mxu0 0.0
        %2282 = vmatpush1.msra.mxu0 0.0
        %2283 = vmatprep.subr.mxu0 0.0
        %2284 = vmatpush1.msra.mxu0 0.0
        %2285 = vmatprep.subr.mxu0 0.0
        %2286 = vmatpush1.msra.mxu0 0.0
        %2287 = vmatprep.subr.mxu0 0.0
        %2288 = vmatpush1.msra.mxu0 0.0
        %2289 = vmatprep.subr.mxu0 0.0
        %2290 = vmatpush1.msra.mxu0 0.0
        %2291 = vmatprep.subr.mxu0 0.0
        %2292 = vmatpush1.msra.mxu0 0.0
        %2293 = vmatprep.subr.mxu0 0.0
        %2294 = vmatpush1.msra.mxu0 0.0
        %2295 = vmatprep.subr.mxu0 0.0
        %2296 = vmatpush1.msra.mxu0 0.0
        %2297 = vmatprep.subr.mxu0 0.0
        %2298 = vmatpush1.msra.mxu0 0.0
        %2299 = vmatprep.subr.mxu0 0.0
        %2300 = vmatpush1.msra.mxu0 0.0
        %2301 = vmatprep.mubr.f32.mxu0 0.0
        %2302 = vmatmul.mubr.f32.gmra.mrb[0].mxu0 %v2164
        %v2303 = vpop.f32.mrb[0].mxu0
        %v2304 = vadd.f32 0.0, %v2303
        %v2305 = vpop.f32.mrb[0].mxu0
        %v2306 = vadd.f32 0.0, %v2305
        %2307 = vdwg.mxu0
        %2308 = vmatprep.subr.mxu0 %v390
        %2309 = vmatpush1.msra.mxu0 %v389
        %2310 = vmatprep.subr.mxu0 %v424
        %2311 = vmatpush1.msra.mxu0 %v423
        %2312 = vmatprep.subr.mxu0 %v455
        %2313 = vmatpush1.msra.mxu0 %v454
        %2314 = vmatprep.subr.mxu0 %v486
        %2315 = vmatpush1.msra.mxu0 %v485
        %2316 = vmatprep.subr.mxu0 %v517
        %2317 = vmatpush1.msra.mxu0 %v516
        %2318 = vmatprep.subr.mxu0 0.0
        %2319 = vmatpush1.msra.mxu0 0.0
        %2320 = vmatprep.subr.mxu0 0.0
        %2321 = vmatpush1.msra.mxu0 0.0
        %2322 = vmatprep.subr.mxu0 0.0
        %2323 = vmatpush1.msra.mxu0 0.0
        %2324 = vmatprep.subr.mxu0 0.0
        %2325 = vmatpush1.msra.mxu0 0.0
        %2326 = vmatprep.subr.mxu0 0.0
        %2327 = vmatpush1.msra.mxu0 0.0
        %2328 = vmatprep.subr.mxu0 0.0
        %2329 = vmatpush1.msra.mxu0 0.0
        %2330 = vmatprep.subr.mxu0 0.0
        %2331 = vmatpush1.msra.mxu0 0.0
        %2332 = vmatprep.subr.mxu0 0.0
        %2333 = vmatpush1.msra.mxu0 0.0
        %2334 = vmatprep.subr.mxu0 0.0
        %2335 = vmatpush1.msra.mxu0 0.0
        %2336 = vmatprep.subr.mxu0 0.0
        %2337 = vmatpush1.msra.mxu0 0.0
        %2338 = vmatprep.subr.mxu0 0.0
        %2339 = vmatpush1.msra.mxu0 0.0
        %2340 = vmatprep.subr.mxu0 0.0
        %2341 = vmatpush1.msra.mxu0 0.0
        %2342 = vmatprep.subr.mxu0 0.0
        %2343 = vmatpush1.msra.mxu0 0.0
        %2344 = vmatprep.subr.mxu0 0.0
        %2345 = vmatpush1.msra.mxu0 0.0
        %2346 = vmatprep.subr.mxu0 0.0
        %2347 = vmatpush1.msra.mxu0 0.0
        %2348 = vmatprep.subr.mxu0 0.0
        %2349 = vmatpush1.msra.mxu0 0.0
        %2350 = vmatprep.subr.mxu0 0.0
        %2351 = vmatpush1.msra.mxu0 0.0
        %2352 = vmatprep.subr.mxu0 0.0
        %2353 = vmatpush1.msra.mxu0 0.0
        %2354 = vmatprep.subr.mxu0 0.0
        %2355 = vmatpush1.msra.mxu0 0.0
        %2356 = vmatprep.subr.mxu0 0.0
        %2357 = vmatpush1.msra.mxu0 0.0
        %2358 = vmatprep.subr.mxu0 0.0
        %2359 = vmatpush1.msra.mxu0 0.0
        %2360 = vmatprep.subr.mxu0 0.0
        %2361 = vmatpush1.msra.mxu0 0.0
        %2362 = vmatprep.subr.mxu0 0.0
        %2363 = vmatpush1.msra.mxu0 0.0
        %2364 = vmatprep.subr.mxu0 0.0
        %2365 = vmatpush1.msra.mxu0 0.0
        %2366 = vmatprep.subr.mxu0 0.0
        %2367 = vmatpush1.msra.mxu0 0.0
        %2368 = vmatprep.subr.mxu0 0.0
        %2369 = vmatpush1.msra.mxu0 0.0
        %2370 = vmatprep.subr.mxu0 0.0
        %2371 = vmatpush1.msra.mxu0 0.0
        %2372 = vmatprep.mubr.f32.mxu0 0.0
        %2373 = vmatmul.mubr.f32.gmra.mrb[0].mxu0 %v2164
        %v2374 = vpop.f32.mrb[0].mxu0
        %v2375 = vadd.f32 0.0, %v2374
        %v2376 = vpop.f32.mrb[0].mxu0
        %v2377 = vadd.f32 0.0, %v2376
        %2378 = vdwg.mxu0
        %2379 = vmatprep.subr.mxu0 0.0
        %2380 = vmatpush1.msra.mxu0 %v391
        %2381 = vmatprep.subr.mxu0 0.0
        %2382 = vmatpush1.msra.mxu0 %v2147
        %2383 = vmatprep.subr.mxu0 0.0
        %2384 = vmatpush1.msra.mxu0 %v2151
        %2385 = vmatprep.subr.mxu0 0.0
        %2386 = vmatpush1.msra.mxu0 %v2155
        %2387 = vmatprep.subr.mxu0 0.0
        %2388 = vmatpush1.msra.mxu0 %v2159
        %2389 = vmatprep.subr.mxu0 0.0
        %2390 = vmatpush1.msra.mxu0 0.0
        %2391 = vmatprep.subr.mxu0 0.0
        %2392 = vmatpush1.msra.mxu0 0.0
        %2393 = vmatprep.subr.mxu0 0.0
        %2394 = vmatpush1.msra.mxu0 0.0
        %2395 = vmatprep.subr.mxu0 0.0
        %2396 = vmatpush1.msra.mxu0 0.0
        %2397 = vmatprep.subr.mxu0 0.0
        %2398 = vmatpush1.msra.mxu0 0.0
        %2399 = vmatprep.subr.mxu0 0.0
        %2400 = vmatpush1.msra.mxu0 0.0
        %2401 = vmatprep.subr.mxu0 0.0
        %2402 = vmatpush1.msra.mxu0 0.0
        %2403 = vmatprep.subr.mxu0 0.0
        %2404 = vmatpush1.msra.mxu0 0.0
        %2405 = vmatprep.subr.mxu0 0.0
        %2406 = vmatpush1.msra.mxu0 0.0
        %2407 = vmatprep.subr.mxu0 0.0
        %2408 = vmatpush1.msra.mxu0 0.0
        %2409 = vmatprep.subr.mxu0 0.0
        %2410 = vmatpush1.msra.mxu0 0.0
        %2411 = vmatprep.subr.mxu0 0.0
        %2412 = vmatpush1.msra.mxu0 0.0
        %2413 = vmatprep.subr.mxu0 0.0
        %2414 = vmatpush1.msra.mxu0 0.0
        %2415 = vmatprep.subr.mxu0 0.0
        %2416 = vmatpush1.msra.mxu0 0.0
        %2417 = vmatprep.subr.mxu0 0.0
        %2418 = vmatpush1.msra.mxu0 0.0
        %2419 = vmatprep.subr.mxu0 0.0
        %2420 = vmatpush1.msra.mxu0 0.0
        %2421 = vmatprep.subr.mxu0 0.0
        %2422 = vmatpush1.msra.mxu0 0.0
        %2423 = vmatprep.subr.mxu0 0.0
        %2424 = vmatpush1.msra.mxu0 0.0
        %2425 = vmatprep.subr.mxu0 0.0
        %2426 = vmatpush1.msra.mxu0 0.0
        %2427 = vmatprep.subr.mxu0 0.0
        %2428 = vmatpush1.msra.mxu0 0.0
        %2429 = vmatprep.subr.mxu0 0.0
        %2430 = vmatpush1.msra.mxu0 0.0
        %2431 = vmatprep.subr.mxu0 0.0
        %2432 = vmatpush1.msra.mxu0 0.0
        %2433 = vmatprep.subr.mxu0 0.0
        %2434 = vmatpush1.msra.mxu0 0.0
        %2435 = vmatprep.subr.mxu0 0.0
        %2436 = vmatpush1.msra.mxu0 0.0
        %2437 = vmatprep.subr.mxu0 0.0
        %2438 = vmatpush1.msra.mxu0 0.0
        %2439 = vmatprep.subr.mxu0 0.0
        %2440 = vmatpush1.msra.mxu0 0.0
        %2441 = vmatprep.subr.mxu0 0.0
        %2442 = vmatpush1.msra.mxu0 0.0
        %2443 = vmatprep.mubr.f32.mxu0 0.0
        %2444 = vmatmul.mubr.f32.gmra.mrb[0].mxu0 %v2164
        %v2445 = vpop.f32.mrb[0].mxu0
        %v2446 = vadd.f32 0.0, %v2445
        %v2447 = vpop.f32.mrb[0].mxu0
        %2448 = vdwg.mxu0
        %v2449 = vadd.f32 %v2137, %v2233
        %v2450 = vadd.f32 %v2138, %v2235
        %v2451 = vadd.f32 %v2139, %v2304
        %v2452 = vadd.f32 %v2140, %v2306
        %v2453 = vadd.f32 %v2141, %v2375
        %v2454 = vadd.f32 %v2142, %v2377
        %v2455 = vadd.f32 %v2143, %v2446
        %v2456 = vld [vmem:[%s2] sm:$0xff]
        %2458 = vset.pattern.permute.xlu0 0
        %2459 = vperm.xlu0 %2458, %v2456
        %v2460 = vpop.permute.xlu0 %2459
        %v2462 = vadd.f32 %v2449, %v2460
        %v2463 = vadd.f32 %v2450, %v2460
        %v2464 = vadd.f32 %v2451, %v2460
        %v2465 = vadd.f32 %v2452, %v2460
        %v2466 = vadd.f32 %v2453, %v2460
        %v2467 = vadd.f32 %v2454, %v2460
        %v2468 = vadd.f32 %v2455, %v2460
        %v2469 = vmax.f32 %v2462, 0.0
        %v2470 = vmax.f32 %v2463, 0.0
        %v2471 = vmax.f32 %v2464, 0.0
        %v2472 = vmax.f32 %v2465, 0.0
        %v2473 = vmax.f32 %v2466, 0.0
        %v2474 = vmax.f32 %v2467, 0.0
        %v2475 = vmax.f32 %v2468, 0.0
        %2483 = vrot.lane.b32.xlu0 %v2469, 96
        %v2484 = vpop.permute.xlu0 %2483
        %2485 = vrot.lane.b32.xlu0 %v2470, 96
        %v2486 = vpop.permute.xlu0 %2485
        %2487 = vrot.lane.b32.xlu0 %v2471, 96
        %v2488 = vpop.permute.xlu0 %2487
        %2489 = vrot.lane.b32.xlu0 %v2472, 96
        %v2490 = vpop.permute.xlu0 %2489
        %2491 = vrot.lane.b32.xlu0 %v2473, 96
        %v2492 = vpop.permute.xlu0 %2491
        %2493 = vrot.lane.b32.xlu0 %v2474, 96
        %v2494 = vpop.permute.xlu0 %2493
        %2495 = vrot.lane.b32.xlu0 %v2475, 96
        %v2496 = vpop.permute.xlu0 %2495
        %v2497 = vsel %vm608, %v2484, %v2486
        %v2498 = vsel %vm608, %v2486, %v2488
        %v2499 = vsel %vm608, %v2488, %v2490
        %v2500 = vsel %vm608, %v2490, %v2492
        %v2501 = vsel %vm608, %v2492, %v2494
        %v2502 = vsel %vm608, %v2494, %v2496
        %v2510 = vsel %vm608, %v2496, 0.0
        %v2511 = vmax.f32 %v2469, %v2497
        %v2512 = vmax.f32 %v2470, %v2498
        %v2513 = vmax.f32 %v2471, %v2499
        %v2514 = vmax.f32 %v2472, %v2500
        %v2515 = vmax.f32 %v2473, %v2501
        %v2516 = vmax.f32 %v2474, %v2502
        %v2517 = vmax.f32 %v2475, %v2510
        %2525 = vrot.lane.b32.xlu0 %v2511, 127
        %v2526 = vpop.permute.xlu0 %2525
        %2527 = vrot.lane.b32.xlu0 %v2512, 127
        %v2528 = vpop.permute.xlu0 %2527
        %2529 = vrot.lane.b32.xlu0 %v2513, 127
        %v2530 = vpop.permute.xlu0 %2529
        %2531 = vrot.lane.b32.xlu0 %v2514, 127
        %v2532 = vpop.permute.xlu0 %2531
        %2533 = vrot.lane.b32.xlu0 %v2515, 127
        %v2534 = vpop.permute.xlu0 %2533
        %2535 = vrot.lane.b32.xlu0 %v2516, 127
        %v2536 = vpop.permute.xlu0 %2535
        %2537 = vrot.lane.b32.xlu0 %v2517, 127
        %v2538 = vpop.permute.xlu0 %2537
        %v2539 = vsel %vm417, %v2526, %v2528
        %v2540 = vsel %vm417, %v2528, %v2530
        %v2541 = vsel %vm417, %v2530, %v2532
        %v2542 = vsel %vm417, %v2532, %v2534
        %v2543 = vsel %vm417, %v2534, %v2536
        %v2544 = vsel %vm417, %v2536, %v2538
        %v2552 = vsel %vm417, %v2538, 0.0
        %v2553 = vmax.f32 %v2511, %v2539
        %v2554 = vmax.f32 %v2512, %v2540
        %v2555 = vmax.f32 %v2513, %v2541
        %v2556 = vmax.f32 %v2514, %v2542
        %v2557 = vmax.f32 %v2515, %v2543
        %v2558 = vmax.f32 %v2516, %v2544
        %v2559 = vmax.f32 %v2517, %v2552
        %2561 = vrot.lane.b32.xlu0 %v2553, 96
        %v2562 = vpop.permute.xlu0 %2561
        %2565 = vrot.lane.b32.xlu0 %v2554, 64
        %v2566 = vpop.permute.xlu0 %2565
        %2568 = vrot.lane.b32.xlu0 %v2554, 32
        %v2569 = vpop.permute.xlu0 %2568
        %2572 = vrot.lane.b32.xlu0 %v2555, 96
        %v2573 = vpop.permute.xlu0 %2572
        %2576 = vrot.lane.b32.xlu0 %v2556, 64
        %v2577 = vpop.permute.xlu0 %2576
        %2579 = vrot.lane.b32.xlu0 %v2556, 32
        %v2580 = vpop.permute.xlu0 %2579
        %2583 = vrot.lane.b32.xlu0 %v2557, 96
        %v2584 = vpop.permute.xlu0 %2583
        %2587 = vrot.lane.b32.xlu0 %v2558, 64
        %v2588 = vpop.permute.xlu0 %2587
        %2590 = vrot.lane.b32.xlu0 %v2558, 32
        %v2591 = vpop.permute.xlu0 %2590
        %2594 = vrot.lane.b32.xlu0 %v2559, 96
        %v2595 = vpop.permute.xlu0 %2594
        %v2597 = vsel %vm1780, %v2553, %v2562
        %v2598 = vsel %vm1334, %v2597, %v2566
        %v2599 = vsel %vm608, %v2598, %v2569
        %v2600 = vsel %vm1780, %v2555, %v2573
        %v2601 = vsel %vm1334, %v2600, %v2577
        %v2602 = vsel %vm608, %v2601, %v2580
        %v2603 = vsel %vm1780, %v2557, %v2584
        %v2604 = vsel %vm1334, %v2603, %v2588
        %v2605 = vsel %vm608, %v2604, %v2591
        %v2606 = vsel %vm1780, %v2559, %v2595
        %v2607 = vsel %vm1334, %v2606, 0.0
        %2611 = vrot.lane.b32.xlu0 %v2599, 126
        %v2612 = vpop.permute.xlu0 %2611
        %2613 = vrot.lane.b32.xlu0 %v2602, 126
        %v2614 = vpop.permute.xlu0 %2613
        %2615 = vrot.lane.b32.xlu0 %v2605, 126
        %v2616 = vpop.permute.xlu0 %2615
        %v2617 = vsel %vm448, %v2612, %v2614
        %v2618 = vsel %vm448, %v2614, %v2616
        %2622 = vrot.lane.b32.xlu0 %v2599, 124
        %v2623 = vpop.permute.xlu0 %2622
        %2624 = vrot.lane.b32.xlu0 %v2602, 124
        %v2625 = vpop.permute.xlu0 %2624
        %2626 = vrot.lane.b32.xlu0 %v2605, 124
        %v2627 = vpop.permute.xlu0 %2626
        %v2628 = vsel %vm510, %v2623, %v2625
        %v2629 = vsel %vm510, %v2625, %v2627
        %2633 = vrot.lane.b32.xlu0 %v2599, 122
        %v2634 = vpop.permute.xlu0 %2633
        %2635 = vrot.lane.b32.xlu0 %v2602, 122
        %v2636 = vpop.permute.xlu0 %2635
        %2637 = vrot.lane.b32.xlu0 %v2605, 122
        %v2638 = vpop.permute.xlu0 %2637
        %vm2639 = vcmask 998400
        %v2640 = vsel %vm2639, %v2634, %v2636
        %v2641 = vsel %vm2639, %v2636, %v2638
        %2645 = vrot.lane.b32.xlu0 %v2599, 120
        %v2646 = vpop.permute.xlu0 %2645
        %2647 = vrot.lane.b32.xlu0 %v2602, 120
        %v2648 = vpop.permute.xlu0 %2647
        %2649 = vrot.lane.b32.xlu0 %v2605, 120
        %v2650 = vpop.permute.xlu0 %2649
        %vm2651 = vcmask 982016
        %v2652 = vsel %vm2651, %v2646, %v2648
        %v2653 = vsel %vm2651, %v2648, %v2650
        %v2657 = vld [vmem:[%s3] sm:$0xff]
        %v2658 = vld [vmem:[%s3 + $0x8] sm:$0xff]
        %s2659 = scalar_lea.vmem %s3, 16
        %v2660 = vld [vmem:[%s2659] sm:$0xff]
        %v2661 = vld [vmem:[%s2659 + $0x8] sm:$0xff]
        %2662 = vrot.lane.b32.xlu0 %v2599, 96
        %v2663 = vpop.permute.xlu0 %2662
        %2664 = vrot.lane.b32.xlu0 %v2602, 96
        %v2665 = vpop.permute.xlu0 %2664
        %2666 = vrot.lane.b32.xlu0 %v2605, 96
        %v2667 = vpop.permute.xlu0 %2666
        %2668 = vrot.lane.b32.xlu0 %v2617, 96
        %v2669 = vpop.permute.xlu0 %2668
        %2670 = vrot.lane.b32.xlu0 %v2618, 96
        %v2671 = vpop.permute.xlu0 %2670
        %2672 = vrot.lane.b32.xlu0 %v2616, 96
        %v2673 = vpop.permute.xlu0 %2672
        %2674 = vrot.lane.b32.xlu0 %v2628, 96
        %v2675 = vpop.permute.xlu0 %2674
        %2676 = vrot.lane.b32.xlu0 %v2629, 96
        %v2677 = vpop.permute.xlu0 %2676
        %2678 = vrot.lane.b32.xlu0 %v2627, 96
        %v2679 = vpop.permute.xlu0 %2678
        %2680 = vrot.lane.b32.xlu0 %v2640, 96
        %v2681 = vpop.permute.xlu0 %2680
        %2682 = vrot.lane.b32.xlu0 %v2641, 96
        %v2683 = vpop.permute.xlu0 %2682
        %2684 = vrot.lane.b32.xlu0 %v2638, 96
        %v2685 = vpop.permute.xlu0 %2684
        %2686 = vrot.lane.b32.xlu0 %v2652, 96
        %v2687 = vpop.permute.xlu0 %2686
        %2688 = vrot.lane.b32.xlu0 %v2653, 96
        %v2689 = vpop.permute.xlu0 %2688
        %2690 = vrot.lane.b32.xlu0 %v2650, 96
        %v2691 = vpop.permute.xlu0 %2690
        %v2692 = vsel %vm608, %v2663, %v2665
        %v2693 = vsel %vm608, %v2665, %v2667
        %v2694 = vsel %vm608, %v2669, %v2671
        %v2695 = vsel %vm608, %v2671, %v2673
        %v2696 = vsel %vm608, %v2675, %v2677
        %v2697 = vsel %vm608, %v2677, %v2679
        %v2698 = vsel %vm608, %v2681, %v2683
        %v2699 = vsel %vm608, %v2683, %v2685
        %v2700 = vsel %vm608, %v2687, %v2689
        %v2701 = vsel %vm608, %v2689, %v2691
        %v2718 = vsel %vm679, %v2660, 0
        %v2721 = vsel %vm679, %v2661, 0
        %2723 = vmatprep.subr.mxu0 %v2693
        %2724 = vmatpush1.msra.mxu0 %v2692
        %2725 = vmatprep.subr.mxu0 %v2695
        %2726 = vmatpush1.msra.mxu0 %v2694
        %2727 = vmatprep.subr.mxu0 %v2697
        %2728 = vmatpush1.msra.mxu0 %v2696
        %2729 = vmatprep.subr.mxu0 %v2699
        %2730 = vmatpush1.msra.mxu0 %v2698
        %2731 = vmatprep.subr.mxu0 %v2701
        %2732 = vmatpush1.msra.mxu0 %v2700
        %2733 = vmatprep.subr.mxu0 0.0
        %2734 = vmatpush1.msra.mxu0 0.0
        %2735 = vmatprep.subr.mxu0 0.0
        %2736 = vmatpush1.msra.mxu0 0.0
        %2737 = vmatprep.subr.mxu0 0.0
        %2738 = vmatpush1.msra.mxu0 0.0
        %2739 = vmatprep.subr.mxu0 0.0
        %2740 = vmatpush1.msra.mxu0 0.0
        %2741 = vmatprep.subr.mxu0 0.0
        %2742 = vmatpush1.msra.mxu0 0.0
        %2743 = vmatprep.subr.mxu0 0.0
        %2744 = vmatpush1.msra.mxu0 0.0
        %2745 = vmatprep.subr.mxu0 0.0
        %2746 = vmatpush1.msra.mxu0 0.0
        %2747 = vmatprep.subr.mxu0 0.0
        %2748 = vmatpush1.msra.mxu0 0.0
        %2749 = vmatprep.subr.mxu0 0.0
        %2750 = vmatpush1.msra.mxu0 0.0
        %2751 = vmatprep.subr.mxu0 0.0
        %2752 = vmatpush1.msra.mxu0 0.0
        %2753 = vmatprep.subr.mxu0 0.0
        %2754 = vmatpush1.msra.mxu0 0.0
        %2755 = vmatprep.subr.mxu0 0.0
        %2756 = vmatpush1.msra.mxu0 0.0
        %2757 = vmatprep.subr.mxu0 0.0
        %2758 = vmatpush1.msra.mxu0 0.0
        %2759 = vmatprep.subr.mxu0 0.0
        %2760 = vmatpush1.msra.mxu0 0.0
        %2761 = vmatprep.subr.mxu0 0.0
        %2762 = vmatpush1.msra.mxu0 0.0
        %2763 = vmatprep.subr.mxu0 0.0
        %2764 = vmatpush1.msra.mxu0 0.0
        %2765 = vmatprep.subr.mxu0 0.0
        %2766 = vmatpush1.msra.mxu0 0.0
        %2767 = vmatprep.subr.mxu0 0.0
        %2768 = vmatpush1.msra.mxu0 0.0
        %2769 = vmatprep.subr.mxu0 0.0
        %2770 = vmatpush1.msra.mxu0 0.0
        %2771 = vmatprep.subr.mxu0 0.0
        %2772 = vmatpush1.msra.mxu0 0.0
        %2773 = vmatprep.subr.mxu0 0.0
        %2774 = vmatpush1.msra.mxu0 0.0
        %2775 = vmatprep.subr.mxu0 0.0
        %2776 = vmatpush1.msra.mxu0 0.0
        %2777 = vmatprep.subr.mxu0 0.0
        %2778 = vmatpush1.msra.mxu0 0.0
        %2779 = vmatprep.subr.mxu0 0.0
        %2780 = vmatpush1.msra.mxu0 0.0
        %2781 = vmatprep.subr.mxu0 0.0
        %2782 = vmatpush1.msra.mxu0 0.0
        %2783 = vmatprep.subr.mxu0 0.0
        %2784 = vmatpush1.msra.mxu0 0.0
        %2785 = vmatprep.subr.mxu0 0.0
        %2786 = vmatpush1.msra.mxu0 0.0
        %2787 = vmatprep.mubr.f32.mxu0 0.0
        %2788 = vmatmul.mubr.f32.gmra.mrb[0].mxu0 %v2718
        %v2789 = vpop.f32.mrb[0].mxu0
        %v2790 = vadd.f32 0.0, %v2789
        %v2791 = vpop.f32.mrb[0].mxu0
        %v2792 = vadd.f32 0.0, %v2791
        %2793 = vmatprep.mubr.f32.mxu0 0.0
        %2794 = vmatmul.mubr.f32.gmra.mrb[0].mxu0 %v2721
        %v2795 = vpop.f32.mrb[0].mxu0
        %v2796 = vadd.f32 0.0, %v2795
        %v2797 = vpop.f32.mrb[0].mxu0
        %v2798 = vadd.f32 0.0, %v2797
        %2799 = vdwg.mxu0
        %2800 = vmatprep.subr.mxu0 0.0
        %2801 = vmatpush1.msra.mxu0 %v2667
        %2802 = vmatprep.subr.mxu0 0.0
        %2803 = vmatpush1.msra.mxu0 %v2673
        %2804 = vmatprep.subr.mxu0 0.0
        %2805 = vmatpush1.msra.mxu0 %v2679
        %2806 = vmatprep.subr.mxu0 0.0
        %2807 = vmatpush1.msra.mxu0 %v2685
        %2808 = vmatprep.subr.mxu0 0.0
        %2809 = vmatpush1.msra.mxu0 %v2691
        %2810 = vmatprep.subr.mxu0 0.0
        %2811 = vmatpush1.msra.mxu0 0.0
        %2812 = vmatprep.subr.mxu0 0.0
        %2813 = vmatpush1.msra.mxu0 0.0
        %2814 = vmatprep.subr.mxu0 0.0
        %2815 = vmatpush1.msra.mxu0 0.0
        %2816 = vmatprep.subr.mxu0 0.0
        %2817 = vmatpush1.msra.mxu0 0.0
        %2818 = vmatprep.subr.mxu0 0.0
        %2819 = vmatpush1.msra.mxu0 0.0
        %2820 = vmatprep.subr.mxu0 0.0
        %2821 = vmatpush1.msra.mxu0 0.0
        %2822 = vmatprep.subr.mxu0 0.0
        %2823 = vmatpush1.msra.mxu0 0.0
        %2824 = vmatprep.subr.mxu0 0.0
        %2825 = vmatpush1.msra.mxu0 0.0
        %2826 = vmatprep.subr.mxu0 0.0
        %2827 = vmatpush1.msra.mxu0 0.0
        %2828 = vmatprep.subr.mxu0 0.0
        %2829 = vmatpush1.msra.mxu0 0.0
        %2830 = vmatprep.subr.mxu0 0.0
        %2831 = vmatpush1.msra.mxu0 0.0
        %2832 = vmatprep.subr.mxu0 0.0
        %2833 = vmatpush1.msra.mxu0 0.0
        %2834 = vmatprep.subr.mxu0 0.0
        %2835 = vmatpush1.msra.mxu0 0.0
        %2836 = vmatprep.subr.mxu0 0.0
        %2837 = vmatpush1.msra.mxu0 0.0
        %2838 = vmatprep.subr.mxu0 0.0
        %2839 = vmatpush1.msra.mxu0 0.0
        %2840 = vmatprep.subr.mxu0 0.0
        %2841 = vmatpush1.msra.mxu0 0.0
        %2842 = vmatprep.subr.mxu0 0.0
        %2843 = vmatpush1.msra.mxu0 0.0
        %2844 = vmatprep.subr.mxu0 0.0
        %2845 = vmatpush1.msra.mxu0 0.0
        %2846 = vmatprep.subr.mxu0 0.0
        %2847 = vmatpush1.msra.mxu0 0.0
        %2848 = vmatprep.subr.mxu0 0.0
        %2849 = vmatpush1.msra.mxu0 0.0
        %2850 = vmatprep.subr.mxu0 0.0
        %2851 = vmatpush1.msra.mxu0 0.0
        %2852 = vmatprep.subr.mxu0 0.0
        %2853 = vmatpush1.msra.mxu0 0.0
        %2854 = vmatprep.subr.mxu0 0.0
        %2855 = vmatpush1.msra.mxu0 0.0
        %2856 = vmatprep.subr.mxu0 0.0
        %2857 = vmatpush1.msra.mxu0 0.0
        %2858 = vmatprep.subr.mxu0 0.0
        %2859 = vmatpush1.msra.mxu0 0.0
        %2860 = vmatprep.subr.mxu0 0.0
        %2861 = vmatpush1.msra.mxu0 0.0
        %2862 = vmatprep.subr.mxu0 0.0
        %2863 = vmatpush1.msra.mxu0 0.0
        %2864 = vmatprep.mubr.f32.mxu0 0.0
        %2865 = vmatmul.mubr.f32.gmra.mrb[0].mxu0 %v2718
        %v2866 = vpop.f32.mrb[0].mxu0
        %v2867 = vadd.f32 0.0, %v2866
        %v2868 = vpop.f32.mrb[0].mxu0
        %2869 = vmatprep.mubr.f32.mxu0 0.0
        %2870 = vmatmul.mubr.f32.gmra.mrb[0].mxu0 %v2721
        %v2871 = vpop.f32.mrb[0].mxu0
        %v2872 = vadd.f32 0.0, %v2871
        %v2873 = vpop.f32.mrb[0].mxu0
        %2874 = vdwg.mxu0
        %v2876 = vsel %vm679, %v2657, 0
        %v2879 = vsel %vm679, %v2658, 0
        %2881 = vmatprep.subr.mxu0 %v2602
        %2882 = vmatpush1.msra.mxu0 %v2599
        %2883 = vmatprep.subr.mxu0 %v2618
        %2884 = vmatpush1.msra.mxu0 %v2617
        %2885 = vmatprep.subr.mxu0 %v2629
        %2886 = vmatpush1.msra.mxu0 %v2628
        %2887 = vmatprep.subr.mxu0 %v2641
        %2888 = vmatpush1.msra.mxu0 %v2640
        %2889 = vmatprep.subr.mxu0 %v2653
        %2890 = vmatpush1.msra.mxu0 %v2652
        %2891 = vmatprep.subr.mxu0 0.0
        %2892 = vmatpush1.msra.mxu0 0.0
        %2893 = vmatprep.subr.mxu0 0.0
        %2894 = vmatpush1.msra.mxu0 0.0
        %2895 = vmatprep.subr.mxu0 0.0
        %2896 = vmatpush1.msra.mxu0 0.0
        %2897 = vmatprep.subr.mxu0 0.0
        %2898 = vmatpush1.msra.mxu0 0.0
        %2899 = vmatprep.subr.mxu0 0.0
        %2900 = vmatpush1.msra.mxu0 0.0
        %2901 = vmatprep.subr.mxu0 0.0
        %2902 = vmatpush1.msra.mxu0 0.0
        %2903 = vmatprep.subr.mxu0 0.0
        %2904 = vmatpush1.msra.mxu0 0.0
        %2905 = vmatprep.subr.mxu0 0.0
        %2906 = vmatpush1.msra.mxu0 0.0
        %2907 = vmatprep.subr.mxu0 0.0
        %2908 = vmatpush1.msra.mxu0 0.0
        %2909 = vmatprep.subr.mxu0 0.0
        %2910 = vmatpush1.msra.mxu0 0.0
        %2911 = vmatprep.subr.mxu0 0.0
        %2912 = vmatpush1.msra.mxu0 0.0
        %2913 = vmatprep.subr.mxu0 0.0
        %2914 = vmatpush1.msra.mxu0 0.0
        %2915 = vmatprep.subr.mxu0 0.0
        %2916 = vmatpush1.msra.mxu0 0.0
        %2917 = vmatprep.subr.mxu0 0.0
        %2918 = vmatpush1.msra.mxu0 0.0
        %2919 = vmatprep.subr.mxu0 0.0
        %2920 = vmatpush1.msra.mxu0 0.0
        %2921 = vmatprep.subr.mxu0 0.0
        %2922 = vmatpush1.msra.mxu0 0.0
        %2923 = vmatprep.subr.mxu0 0.0
        %2924 = vmatpush1.msra.mxu0 0.0
        %2925 = vmatprep.subr.mxu0 0.0
        %2926 = vmatpush1.msra.mxu0 0.0
        %2927 = vmatprep.subr.mxu0 0.0
        %2928 = vmatpush1.msra.mxu0 0.0
        %2929 = vmatprep.subr.mxu0 0.0
        %2930 = vmatpush1.msra.mxu0 0.0
        %2931 = vmatprep.subr.mxu0 0.0
        %2932 = vmatpush1.msra.mxu0 0.0
        %2933 = vmatprep.subr.mxu0 0.0
        %2934 = vmatpush1.msra.mxu0 0.0
        %2935 = vmatprep.subr.mxu0 0.0
        %2936 = vmatpush1.msra.mxu0 0.0
        %2937 = vmatprep.subr.mxu0 0.0
        %2938 = vmatpush1.msra.mxu0 0.0
        %2939 = vmatprep.subr.mxu0 0.0
        %2940 = vmatpush1.msra.mxu0 0.0
        %2941 = vmatprep.subr.mxu0 0.0
        %2942 = vmatpush1.msra.mxu0 0.0
        %2943 = vmatprep.subr.mxu0 0.0
        %2944 = vmatpush1.msra.mxu0 0.0
        %2945 = vmatprep.mubr.f32.mxu0 0.0
        %2946 = vmatmul.mubr.f32.gmra.mrb[0].mxu0 %v2876
        %v2947 = vpop.f32.mrb[0].mxu0
        %v2948 = vadd.f32 %v2790, %v2947
        %v2949 = vpop.f32.mrb[0].mxu0
        %v2950 = vadd.f32 %v2792, %v2949
        %2951 = vmatprep.mubr.f32.mxu0 0.0
        %2952 = vmatmul.mubr.f32.gmra.mrb[0].mxu0 %v2879
        %v2953 = vpop.f32.mrb[0].mxu0
        %v2954 = vadd.f32 %v2796, %v2953
        %v2955 = vpop.f32.mrb[0].mxu0
        %v2956 = vadd.f32 %v2798, %v2955
        %2957 = vdwg.mxu0
        %2958 = vmatprep.subr.mxu0 0.0
        %2959 = vmatpush1.msra.mxu0 %v2605
        %2960 = vmatprep.subr.mxu0 0.0
        %2961 = vmatpush1.msra.mxu0 %v2616
        %2962 = vmatprep.subr.mxu0 0.0
        %2963 = vmatpush1.msra.mxu0 %v2627
        %2964 = vmatprep.subr.mxu0 0.0
        %2965 = vmatpush1.msra.mxu0 %v2638
        %2966 = vmatprep.subr.mxu0 0.0
        %2967 = vmatpush1.msra.mxu0 %v2650
        %2968 = vmatprep.subr.mxu0 0.0
        %2969 = vmatpush1.msra.mxu0 0.0
        %2970 = vmatprep.subr.mxu0 0.0
        %2971 = vmatpush1.msra.mxu0 0.0
        %2972 = vmatprep.subr.mxu0 0.0
        %2973 = vmatpush1.msra.mxu0 0.0
        %2974 = vmatprep.subr.mxu0 0.0
        %2975 = vmatpush1.msra.mxu0 0.0
        %2976 = vmatprep.subr.mxu0 0.0
        %2977 = vmatpush1.msra.mxu0 0.0
        %2978 = vmatprep.subr.mxu0 0.0
        %2979 = vmatpush1.msra.mxu0 0.0
        %2980 = vmatprep.subr.mxu0 0.0
        %2981 = vmatpush1.msra.mxu0 0.0
        %2982 = vmatprep.subr.mxu0 0.0
        %2983 = vmatpush1.msra.mxu0 0.0
        %2984 = vmatprep.subr.mxu0 0.0
        %2985 = vmatpush1.msra.mxu0 0.0
        %2986 = vmatprep.subr.mxu0 0.0
        %2987 = vmatpush1.msra.mxu0 0.0
        %2988 = vmatprep.subr.mxu0 0.0
        %2989 = vmatpush1.msra.mxu0 0.0
        %2990 = vmatprep.subr.mxu0 0.0
        %2991 = vmatpush1.msra.mxu0 0.0
        %2992 = vmatprep.subr.mxu0 0.0
        %2993 = vmatpush1.msra.mxu0 0.0
        %2994 = vmatprep.subr.mxu0 0.0
        %2995 = vmatpush1.msra.mxu0 0.0
        %2996 = vmatprep.subr.mxu0 0.0
        %2997 = vmatpush1.msra.mxu0 0.0
        %2998 = vmatprep.subr.mxu0 0.0
        %2999 = vmatpush1.msra.mxu0 0.0
        %3000 = vmatprep.subr.mxu0 0.0
        %3001 = vmatpush1.msra.mxu0 0.0
        %3002 = vmatprep.subr.mxu0 0.0
        %3003 = vmatpush1.msra.mxu0 0.0
        %3004 = vmatprep.subr.mxu0 0.0
        %3005 = vmatpush1.msra.mxu0 0.0
        %3006 = vmatprep.subr.mxu0 0.0
        %3007 = vmatpush1.msra.mxu0 0.0
        %3008 = vmatprep.subr.mxu0 0.0
        %3009 = vmatpush1.msra.mxu0 0.0
        %3010 = vmatprep.subr.mxu0 0.0
        %3011 = vmatpush1.msra.mxu0 0.0
        %3012 = vmatprep.subr.mxu0 0.0
        %3013 = vmatpush1.msra.mxu0 0.0
        %3014 = vmatprep.subr.mxu0 0.0
        %3015 = vmatpush1.msra.mxu0 0.0
        %3016 = vmatprep.subr.mxu0 0.0
        %3017 = vmatpush1.msra.mxu0 0.0
        %3018 = vmatprep.subr.mxu0 0.0
        %3019 = vmatpush1.msra.mxu0 0.0
        %3020 = vmatprep.subr.mxu0 0.0
        %3021 = vmatpush1.msra.mxu0 0.0
        %3022 = vmatprep.mubr.f32.mxu0 0.0
        %3023 = vmatmul.mubr.f32.gmra.mrb[0].mxu0 %v2876
        %v3024 = vpop.f32.mrb[0].mxu0
        %v3025 = vadd.f32 %v2867, %v3024
        %v3026 = vpop.f32.mrb[0].mxu0
        %3027 = vmatprep.mubr.f32.mxu0 0.0
        %3028 = vmatmul.mubr.f32.gmra.mrb[0].mxu0 %v2879
        %v3029 = vpop.f32.mrb[0].mxu0
        %v3030 = vadd.f32 %v2872, %v3029
        %v3031 = vpop.f32.mrb[0].mxu0
        %3032 = vdwg.mxu0
        %3034 = vrot.lane.b32.xlu0 %v2607, 126
        %v3035 = vpop.permute.xlu0 %3034
        %v3036 = vsel %vm448, %v2616, %v3035
        %3037 = vrot.lane.b32.xlu0 %v2607, 124
        %v3038 = vpop.permute.xlu0 %3037
        %v3039 = vsel %vm510, %v2627, %v3038
        %3040 = vrot.lane.b32.xlu0 %v2607, 122
        %v3041 = vpop.permute.xlu0 %3040
        %v3042 = vsel %vm2639, %v2638, %v3041
        %3043 = vrot.lane.b32.xlu0 %v2607, 120
        %v3044 = vpop.permute.xlu0 %3043
        %v3045 = vsel %vm2651, %v2650, %v3044
        %s3046 = scalar_lea.vmem %s3, 32
        %v3047 = vld [vmem:[%s3046] sm:$0xff]
        %v3048 = vld [vmem:[%s3046 + $0x8] sm:$0xff]
        %3049 = vrot.lane.b32.xlu0 %v2599, 64
        %v3050 = vpop.permute.xlu0 %3049
        %3051 = vrot.lane.b32.xlu0 %v2602, 64
        %v3052 = vpop.permute.xlu0 %3051
        %3053 = vrot.lane.b32.xlu0 %v2605, 64
        %v3054 = vpop.permute.xlu0 %3053
        %3055 = vrot.lane.b32.xlu0 %v2617, 64
        %v3056 = vpop.permute.xlu0 %3055
        %3057 = vrot.lane.b32.xlu0 %v2618, 64
        %v3058 = vpop.permute.xlu0 %3057
        %3059 = vrot.lane.b32.xlu0 %v3036, 64
        %v3060 = vpop.permute.xlu0 %3059
        %3061 = vrot.lane.b32.xlu0 %v2628, 64
        %v3062 = vpop.permute.xlu0 %3061
        %3063 = vrot.lane.b32.xlu0 %v2629, 64
        %v3064 = vpop.permute.xlu0 %3063
        %3065 = vrot.lane.b32.xlu0 %v3039, 64
        %v3066 = vpop.permute.xlu0 %3065
        %3067 = vrot.lane.b32.xlu0 %v2640, 64
        %v3068 = vpop.permute.xlu0 %3067
        %3069 = vrot.lane.b32.xlu0 %v2641, 64
        %v3070 = vpop.permute.xlu0 %3069
        %3071 = vrot.lane.b32.xlu0 %v3042, 64
        %v3072 = vpop.permute.xlu0 %3071
        %3073 = vrot.lane.b32.xlu0 %v2652, 64
        %v3074 = vpop.permute.xlu0 %3073
        %3075 = vrot.lane.b32.xlu0 %v2653, 64
        %v3076 = vpop.permute.xlu0 %3075
        %3077 = vrot.lane.b32.xlu0 %v3045, 64
        %v3078 = vpop.permute.xlu0 %3077
        %v3079 = vsel %vm1334, %v3050, %v3052
        %v3080 = vsel %vm1334, %v3052, %v3054
        %v3081 = vsel %vm1334, %v3056, %v3058
        %v3082 = vsel %vm1334, %v3058, %v3060
        %v3083 = vsel %vm1334, %v3062, %v3064
        %v3084 = vsel %vm1334, %v3064, %v3066
        %v3085 = vsel %vm1334, %v3068, %v3070
        %v3086 = vsel %vm1334, %v3070, %v3072
        %v3087 = vsel %vm1334, %v3074, %v3076
        %v3088 = vsel %vm1334, %v3076, %v3078
        %v3105 = vsel %vm679, %v3047, 0
        %v3108 = vsel %vm679, %v3048, 0
        %3110 = vmatprep.subr.mxu0 %v3080
        %3111 = vmatpush1.msra.mxu0 %v3079
        %3112 = vmatprep.subr.mxu0 %v3082
        %3113 = vmatpush1.msra.mxu0 %v3081
        %3114 = vmatprep.subr.mxu0 %v3084
        %3115 = vmatpush1.msra.mxu0 %v3083
        %3116 = vmatprep.subr.mxu0 %v3086
        %3117 = vmatpush1.msra.mxu0 %v3085
        %3118 = vmatprep.subr.mxu0 %v3088
        %3119 = vmatpush1.msra.mxu0 %v3087
        %3120 = vmatprep.subr.mxu0 0.0
        %3121 = vmatpush1.msra.mxu0 0.0
        %3122 = vmatprep.subr.mxu0 0.0
        %3123 = vmatpush1.msra.mxu0 0.0
        %3124 = vmatprep.subr.mxu0 0.0
        %3125 = vmatpush1.msra.mxu0 0.0
        %3126 = vmatprep.subr.mxu0 0.0
        %3127 = vmatpush1.msra.mxu0 0.0
        %3128 = vmatprep.subr.mxu0 0.0
        %3129 = vmatpush1.msra.mxu0 0.0
        %3130 = vmatprep.subr.mxu0 0.0
        %3131 = vmatpush1.msra.mxu0 0.0
        %3132 = vmatprep.subr.mxu0 0.0
        %3133 = vmatpush1.msra.mxu0 0.0
        %3134 = vmatprep.subr.mxu0 0.0
        %3135 = vmatpush1.msra.mxu0 0.0
        %3136 = vmatprep.subr.mxu0 0.0
        %3137 = vmatpush1.msra.mxu0 0.0
        %3138 = vmatprep.subr.mxu0 0.0
        %3139 = vmatpush1.msra.mxu0 0.0
        %3140 = vmatprep.subr.mxu0 0.0
        %3141 = vmatpush1.msra.mxu0 0.0
        %3142 = vmatprep.subr.mxu0 0.0
        %3143 = vmatpush1.msra.mxu0 0.0
        %3144 = vmatprep.subr.mxu0 0.0
        %3145 = vmatpush1.msra.mxu0 0.0
        %3146 = vmatprep.subr.mxu0 0.0
        %3147 = vmatpush1.msra.mxu0 0.0
        %3148 = vmatprep.subr.mxu0 0.0
        %3149 = vmatpush1.msra.mxu0 0.0
        %3150 = vmatprep.subr.mxu0 0.0
        %3151 = vmatpush1.msra.mxu0 0.0
        %3152 = vmatprep.subr.mxu0 0.0
        %3153 = vmatpush1.msra.mxu0 0.0
        %3154 = vmatprep.subr.mxu0 0.0
        %3155 = vmatpush1.msra.mxu0 0.0
        %3156 = vmatprep.subr.mxu0 0.0
        %3157 = vmatpush1.msra.mxu0 0.0
        %3158 = vmatprep.subr.mxu0 0.0
        %3159 = vmatpush1.msra.mxu0 0.0
        %3160 = vmatprep.subr.mxu0 0.0
        %3161 = vmatpush1.msra.mxu0 0.0
        %3162 = vmatprep.subr.mxu0 0.0
        %3163 = vmatpush1.msra.mxu0 0.0
        %3164 = vmatprep.subr.mxu0 0.0
        %3165 = vmatpush1.msra.mxu0 0.0
        %3166 = vmatprep.subr.mxu0 0.0
        %3167 = vmatpush1.msra.mxu0 0.0
        %3168 = vmatprep.subr.mxu0 0.0
        %3169 = vmatpush1.msra.mxu0 0.0
        %3170 = vmatprep.subr.mxu0 0.0
        %3171 = vmatpush1.msra.mxu0 0.0
        %3172 = vmatprep.subr.mxu0 0.0
        %3173 = vmatpush1.msra.mxu0 0.0
        %3174 = vmatprep.mubr.f32.mxu0 0.0
        %3175 = vmatmul.mubr.f32.gmra.mrb[0].mxu0 %v3105
        %v3176 = vpop.f32.mrb[0].mxu0
        %v3177 = vadd.f32 0.0, %v3176
        %v3178 = vpop.f32.mrb[0].mxu0
        %v3179 = vadd.f32 0.0, %v3178
        %3180 = vmatprep.mubr.f32.mxu0 0.0
        %3181 = vmatmul.mubr.f32.gmra.mrb[0].mxu0 %v3108
        %v3182 = vpop.f32.mrb[0].mxu0
        %v3183 = vadd.f32 0.0, %v3182
        %v3184 = vpop.f32.mrb[0].mxu0
        %v3185 = vadd.f32 0.0, %v3184
        %3186 = vdwg.mxu0
        %3187 = vmatprep.subr.mxu0 0.0
        %3188 = vmatpush1.msra.mxu0 %v3054
        %3189 = vmatprep.subr.mxu0 0.0
        %3190 = vmatpush1.msra.mxu0 %v3060
        %3191 = vmatprep.subr.mxu0 0.0
        %3192 = vmatpush1.msra.mxu0 %v3066
        %3193 = vmatprep.subr.mxu0 0.0
        %3194 = vmatpush1.msra.mxu0 %v3072
        %3195 = vmatprep.subr.mxu0 0.0
        %3196 = vmatpush1.msra.mxu0 %v3078
        %3197 = vmatprep.subr.mxu0 0.0
        %3198 = vmatpush1.msra.mxu0 0.0
        %3199 = vmatprep.subr.mxu0 0.0
        %3200 = vmatpush1.msra.mxu0 0.0
        %3201 = vmatprep.subr.mxu0 0.0
        %3202 = vmatpush1.msra.mxu0 0.0
        %3203 = vmatprep.subr.mxu0 0.0
        %3204 = vmatpush1.msra.mxu0 0.0
        %3205 = vmatprep.subr.mxu0 0.0
        %3206 = vmatpush1.msra.mxu0 0.0
        %3207 = vmatprep.subr.mxu0 0.0
        %3208 = vmatpush1.msra.mxu0 0.0
        %3209 = vmatprep.subr.mxu0 0.0
        %3210 = vmatpush1.msra.mxu0 0.0
        %3211 = vmatprep.subr.mxu0 0.0
        %3212 = vmatpush1.msra.mxu0 0.0
        %3213 = vmatprep.subr.mxu0 0.0
        %3214 = vmatpush1.msra.mxu0 0.0
        %3215 = vmatprep.subr.mxu0 0.0
        %3216 = vmatpush1.msra.mxu0 0.0
        %3217 = vmatprep.subr.mxu0 0.0
        %3218 = vmatpush1.msra.mxu0 0.0
        %3219 = vmatprep.subr.mxu0 0.0
        %3220 = vmatpush1.msra.mxu0 0.0
        %3221 = vmatprep.subr.mxu0 0.0
        %3222 = vmatpush1.msra.mxu0 0.0
        %3223 = vmatprep.subr.mxu0 0.0
        %3224 = vmatpush1.msra.mxu0 0.0
        %3225 = vmatprep.subr.mxu0 0.0
        %3226 = vmatpush1.msra.mxu0 0.0
        %3227 = vmatprep.subr.mxu0 0.0
        %3228 = vmatpush1.msra.mxu0 0.0
        %3229 = vmatprep.subr.mxu0 0.0
        %3230 = vmatpush1.msra.mxu0 0.0
        %3231 = vmatprep.subr.mxu0 0.0
        %3232 = vmatpush1.msra.mxu0 0.0
        %3233 = vmatprep.subr.mxu0 0.0
        %3234 = vmatpush1.msra.mxu0 0.0
        %3235 = vmatprep.subr.mxu0 0.0
        %3236 = vmatpush1.msra.mxu0 0.0
        %3237 = vmatprep.subr.mxu0 0.0
        %3238 = vmatpush1.msra.mxu0 0.0
        %3239 = vmatprep.subr.mxu0 0.0
        %3240 = vmatpush1.msra.mxu0 0.0
        %3241 = vmatprep.subr.mxu0 0.0
        %3242 = vmatpush1.msra.mxu0 0.0
        %3243 = vmatprep.subr.mxu0 0.0
        %3244 = vmatpush1.msra.mxu0 0.0
        %3245 = vmatprep.subr.mxu0 0.0
        %3246 = vmatpush1.msra.mxu0 0.0
        %3247 = vmatprep.subr.mxu0 0.0
        %3248 = vmatpush1.msra.mxu0 0.0
        %3249 = vmatprep.subr.mxu0 0.0
        %3250 = vmatpush1.msra.mxu0 0.0
        %3251 = vmatprep.mubr.f32.mxu0 0.0
        %3252 = vmatmul.mubr.f32.gmra.mrb[0].mxu0 %v3105
        %v3253 = vpop.f32.mrb[0].mxu0
        %v3254 = vadd.f32 0.0, %v3253
        %v3255 = vpop.f32.mrb[0].mxu0
        %3256 = vmatprep.mubr.f32.mxu0 0.0
        %3257 = vmatmul.mubr.f32.gmra.mrb[0].mxu0 %v3108
        %v3258 = vpop.f32.mrb[0].mxu0
        %v3259 = vadd.f32 0.0, %v3258
        %v3260 = vpop.f32.mrb[0].mxu0
        %3261 = vdwg.mxu0
        %v3262 = vadd.f32 %v2948, %v3177
        %v3263 = vadd.f32 %v2950, %v3179
        %v3264 = vadd.f32 %v3025, %v3254
        %v3265 = vadd.f32 %v2954, %v3183
        %v3266 = vadd.f32 %v2956, %v3185
        %v3267 = vadd.f32 %v3030, %v3259
        %s3268 = scalar_lea.vmem %s3, 48
        %v3269 = vld [vmem:[%s3268] sm:$0xff]
        %v3270 = vld [vmem:[%s3268 + $0x8] sm:$0xff]
        %3271 = vrot.lane.b32.xlu0 %v2599, 32
        %v3272 = vpop.permute.xlu0 %3271
        %3273 = vrot.lane.b32.xlu0 %v2602, 32
        %v3274 = vpop.permute.xlu0 %3273
        %3275 = vrot.lane.b32.xlu0 %v2605, 32
        %v3276 = vpop.permute.xlu0 %3275
        %3277 = vrot.lane.b32.xlu0 %v2607, 32
        %v3278 = vpop.permute.xlu0 %3277
        %3279 = vrot.lane.b32.xlu0 %v2617, 32
        %v3280 = vpop.permute.xlu0 %3279
        %3281 = vrot.lane.b32.xlu0 %v2618, 32
        %v3282 = vpop.permute.xlu0 %3281
        %3283 = vrot.lane.b32.xlu0 %v3036, 32
        %v3284 = vpop.permute.xlu0 %3283
        %3285 = vrot.lane.b32.xlu0 %v3035, 32
        %v3286 = vpop.permute.xlu0 %3285
        %3287 = vrot.lane.b32.xlu0 %v2628, 32
        %v3288 = vpop.permute.xlu0 %3287
        %3289 = vrot.lane.b32.xlu0 %v2629, 32
        %v3290 = vpop.permute.xlu0 %3289
        %3291 = vrot.lane.b32.xlu0 %v3039, 32
        %v3292 = vpop.permute.xlu0 %3291
        %3293 = vrot.lane.b32.xlu0 %v3038, 32
        %v3294 = vpop.permute.xlu0 %3293
        %3295 = vrot.lane.b32.xlu0 %v2640, 32
        %v3296 = vpop.permute.xlu0 %3295
        %3297 = vrot.lane.b32.xlu0 %v2641, 32
        %v3298 = vpop.permute.xlu0 %3297
        %3299 = vrot.lane.b32.xlu0 %v3042, 32
        %v3300 = vpop.permute.xlu0 %3299
        %3301 = vrot.lane.b32.xlu0 %v3041, 32
        %v3302 = vpop.permute.xlu0 %3301
        %3303 = vrot.lane.b32.xlu0 %v2652, 32
        %v3304 = vpop.permute.xlu0 %3303
        %3305 = vrot.lane.b32.xlu0 %v2653, 32
        %v3306 = vpop.permute.xlu0 %3305
        %3307 = vrot.lane.b32.xlu0 %v3045, 32
        %v3308 = vpop.permute.xlu0 %3307
        %3309 = vrot.lane.b32.xlu0 %v3044, 32
        %v3310 = vpop.permute.xlu0 %3309
        %v3311 = vsel %vm1780, %v3272, %v3274
        %v3312 = vsel %vm1780, %v3274, %v3276
        %v3313 = vsel %vm1780, %v3276, %v3278
        %v3314 = vsel %vm1780, %v3280, %v3282
        %v3315 = vsel %vm1780, %v3282, %v3284
        %v3316 = vsel %vm1780, %v3284, %v3286
        %v3317 = vsel %vm1780, %v3288, %v3290
        %v3318 = vsel %vm1780, %v3290, %v3292
        %v3319 = vsel %vm1780, %v3292, %v3294
        %v3320 = vsel %vm1780, %v3296, %v3298
        %v3321 = vsel %vm1780, %v3298, %v3300
        %v3322 = vsel %vm1780, %v3300, %v3302
        %v3323 = vsel %vm1780, %v3304, %v3306
        %v3324 = vsel %vm1780, %v3306, %v3308
        %v3325 = vsel %vm1780, %v3308, %v3310
        %v3342 = vsel %vm679, %v3269, 0
        %v3345 = vsel %vm679, %v3270, 0
        %3347 = vmatprep.subr.mxu0 %v3312
        %3348 = vmatpush1.msra.mxu0 %v3311
        %3349 = vmatprep.subr.mxu0 %v3315
        %3350 = vmatpush1.msra.mxu0 %v3314
        %3351 = vmatprep.subr.mxu0 %v3318
        %3352 = vmatpush1.msra.mxu0 %v3317
        %3353 = vmatprep.subr.mxu0 %v3321
        %3354 = vmatpush1.msra.mxu0 %v3320
        %3355 = vmatprep.subr.mxu0 %v3324
        %3356 = vmatpush1.msra.mxu0 %v3323
        %3357 = vmatprep.subr.mxu0 0.0
        %3358 = vmatpush1.msra.mxu0 0.0
        %3359 = vmatprep.subr.mxu0 0.0
        %3360 = vmatpush1.msra.mxu0 0.0
        %3361 = vmatprep.subr.mxu0 0.0
        %3362 = vmatpush1.msra.mxu0 0.0
        %3363 = vmatprep.subr.mxu0 0.0
        %3364 = vmatpush1.msra.mxu0 0.0
        %3365 = vmatprep.subr.mxu0 0.0
        %3366 = vmatpush1.msra.mxu0 0.0
        %3367 = vmatprep.subr.mxu0 0.0
        %3368 = vmatpush1.msra.mxu0 0.0
        %3369 = vmatprep.subr.mxu0 0.0
        %3370 = vmatpush1.msra.mxu0 0.0
        %3371 = vmatprep.subr.mxu0 0.0
        %3372 = vmatpush1.msra.mxu0 0.0
        %3373 = vmatprep.subr.mxu0 0.0
        %3374 = vmatpush1.msra.mxu0 0.0
        %3375 = vmatprep.subr.mxu0 0.0
        %3376 = vmatpush1.msra.mxu0 0.0
        %3377 = vmatprep.subr.mxu0 0.0
        %3378 = vmatpush1.msra.mxu0 0.0
        %3379 = vmatprep.subr.mxu0 0.0
        %3380 = vmatpush1.msra.mxu0 0.0
        %3381 = vmatprep.subr.mxu0 0.0
        %3382 = vmatpush1.msra.mxu0 0.0
        %3383 = vmatprep.subr.mxu0 0.0
        %3384 = vmatpush1.msra.mxu0 0.0
        %3385 = vmatprep.subr.mxu0 0.0
        %3386 = vmatpush1.msra.mxu0 0.0
        %3387 = vmatprep.subr.mxu0 0.0
        %3388 = vmatpush1.msra.mxu0 0.0
        %3389 = vmatprep.subr.mxu0 0.0
        %3390 = vmatpush1.msra.mxu0 0.0
        %3391 = vmatprep.subr.mxu0 0.0
        %3392 = vmatpush1.msra.mxu0 0.0
        %3393 = vmatprep.subr.mxu0 0.0
        %3394 = vmatpush1.msra.mxu0 0.0
        %3395 = vmatprep.subr.mxu0 0.0
        %3396 = vmatpush1.msra.mxu0 0.0
        %3397 = vmatprep.subr.mxu0 0.0
        %3398 = vmatpush1.msra.mxu0 0.0
        %3399 = vmatprep.subr.mxu0 0.0
        %3400 = vmatpush1.msra.mxu0 0.0
        %3401 = vmatprep.subr.mxu0 0.0
        %3402 = vmatpush1.msra.mxu0 0.0
        %3403 = vmatprep.subr.mxu0 0.0
        %3404 = vmatpush1.msra.mxu0 0.0
        %3405 = vmatprep.subr.mxu0 0.0
        %3406 = vmatpush1.msra.mxu0 0.0
        %3407 = vmatprep.subr.mxu0 0.0
        %3408 = vmatpush1.msra.mxu0 0.0
        %3409 = vmatprep.subr.mxu0 0.0
        %3410 = vmatpush1.msra.mxu0 0.0
        %3411 = vmatprep.mubr.f32.mxu0 0.0
        %3412 = vmatmul.mubr.f32.gmra.mrb[0].mxu0 %v3342
        %v3413 = vpop.f32.mrb[0].mxu0
        %v3414 = vadd.f32 0.0, %v3413
        %v3415 = vpop.f32.mrb[0].mxu0
        %v3416 = vadd.f32 0.0, %v3415
        %3417 = vmatprep.mubr.f32.mxu0 0.0
        %3418 = vmatmul.mubr.f32.gmra.mrb[0].mxu0 %v3345
        %v3419 = vpop.f32.mrb[0].mxu0
        %v3420 = vadd.f32 0.0, %v3419
        %v3421 = vpop.f32.mrb[0].mxu0
        %v3422 = vadd.f32 0.0, %v3421
        %3423 = vdwg.mxu0
        %3424 = vmatprep.subr.mxu0 0.0
        %3425 = vmatpush1.msra.mxu0 %v3313
        %3426 = vmatprep.subr.mxu0 0.0
        %3427 = vmatpush1.msra.mxu0 %v3316
        %3428 = vmatprep.subr.mxu0 0.0
        %3429 = vmatpush1.msra.mxu0 %v3319
        %3430 = vmatprep.subr.mxu0 0.0
        %3431 = vmatpush1.msra.mxu0 %v3322
        %3432 = vmatprep.subr.mxu0 0.0
        %3433 = vmatpush1.msra.mxu0 %v3325
        %3434 = vmatprep.subr.mxu0 0.0
        %3435 = vmatpush1.msra.mxu0 0.0
        %3436 = vmatprep.subr.mxu0 0.0
        %3437 = vmatpush1.msra.mxu0 0.0
        %3438 = vmatprep.subr.mxu0 0.0
        %3439 = vmatpush1.msra.mxu0 0.0
        %3440 = vmatprep.subr.mxu0 0.0
        %3441 = vmatpush1.msra.mxu0 0.0
        %3442 = vmatprep.subr.mxu0 0.0
        %3443 = vmatpush1.msra.mxu0 0.0
        %3444 = vmatprep.subr.mxu0 0.0
        %3445 = vmatpush1.msra.mxu0 0.0
        %3446 = vmatprep.subr.mxu0 0.0
        %3447 = vmatpush1.msra.mxu0 0.0
        %3448 = vmatprep.subr.mxu0 0.0
        %3449 = vmatpush1.msra.mxu0 0.0
        %3450 = vmatprep.subr.mxu0 0.0
        %3451 = vmatpush1.msra.mxu0 0.0
        %3452 = vmatprep.subr.mxu0 0.0
        %3453 = vmatpush1.msra.mxu0 0.0
        %3454 = vmatprep.subr.mxu0 0.0
        %3455 = vmatpush1.msra.mxu0 0.0
        %3456 = vmatprep.subr.mxu0 0.0
        %3457 = vmatpush1.msra.mxu0 0.0
        %3458 = vmatprep.subr.mxu0 0.0
        %3459 = vmatpush1.msra.mxu0 0.0
        %3460 = vmatprep.subr.mxu0 0.0
        %3461 = vmatpush1.msra.mxu0 0.0
        %3462 = vmatprep.subr.mxu0 0.0
        %3463 = vmatpush1.msra.mxu0 0.0
        %3464 = vmatprep.subr.mxu0 0.0
        %3465 = vmatpush1.msra.mxu0 0.0
        %3466 = vmatprep.subr.mxu0 0.0
        %3467 = vmatpush1.msra.mxu0 0.0
        %3468 = vmatprep.subr.mxu0 0.0
        %3469 = vmatpush1.msra.mxu0 0.0
        %3470 = vmatprep.subr.mxu0 0.0
        %3471 = vmatpush1.msra.mxu0 0.0
        %3472 = vmatprep.subr.mxu0 0.0
        %3473 = vmatpush1.msra.mxu0 0.0
        %3474 = vmatprep.subr.mxu0 0.0
        %3475 = vmatpush1.msra.mxu0 0.0
        %3476 = vmatprep.subr.mxu0 0.0
        %3477 = vmatpush1.msra.mxu0 0.0
        %3478 = vmatprep.subr.mxu0 0.0
        %3479 = vmatpush1.msra.mxu0 0.0
        %3480 = vmatprep.subr.mxu0 0.0
        %3481 = vmatpush1.msra.mxu0 0.0
        %3482 = vmatprep.subr.mxu0 0.0
        %3483 = vmatpush1.msra.mxu0 0.0
        %3484 = vmatprep.subr.mxu0 0.0
        %3485 = vmatpush1.msra.mxu0 0.0
        %3486 = vmatprep.subr.mxu0 0.0
        %3487 = vmatpush1.msra.mxu0 0.0
        %3488 = vmatprep.mubr.f32.mxu0 0.0
        %3489 = vmatmul.mubr.f32.gmra.mrb[0].mxu0 %v3342
        %v3490 = vpop.f32.mrb[0].mxu0
        %v3491 = vadd.f32 0.0, %v3490
        %v3492 = vpop.f32.mrb[0].mxu0
        %3493 = vmatprep.mubr.f32.mxu0 0.0
        %3494 = vmatmul.mubr.f32.gmra.mrb[0].mxu0 %v3345
        %v3495 = vpop.f32.mrb[0].mxu0
        %v3496 = vadd.f32 0.0, %v3495
        %v3497 = vpop.f32.mrb[0].mxu0
        %3498 = vdwg.mxu0
        %v3499 = vadd.f32 %v3262, %v3414
        %v3500 = vadd.f32 %v3263, %v3416
        %v3501 = vadd.f32 %v3264, %v3491
        %v3502 = vadd.f32 %v3265, %v3420
        %v3503 = vadd.f32 %v3266, %v3422
        %v3504 = vadd.f32 %v3267, %v3496
        %s3513 = scalar_lea.vmem %s3, 64
        %v3514 = vld [vmem:[%s3513] sm:$0xff]
        %v3515 = vld [vmem:[%s3513 + $0x8] sm:$0xff]
        %v3517 = vsel %vm679, %v3514, 0
        %v3520 = vsel %vm679, %v3515, 0
        %3522 = vmatprep.subr.mxu0 %v2605
        %3523 = vmatpush1.msra.mxu0 %v2602
        %3524 = vmatprep.subr.mxu0 %v3036
        %3525 = vmatpush1.msra.mxu0 %v2618
        %3526 = vmatprep.subr.mxu0 %v3039
        %3527 = vmatpush1.msra.mxu0 %v2629
        %3528 = vmatprep.subr.mxu0 %v3042
        %3529 = vmatpush1.msra.mxu0 %v2641
        %3530 = vmatprep.subr.mxu0 %v3045
        %3531 = vmatpush1.msra.mxu0 %v2653
        %3532 = vmatprep.subr.mxu0 0.0
        %3533 = vmatpush1.msra.mxu0 0.0
        %3534 = vmatprep.subr.mxu0 0.0
        %3535 = vmatpush1.msra.mxu0 0.0
        %3536 = vmatprep.subr.mxu0 0.0
        %3537 = vmatpush1.msra.mxu0 0.0
        %3538 = vmatprep.subr.mxu0 0.0
        %3539 = vmatpush1.msra.mxu0 0.0
        %3540 = vmatprep.subr.mxu0 0.0
        %3541 = vmatpush1.msra.mxu0 0.0
        %3542 = vmatprep.subr.mxu0 0.0
        %3543 = vmatpush1.msra.mxu0 0.0
        %3544 = vmatprep.subr.mxu0 0.0
        %3545 = vmatpush1.msra.mxu0 0.0
        %3546 = vmatprep.subr.mxu0 0.0
        %3547 = vmatpush1.msra.mxu0 0.0
        %3548 = vmatprep.subr.mxu0 0.0
        %3549 = vmatpush1.msra.mxu0 0.0
        %3550 = vmatprep.subr.mxu0 0.0
        %3551 = vmatpush1.msra.mxu0 0.0
        %3552 = vmatprep.subr.mxu0 0.0
        %3553 = vmatpush1.msra.mxu0 0.0
        %3554 = vmatprep.subr.mxu0 0.0
        %3555 = vmatpush1.msra.mxu0 0.0
        %3556 = vmatprep.subr.mxu0 0.0
        %3557 = vmatpush1.msra.mxu0 0.0
        %3558 = vmatprep.subr.mxu0 0.0
        %3559 = vmatpush1.msra.mxu0 0.0
        %3560 = vmatprep.subr.mxu0 0.0
        %3561 = vmatpush1.msra.mxu0 0.0
        %3562 = vmatprep.subr.mxu0 0.0
        %3563 = vmatpush1.msra.mxu0 0.0
        %3564 = vmatprep.subr.mxu0 0.0
        %3565 = vmatpush1.msra.mxu0 0.0
        %3566 = vmatprep.subr.mxu0 0.0
        %3567 = vmatpush1.msra.mxu0 0.0
        %3568 = vmatprep.subr.mxu0 0.0
        %3569 = vmatpush1.msra.mxu0 0.0
        %3570 = vmatprep.subr.mxu0 0.0
        %3571 = vmatpush1.msra.mxu0 0.0
        %3572 = vmatprep.subr.mxu0 0.0
        %3573 = vmatpush1.msra.mxu0 0.0
        %3574 = vmatprep.subr.mxu0 0.0
        %3575 = vmatpush1.msra.mxu0 0.0
        %3576 = vmatprep.subr.mxu0 0.0
        %3577 = vmatpush1.msra.mxu0 0.0
        %3578 = vmatprep.subr.mxu0 0.0
        %3579 = vmatpush1.msra.mxu0 0.0
        %3580 = vmatprep.subr.mxu0 0.0
        %3581 = vmatpush1.msra.mxu0 0.0
        %3582 = vmatprep.subr.mxu0 0.0
        %3583 = vmatpush1.msra.mxu0 0.0
        %3584 = vmatprep.subr.mxu0 0.0
        %3585 = vmatpush1.msra.mxu0 0.0
        %3586 = vmatprep.mubr.f32.mxu0 0.0
        %3587 = vmatmul.mubr.f32.gmra.mrb[0].mxu0 %v3517
        %v3588 = vpop.f32.mrb[0].mxu0
        %v3589 = vadd.f32 0.0, %v3588
        %v3590 = vpop.f32.mrb[0].mxu0
        %v3591 = vadd.f32 0.0, %v3590
        %3592 = vmatprep.mubr.f32.mxu0 0.0
        %3593 = vmatmul.mubr.f32.gmra.mrb[0].mxu0 %v3520
        %v3594 = vpop.f32.mrb[0].mxu0
        %v3595 = vadd.f32 0.0, %v3594
        %v3596 = vpop.f32.mrb[0].mxu0
        %v3597 = vadd.f32 0.0, %v3596
        %3598 = vdwg.mxu0
        %3599 = vmatprep.subr.mxu0 0.0
        %3600 = vmatpush1.msra.mxu0 %v2607
        %3601 = vmatprep.subr.mxu0 0.0
        %3602 = vmatpush1.msra.mxu0 %v3035
        %3603 = vmatprep.subr.mxu0 0.0
        %3604 = vmatpush1.msra.mxu0 %v3038
        %3605 = vmatprep.subr.mxu0 0.0
        %3606 = vmatpush1.msra.mxu0 %v3041
        %3607 = vmatprep.subr.mxu0 0.0
        %3608 = vmatpush1.msra.mxu0 %v3044
        %3609 = vmatprep.subr.mxu0 0.0
        %3610 = vmatpush1.msra.mxu0 0.0
        %3611 = vmatprep.subr.mxu0 0.0
        %3612 = vmatpush1.msra.mxu0 0.0
        %3613 = vmatprep.subr.mxu0 0.0
        %3614 = vmatpush1.msra.mxu0 0.0
        %3615 = vmatprep.subr.mxu0 0.0
        %3616 = vmatpush1.msra.mxu0 0.0
        %3617 = vmatprep.subr.mxu0 0.0
        %3618 = vmatpush1.msra.mxu0 0.0
        %3619 = vmatprep.subr.mxu0 0.0
        %3620 = vmatpush1.msra.mxu0 0.0
        %3621 = vmatprep.subr.mxu0 0.0
        %3622 = vmatpush1.msra.mxu0 0.0
        %3623 = vmatprep.subr.mxu0 0.0
        %3624 = vmatpush1.msra.mxu0 0.0
        %3625 = vmatprep.subr.mxu0 0.0
        %3626 = vmatpush1.msra.mxu0 0.0
        %3627 = vmatprep.subr.mxu0 0.0
        %3628 = vmatpush1.msra.mxu0 0.0
        %3629 = vmatprep.subr.mxu0 0.0
        %3630 = vmatpush1.msra.mxu0 0.0
        %3631 = vmatprep.subr.mxu0 0.0
        %3632 = vmatpush1.msra.mxu0 0.0
        %3633 = vmatprep.subr.mxu0 0.0
        %3634 = vmatpush1.msra.mxu0 0.0
        %3635 = vmatprep.subr.mxu0 0.0
        %3636 = vmatpush1.msra.mxu0 0.0
        %3637 = vmatprep.subr.mxu0 0.0
        %3638 = vmatpush1.msra.mxu0 0.0
        %3639 = vmatprep.subr.mxu0 0.0
        %3640 = vmatpush1.msra.mxu0 0.0
        %3641 = vmatprep.subr.mxu0 0.0
        %3642 = vmatpush1.msra.mxu0 0.0
        %3643 = vmatprep.subr.mxu0 0.0
        %3644 = vmatpush1.msra.mxu0 0.0
        %3645 = vmatprep.subr.mxu0 0.0
        %3646 = vmatpush1.msra.mxu0 0.0
        %3647 = vmatprep.subr.mxu0 0.0
        %3648 = vmatpush1.msra.mxu0 0.0
        %3649 = vmatprep.subr.mxu0 0.0
        %3650 = vmatpush1.msra.mxu0 0.0
        %3651 = vmatprep.subr.mxu0 0.0
        %3652 = vmatpush1.msra.mxu0 0.0
        %3653 = vmatprep.subr.mxu0 0.0
        %3654 = vmatpush1.msra.mxu0 0.0
        %3655 = vmatprep.subr.mxu0 0.0
        %3656 = vmatpush1.msra.mxu0 0.0
        %3657 = vmatprep.subr.mxu0 0.0
        %3658 = vmatpush1.msra.mxu0 0.0
        %3659 = vmatprep.subr.mxu0 0.0
        %3660 = vmatpush1.msra.mxu0 0.0
        %3661 = vmatprep.subr.mxu0 0.0
        %3662 = vmatpush1.msra.mxu0 0.0
        %3663 = vmatprep.mubr.f32.mxu0 0.0
        %3664 = vmatmul.mubr.f32.gmra.mrb[0].mxu0 %v3517
        %v3665 = vpop.f32.mrb[0].mxu0
        %v3666 = vadd.f32 0.0, %v3665
        %v3667 = vpop.f32.mrb[0].mxu0
        %3668 = vmatprep.mubr.f32.mxu0 0.0
        %3669 = vmatmul.mubr.f32.gmra.mrb[0].mxu0 %v3520
        %v3670 = vpop.f32.mrb[0].mxu0
        %v3671 = vadd.f32 0.0, %v3670
        %v3672 = vpop.f32.mrb[0].mxu0
        %3673 = vdwg.mxu0
        %v3674 = vadd.f32 %v3499, %v3589
        %v3675 = vadd.f32 %v3500, %v3591
        %v3676 = vadd.f32 %v3501, %v3666
        %v3677 = vadd.f32 %v3502, %v3595
        %v3678 = vadd.f32 %v3503, %v3597
        %v3679 = vadd.f32 %v3504, %v3671
        %v3680 = vld [vmem:[%s4] sm:$0xff]
        %v3681 = vld [vmem:[%s4 + $0x8] sm:$0xff]
        %3683 = vset.pattern.permute.xlu0 0
        %3684 = vperm.xlu0 %3683, %v3680
        %v3685 = vpop.permute.xlu0 %3684
        %3688 = vset.pattern.permute.xlu0 0
        %3689 = vperm.xlu0 %3688, %v3681
        %v3690 = vpop.permute.xlu0 %3689
        %v3692 = vadd.f32 %v3674, %v3685
        %v3693 = vadd.f32 %v3675, %v3685
        %v3694 = vadd.f32 %v3676, %v3685
        %v3695 = vadd.f32 %v3677, %v3690
        %v3696 = vadd.f32 %v3678, %v3690
        %v3697 = vadd.f32 %v3679, %v3690
        %v3698 = vmax.f32 %v3692, 0.0
        %v3699 = vmax.f32 %v3693, 0.0
        %v3700 = vmax.f32 %v3694, 0.0
        %v3701 = vmax.f32 %v3695, 0.0
        %v3702 = vmax.f32 %v3696, 0.0
        %v3703 = vmax.f32 %v3697, 0.0
        %3710 = vrot.lane.b32.xlu0 %v3698, 96
        %v3711 = vpop.permute.xlu0 %3710
        %3712 = vrot.lane.b32.xlu0 %v3699, 96
        %v3713 = vpop.permute.xlu0 %3712
        %3714 = vrot.lane.b32.xlu0 %v3700, 96
        %v3715 = vpop.permute.xlu0 %3714
        %3716 = vrot.lane.b32.xlu0 %v3701, 96
        %v3717 = vpop.permute.xlu0 %3716
        %3718 = vrot.lane.b32.xlu0 %v3702, 96
        %v3719 = vpop.permute.xlu0 %3718
        %3720 = vrot.lane.b32.xlu0 %v3703, 96
        %v3721 = vpop.permute.xlu0 %3720
        %v3722 = vsel %vm608, %v3711, %v3713
        %v3723 = vsel %vm608, %v3713, %v3715
        %v3724 = vsel %vm608, %v3717, %v3719
        %v3725 = vsel %vm608, %v3719, %v3721
        %v3732 = vsel %vm1780, %v3715, 0.0
        %v3733 = vsel %vm1780, %v3721, 0.0
        %v3734 = vmax.f32 %v3698, %v3722
        %v3735 = vmax.f32 %v3699, %v3723
        %v3736 = vmax.f32 %v3700, %v3732
        %v3737 = vmax.f32 %v3701, %v3724
        %v3738 = vmax.f32 %v3702, %v3725
        %v3739 = vmax.f32 %v3703, %v3733
        %3746 = vrot.lane.b32.xlu0 %v3734, 126
        %v3747 = vpop.permute.xlu0 %3746
        %3748 = vrot.lane.b32.xlu0 %v3735, 126
        %v3749 = vpop.permute.xlu0 %3748
        %3750 = vrot.lane.b32.xlu0 %v3736, 126
        %v3751 = vpop.permute.xlu0 %3750
        %3752 = vrot.lane.b32.xlu0 %v3737, 126
        %v3753 = vpop.permute.xlu0 %3752
        %3754 = vrot.lane.b32.xlu0 %v3738, 126
        %v3755 = vpop.permute.xlu0 %3754
        %3756 = vrot.lane.b32.xlu0 %v3739, 126
        %v3757 = vpop.permute.xlu0 %3756
        %v3758 = vsel %vm448, %v3747, %v3749
        %v3759 = vsel %vm448, %v3749, %v3751
        %v3760 = vsel %vm448, %v3753, %v3755
        %v3761 = vsel %vm448, %v3755, %v3757
        %vm3768 = vcmask 506880
        %v3769 = vsel %vm3768, %v3751, 0.0
        %v3770 = vsel %vm3768, %v3757, 0.0
        %v3771 = vmax.f32 %v3734, %v3758
        %v3772 = vmax.f32 %v3735, %v3759
        %v3773 = vmax.f32 %v3736, %v3769
        %v3774 = vmax.f32 %v3737, %v3760
        %v3775 = vmax.f32 %v3738, %v3761
        %v3776 = vmax.f32 %v3739, %v3770
        %3779 = vrot.lane.b32.xlu0 %v3771, 84
        %v3780 = vpop.permute.xlu0 %3779
        %3781 = vrot.lane.b32.xlu0 %v3774, 84
        %v3782 = vpop.permute.xlu0 %3781
        %3787 = vrot.lane.b32.xlu0 %v3772, 40
        %v3788 = vpop.permute.xlu0 %3787
        %3789 = vrot.lane.b32.xlu0 %v3775, 40
        %v3790 = vpop.permute.xlu0 %3789
        %3793 = vrot.lane.b32.xlu0 %v3772, 124
        %v3794 = vpop.permute.xlu0 %3793
        %3795 = vrot.lane.b32.xlu0 %v3775, 124
        %v3796 = vpop.permute.xlu0 %3795
        %3801 = vrot.lane.b32.xlu0 %v3773, 80
        %v3802 = vpop.permute.xlu0 %3801
        %3803 = vrot.lane.b32.xlu0 %v3776, 80
        %v3804 = vpop.permute.xlu0 %3803
        %vm3807 = vcmask 162816
        %v3808 = vsel %vm3807, %v3771, %v3780
        %v3809 = vsel %vm3807, %v3774, %v3782
        %v3810 = vsel %vm679, %v3808, %v3788
        %v3811 = vsel %vm679, %v3809, %v3790
        %vm3812 = vcmask 490496
        %v3813 = vsel %vm3812, %v3810, %v3794
        %v3814 = vsel %vm3812, %v3811, %v3796
        %vm3815 = vcmask 654336
        %v3816 = vsel %vm3815, %v3813, %v3802
        %v3817 = vsel %vm3815, %v3814, %v3804
        %vm3818 = vcmask 818176
        %3819 = vst.msk [vmem:[#allocation2] sm:$0xff] %vm3818, %v3816
        %3820 = vst.msk [vmem:[#allocation2 + $0x8] sm:$0xff] %vm3818, %v3817
        %v3821 = vld [vmem:[%s6] sm:$0x1]
        %v3822 = vadd.f32 %v3821, 0.0
        %v3823 = vld [vmem:[#allocation2] sm:$0x1]
        %v3824 = vld [vmem:[%s5] sm:$0xff]
        %v3825 = vld [vmem:[%s5 + $0x8] sm:$0xff]
        %v3826 = vld [vmem:[%s5 + $0x10] sm:$0xff]
        %v3827 = vld [vmem:[%s5 + $0x18] sm:$0xff]
        %v3828 = vld [vmem:[%s5 + $0x20] sm:$0xff]
        %v3829 = vld [vmem:[%s5 + $0x28] sm:$0xff]
        %v3830 = vld [vmem:[%s5 + $0x30] sm:$0xff]
        %v3831 = vld [vmem:[%s5 + $0x38] sm:$0xff]
        %v3832 = vld [vmem:[%s5 + $0x40] sm:$0xff]
        %v3833 = vld [vmem:[%s5 + $0x48] sm:$0xff]
        %v3834 = vld [vmem:[%s5 + $0x50] sm:$0xff]
        %v3835 = vld [vmem:[%s5 + $0x58] sm:$0xff]
        %v3836 = vld [vmem:[%s5 + $0x60] sm:$0xf]
        %v3838 = vsel %vm3818, %v3823, 0
        %vm3840 = vcmask 1043456
        %v3842 = vsel %vm3840, %v3836, 0
        %3844 = vmatprep.subr.mxu0 0.0
        %3845 = vmatpush1.msra.mxu0 %v3824
        %3846 = vmatprep.subr.mxu0 0.0
        %3847 = vmatpush1.msra.mxu0 %v3825
        %3848 = vmatprep.subr.mxu0 0.0
        %3849 = vmatpush1.msra.mxu0 %v3826
        %3850 = vmatprep.subr.mxu0 0.0
        %3851 = vmatpush1.msra.mxu0 %v3827
        %3852 = vmatprep.subr.mxu0 0.0
        %3853 = vmatpush1.msra.mxu0 %v3828
        %3854 = vmatprep.subr.mxu0 0.0
        %3855 = vmatpush1.msra.mxu0 %v3829
        %3856 = vmatprep.subr.mxu0 0.0
        %3857 = vmatpush1.msra.mxu0 %v3830
        %3858 = vmatprep.subr.mxu0 0.0
        %3859 = vmatpush1.msra.mxu0 %v3831
        %3860 = vmatprep.subr.mxu0 0.0
        %3861 = vmatpush1.msra.mxu0 %v3832
        %3862 = vmatprep.subr.mxu0 0.0
        %3863 = vmatpush1.msra.mxu0 %v3833
        %3864 = vmatprep.subr.mxu0 0.0
        %3865 = vmatpush1.msra.mxu0 %v3834
        %3866 = vmatprep.subr.mxu0 0.0
        %3867 = vmatpush1.msra.mxu0 %v3835
        %3868 = vmatprep.subr.mxu0 0.0
        %3869 = vmatpush1.msra.mxu0 %v3842
        %3870 = vmatprep.subr.mxu0 0.0
        %3871 = vmatpush1.msra.mxu0 0.0
        %3872 = vmatprep.subr.mxu0 0.0
        %3873 = vmatpush1.msra.mxu0 0.0
        %3874 = vmatprep.subr.mxu0 0.0
        %3875 = vmatpush1.msra.mxu0 0.0
        %3876 = vmatprep.subr.mxu0 0.0
        %3877 = vmatpush1.msra.mxu0 0.0
        %3878 = vmatprep.subr.mxu0 0.0
        %3879 = vmatpush1.msra.mxu0 0.0
        %3880 = vmatprep.subr.mxu0 0.0
        %3881 = vmatpush1.msra.mxu0 0.0
        %3882 = vmatprep.subr.mxu0 0.0
        %3883 = vmatpush1.msra.mxu0 0.0
        %3884 = vmatprep.subr.mxu0 0.0
        %3885 = vmatpush1.msra.mxu0 0.0
        %3886 = vmatprep.subr.mxu0 0.0
        %3887 = vmatpush1.msra.mxu0 0.0
        %3888 = vmatprep.subr.mxu0 0.0
        %3889 = vmatpush1.msra.mxu0 0.0
        %3890 = vmatprep.subr.mxu0 0.0
        %3891 = vmatpush1.msra.mxu0 0.0
        %3892 = vmatprep.subr.mxu0 0.0
        %3893 = vmatpush1.msra.mxu0 0.0
        %3894 = vmatprep.subr.mxu0 0.0
        %3895 = vmatpush1.msra.mxu0 0.0
        %3896 = vmatprep.subr.mxu0 0.0
        %3897 = vmatpush1.msra.mxu0 0.0
        %3898 = vmatprep.subr.mxu0 0.0
        %3899 = vmatpush1.msra.mxu0 0.0
        %3900 = vmatprep.subr.mxu0 0.0
        %3901 = vmatpush1.msra.mxu0 0.0
        %3902 = vmatprep.subr.mxu0 0.0
        %3903 = vmatpush1.msra.mxu0 0.0
        %3904 = vmatprep.subr.mxu0 0.0
        %3905 = vmatpush1.msra.mxu0 0.0
        %3906 = vmatprep.subr.mxu0 0.0
        %3907 = vmatpush1.msra.mxu0 0.0
        %3908 = vmatprep.mubr.f32.mxu0 0.0
        %3909 = vmatmul.mubr.f32.gmra.mrb[0].mxu0 %v3838
        %v3910 = vpop.f32.mrb[0].mxu0
        %v3911 = vadd.f32 0.0, %v3910
        %v3912 = vpop.f32.mrb[0].mxu0
        %3913 = vdwg.mxu0
        %v3914 = vadd.f32 %v3822, %v3911
        %v3915 = vld [vmem:[#allocation2 + $0x1] sm:$0x1]
        %s3916 = scalar_lea.vmem %s5, 104
        %v3917 = vld [vmem:[%s3916] sm:$0xff]
        %v3918 = vld [vmem:[%s3916 + $0x8] sm:$0xff]
        %v3919 = vld [vmem:[%s3916 + $0x10] sm:$0xff]
        %v3920 = vld [vmem:[%s3916 + $0x18] sm:$0xff]
        %v3921 = vld [vmem:[%s3916 + $0x20] sm:$0xff]
        %v3922 = vld [vmem:[%s3916 + $0x28] sm:$0xff]
        %v3923 = vld [vmem:[%s3916 + $0x30] sm:$0xff]
        %v3924 = vld [vmem:[%s3916 + $0x38] sm:$0xff]
        %v3925 = vld [vmem:[%s3916 + $0x40] sm:$0xff]
        %v3926 = vld [vmem:[%s3916 + $0x48] sm:$0xff]
        %v3927 = vld [vmem:[%s3916 + $0x50] sm:$0xff]
        %v3928 = vld [vmem:[%s3916 + $0x58] sm:$0xff]
        %v3929 = vld [vmem:[%s3916 + $0x60] sm:$0xf]
        %v3931 = vsel %vm3818, %v3915, 0
        %v3934 = vsel %vm3840, %v3929, 0
        %3936 = vmatprep.subr.mxu0 0.0
        %3937 = vmatpush1.msra.mxu0 %v3917
        %3938 = vmatprep.subr.mxu0 0.0
        %3939 = vmatpush1.msra.mxu0 %v3918
        %3940 = vmatprep.subr.mxu0 0.0
        %3941 = vmatpush1.msra.mxu0 %v3919
        %3942 = vmatprep.subr.mxu0 0.0
        %3943 = vmatpush1.msra.mxu0 %v3920
        %3944 = vmatprep.subr.mxu0 0.0
        %3945 = vmatpush1.msra.mxu0 %v3921
        %3946 = vmatprep.subr.mxu0 0.0
        %3947 = vmatpush1.msra.mxu0 %v3922
        %3948 = vmatprep.subr.mxu0 0.0
        %3949 = vmatpush1.msra.mxu0 %v3923
        %3950 = vmatprep.subr.mxu0 0.0
        %3951 = vmatpush1.msra.mxu0 %v3924
        %3952 = vmatprep.subr.mxu0 0.0
        %3953 = vmatpush1.msra.mxu0 %v3925
        %3954 = vmatprep.subr.mxu0 0.0
        %3955 = vmatpush1.msra.mxu0 %v3926
        %3956 = vmatprep.subr.mxu0 0.0
        %3957 = vmatpush1.msra.mxu0 %v3927
        %3958 = vmatprep.subr.mxu0 0.0
        %3959 = vmatpush1.msra.mxu0 %v3928
        %3960 = vmatprep.subr.mxu0 0.0
        %3961 = vmatpush1.msra.mxu0 %v3934
        %3962 = vmatprep.subr.mxu0 0.0
        %3963 = vmatpush1.msra.mxu0 0.0
        %3964 = vmatprep.subr.mxu0 0.0
        %3965 = vmatpush1.msra.mxu0 0.0
        %3966 = vmatprep.subr.mxu0 0.0
        %3967 = vmatpush1.msra.mxu0 0.0
        %3968 = vmatprep.subr.mxu0 0.0
        %3969 = vmatpush1.msra.mxu0 0.0
        %3970 = vmatprep.subr.mxu0 0.0
        %3971 = vmatpush1.msra.mxu0 0.0
        %3972 = vmatprep.subr.mxu0 0.0
        %3973 = vmatpush1.msra.mxu0 0.0
        %3974 = vmatprep.subr.mxu0 0.0
        %3975 = vmatpush1.msra.mxu0 0.0
        %3976 = vmatprep.subr.mxu0 0.0
        %3977 = vmatpush1.msra.mxu0 0.0
        %3978 = vmatprep.subr.mxu0 0.0
        %3979 = vmatpush1.msra.mxu0 0.0
        %3980 = vmatprep.subr.mxu0 0.0
        %3981 = vmatpush1.msra.mxu0 0.0
        %3982 = vmatprep.subr.mxu0 0.0
        %3983 = vmatpush1.msra.mxu0 0.0
        %3984 = vmatprep.subr.mxu0 0.0
        %3985 = vmatpush1.msra.mxu0 0.0
        %3986 = vmatprep.subr.mxu0 0.0
        %3987 = vmatpush1.msra.mxu0 0.0
        %3988 = vmatprep.subr.mxu0 0.0
        %3989 = vmatpush1.msra.mxu0 0.0
        %3990 = vmatprep.subr.mxu0 0.0
        %3991 = vmatpush1.msra.mxu0 0.0
        %3992 = vmatprep.subr.mxu0 0.0
        %3993 = vmatpush1.msra.mxu0 0.0
        %3994 = vmatprep.subr.mxu0 0.0
        %3995 = vmatpush1.msra.mxu0 0.0
        %3996 = vmatprep.subr.mxu0 0.0
        %3997 = vmatpush1.msra.mxu0 0.0
        %3998 = vmatprep.subr.mxu0 0.0
        %3999 = vmatpush1.msra.mxu0 0.0
        %4000 = vmatprep.mubr.f32.mxu0 0.0
        %4001 = vmatmul.mubr.f32.gmra.mrb[0].mxu0 %v3931
        %v4002 = vpop.f32.mrb[0].mxu0
        %v4003 = vadd.f32 0.0, %v4002
        %v4004 = vpop.f32.mrb[0].mxu0
        %4005 = vdwg.mxu0
        %v4006 = vadd.f32 %v3914, %v4003
        %v4007 = vld [vmem:[#allocation2 + $0x2] sm:$0x1]
        %s4008 = scalar_lea.vmem %s5, 208
        %v4009 = vld [vmem:[%s4008] sm:$0xff]
        %v4010 = vld [vmem:[%s4008 + $0x8] sm:$0xff]
        %v4011 = vld [vmem:[%s4008 + $0x10] sm:$0xff]
        %v4012 = vld [vmem:[%s4008 + $0x18] sm:$0xff]
        %v4013 = vld [vmem:[%s4008 + $0x20] sm:$0xff]
        %v4014 = vld [vmem:[%s4008 + $0x28] sm:$0xff]
        %v4015 = vld [vmem:[%s4008 + $0x30] sm:$0xff]
        %v4016 = vld [vmem:[%s4008 + $0x38] sm:$0xff]
        %v4017 = vld [vmem:[%s4008 + $0x40] sm:$0xff]
        %v4018 = vld [vmem:[%s4008 + $0x48] sm:$0xff]
        %v4019 = vld [vmem:[%s4008 + $0x50] sm:$0xff]
        %v4020 = vld [vmem:[%s4008 + $0x58] sm:$0xff]
        %v4021 = vld [vmem:[%s4008 + $0x60] sm:$0xf]
        %v4023 = vsel %vm3818, %v4007, 0
        %v4026 = vsel %vm3840, %v4021, 0
        %4028 = vmatprep.subr.mxu0 0.0
        %4029 = vmatpush1.msra.mxu0 %v4009
        %4030 = vmatprep.subr.mxu0 0.0
        %4031 = vmatpush1.msra.mxu0 %v4010
        %4032 = vmatprep.subr.mxu0 0.0
        %4033 = vmatpush1.msra.mxu0 %v4011
        %4034 = vmatprep.subr.mxu0 0.0
        %4035 = vmatpush1.msra.mxu0 %v4012
        %4036 = vmatprep.subr.mxu0 0.0
        %4037 = vmatpush1.msra.mxu0 %v4013
        %4038 = vmatprep.subr.mxu0 0.0
        %4039 = vmatpush1.msra.mxu0 %v4014
        %4040 = vmatprep.subr.mxu0 0.0
        %4041 = vmatpush1.msra.mxu0 %v4015
        %4042 = vmatprep.subr.mxu0 0.0
        %4043 = vmatpush1.msra.mxu0 %v4016
        %4044 = vmatprep.subr.mxu0 0.0
        %4045 = vmatpush1.msra.mxu0 %v4017
        %4046 = vmatprep.subr.mxu0 0.0
        %4047 = vmatpush1.msra.mxu0 %v4018
        %4048 = vmatprep.subr.mxu0 0.0
        %4049 = vmatpush1.msra.mxu0 %v4019
        %4050 = vmatprep.subr.mxu0 0.0
        %4051 = vmatpush1.msra.mxu0 %v4020
        %4052 = vmatprep.subr.mxu0 0.0
        %4053 = vmatpush1.msra.mxu0 %v4026
        %4054 = vmatprep.subr.mxu0 0.0
        %4055 = vmatpush1.msra.mxu0 0.0
        %4056 = vmatprep.subr.mxu0 0.0
        %4057 = vmatpush1.msra.mxu0 0.0
        %4058 = vmatprep.subr.mxu0 0.0
        %4059 = vmatpush1.msra.mxu0 0.0
        %4060 = vmatprep.subr.mxu0 0.0
        %4061 = vmatpush1.msra.mxu0 0.0
        %4062 = vmatprep.subr.mxu0 0.0
        %4063 = vmatpush1.msra.mxu0 0.0
        %4064 = vmatprep.subr.mxu0 0.0
        %4065 = vmatpush1.msra.mxu0 0.0
        %4066 = vmatprep.subr.mxu0 0.0
        %4067 = vmatpush1.msra.mxu0 0.0
        %4068 = vmatprep.subr.mxu0 0.0
        %4069 = vmatpush1.msra.mxu0 0.0
        %4070 = vmatprep.subr.mxu0 0.0
        %4071 = vmatpush1.msra.mxu0 0.0
        %4072 = vmatprep.subr.mxu0 0.0
        %4073 = vmatpush1.msra.mxu0 0.0
        %4074 = vmatprep.subr.mxu0 0.0
        %4075 = vmatpush1.msra.mxu0 0.0
        %4076 = vmatprep.subr.mxu0 0.0
        %4077 = vmatpush1.msra.mxu0 0.0
        %4078 = vmatprep.subr.mxu0 0.0
        %4079 = vmatpush1.msra.mxu0 0.0
        %4080 = vmatprep.subr.mxu0 0.0
        %4081 = vmatpush1.msra.mxu0 0.0
        %4082 = vmatprep.subr.mxu0 0.0
        %4083 = vmatpush1.msra.mxu0 0.0
        %4084 = vmatprep.subr.mxu0 0.0
        %4085 = vmatpush1.msra.mxu0 0.0
        %4086 = vmatprep.subr.mxu0 0.0
        %4087 = vmatpush1.msra.mxu0 0.0
        %4088 = vmatprep.subr.mxu0 0.0
        %4089 = vmatpush1.msra.mxu0 0.0
        %4090 = vmatprep.subr.mxu0 0.0
        %4091 = vmatpush1.msra.mxu0 0.0
        %4092 = vmatprep.mubr.f32.mxu0 0.0
        %4093 = vmatmul.mubr.f32.gmra.mrb[0].mxu0 %v4023
        %v4094 = vpop.f32.mrb[0].mxu0
        %v4095 = vadd.f32 0.0, %v4094
        %v4096 = vpop.f32.mrb[0].mxu0
        %4097 = vdwg.mxu0
        %v4098 = vadd.f32 %v4006, %v4095
        %v4099 = vld [vmem:[#allocation2 + $0x3] sm:$0x1]
        %s4100 = scalar_lea.vmem %s5, 312
        %v4101 = vld [vmem:[%s4100] sm:$0xff]
        %v4102 = vld [vmem:[%s4100 + $0x8] sm:$0xff]
        %v4103 = vld [vmem:[%s4100 + $0x10] sm:$0xff]
        %v4104 = vld [vmem:[%s4100 + $0x18] sm:$0xff]
        %v4105 = vld [vmem:[%s4100 + $0x20] sm:$0xff]
        %v4106 = vld [vmem:[%s4100 + $0x28] sm:$0xff]
        %v4107 = vld [vmem:[%s4100 + $0x30] sm:$0xff]
        %v4108 = vld [vmem:[%s4100 + $0x38] sm:$0xff]
        %v4109 = vld [vmem:[%s4100 + $0x40] sm:$0xff]
        %v4110 = vld [vmem:[%s4100 + $0x48] sm:$0xff]
        %v4111 = vld [vmem:[%s4100 + $0x50] sm:$0xff]
        %v4112 = vld [vmem:[%s4100 + $0x58] sm:$0xff]
        %v4113 = vld [vmem:[%s4100 + $0x60] sm:$0xf]
        %v4115 = vsel %vm3818, %v4099, 0
        %v4118 = vsel %vm3840, %v4113, 0
        %4120 = vmatprep.subr.mxu0 0.0
        %4121 = vmatpush1.msra.mxu0 %v4101
        %4122 = vmatprep.subr.mxu0 0.0
        %4123 = vmatpush1.msra.mxu0 %v4102
        %4124 = vmatprep.subr.mxu0 0.0
        %4125 = vmatpush1.msra.mxu0 %v4103
        %4126 = vmatprep.subr.mxu0 0.0
        %4127 = vmatpush1.msra.mxu0 %v4104
        %4128 = vmatprep.subr.mxu0 0.0
        %4129 = vmatpush1.msra.mxu0 %v4105
        %4130 = vmatprep.subr.mxu0 0.0
        %4131 = vmatpush1.msra.mxu0 %v4106
        %4132 = vmatprep.subr.mxu0 0.0
        %4133 = vmatpush1.msra.mxu0 %v4107
        %4134 = vmatprep.subr.mxu0 0.0
        %4135 = vmatpush1.msra.mxu0 %v4108
        %4136 = vmatprep.subr.mxu0 0.0
        %4137 = vmatpush1.msra.mxu0 %v4109
        %4138 = vmatprep.subr.mxu0 0.0
        %4139 = vmatpush1.msra.mxu0 %v4110
        %4140 = vmatprep.subr.mxu0 0.0
        %4141 = vmatpush1.msra.mxu0 %v4111
        %4142 = vmatprep.subr.mxu0 0.0
        %4143 = vmatpush1.msra.mxu0 %v4112
        %4144 = vmatprep.subr.mxu0 0.0
        %4145 = vmatpush1.msra.mxu0 %v4118
        %4146 = vmatprep.subr.mxu0 0.0
        %4147 = vmatpush1.msra.mxu0 0.0
        %4148 = vmatprep.subr.mxu0 0.0
        %4149 = vmatpush1.msra.mxu0 0.0
        %4150 = vmatprep.subr.mxu0 0.0
        %4151 = vmatpush1.msra.mxu0 0.0
        %4152 = vmatprep.subr.mxu0 0.0
        %4153 = vmatpush1.msra.mxu0 0.0
        %4154 = vmatprep.subr.mxu0 0.0
        %4155 = vmatpush1.msra.mxu0 0.0
        %4156 = vmatprep.subr.mxu0 0.0
        %4157 = vmatpush1.msra.mxu0 0.0
        %4158 = vmatprep.subr.mxu0 0.0
        %4159 = vmatpush1.msra.mxu0 0.0
        %4160 = vmatprep.subr.mxu0 0.0
        %4161 = vmatpush1.msra.mxu0 0.0
        %4162 = vmatprep.subr.mxu0 0.0
        %4163 = vmatpush1.msra.mxu0 0.0
        %4164 = vmatprep.subr.mxu0 0.0
        %4165 = vmatpush1.msra.mxu0 0.0
        %4166 = vmatprep.subr.mxu0 0.0
        %4167 = vmatpush1.msra.mxu0 0.0
        %4168 = vmatprep.subr.mxu0 0.0
        %4169 = vmatpush1.msra.mxu0 0.0
        %4170 = vmatprep.subr.mxu0 0.0
        %4171 = vmatpush1.msra.mxu0 0.0
        %4172 = vmatprep.subr.mxu0 0.0
        %4173 = vmatpush1.msra.mxu0 0.0
        %4174 = vmatprep.subr.mxu0 0.0
        %4175 = vmatpush1.msra.mxu0 0.0
        %4176 = vmatprep.subr.mxu0 0.0
        %4177 = vmatpush1.msra.mxu0 0.0
        %4178 = vmatprep.subr.mxu0 0.0
        %4179 = vmatpush1.msra.mxu0 0.0
        %4180 = vmatprep.subr.mxu0 0.0
        %4181 = vmatpush1.msra.mxu0 0.0
        %4182 = vmatprep.subr.mxu0 0.0
        %4183 = vmatpush1.msra.mxu0 0.0
        %4184 = vmatprep.mubr.f32.mxu0 0.0
        %4185 = vmatmul.mubr.f32.gmra.mrb[0].mxu0 %v4115
        %v4186 = vpop.f32.mrb[0].mxu0
        %v4187 = vadd.f32 0.0, %v4186
        %v4188 = vpop.f32.mrb[0].mxu0
        %4189 = vdwg.mxu0
        %v4190 = vadd.f32 %v4098, %v4187
        %v4191 = vld [vmem:[#allocation2 + $0x4] sm:$0x1]
        %s4192 = scalar_lea.vmem %s5, 416
        %v4193 = vld [vmem:[%s4192] sm:$0xff]
        %v4194 = vld [vmem:[%s4192 + $0x8] sm:$0xff]
        %v4195 = vld [vmem:[%s4192 + $0x10] sm:$0xff]
        %v4196 = vld [vmem:[%s4192 + $0x18] sm:$0xff]
        %v4197 = vld [vmem:[%s4192 + $0x20] sm:$0xff]
        %v4198 = vld [vmem:[%s4192 + $0x28] sm:$0xff]
        %v4199 = vld [vmem:[%s4192 + $0x30] sm:$0xff]
        %v4200 = vld [vmem:[%s4192 + $0x38] sm:$0xff]
        %v4201 = vld [vmem:[%s4192 + $0x40] sm:$0xff]
        %v4202 = vld [vmem:[%s4192 + $0x48] sm:$0xff]
        %v4203 = vld [vmem:[%s4192 + $0x50] sm:$0xff]
        %v4204 = vld [vmem:[%s4192 + $0x58] sm:$0xff]
        %v4205 = vld [vmem:[%s4192 + $0x60] sm:$0xf]
        %v4207 = vsel %vm3818, %v4191, 0
        %v4210 = vsel %vm3840, %v4205, 0
        %4212 = vmatprep.subr.mxu0 0.0
        %4213 = vmatpush1.msra.mxu0 %v4193
        %4214 = vmatprep.subr.mxu0 0.0
        %4215 = vmatpush1.msra.mxu0 %v4194
        %4216 = vmatprep.subr.mxu0 0.0
        %4217 = vmatpush1.msra.mxu0 %v4195
        %4218 = vmatprep.subr.mxu0 0.0
        %4219 = vmatpush1.msra.mxu0 %v4196
        %4220 = vmatprep.subr.mxu0 0.0
        %4221 = vmatpush1.msra.mxu0 %v4197
        %4222 = vmatprep.subr.mxu0 0.0
        %4223 = vmatpush1.msra.mxu0 %v4198
        %4224 = vmatprep.subr.mxu0 0.0
        %4225 = vmatpush1.msra.mxu0 %v4199
        %4226 = vmatprep.subr.mxu0 0.0
        %4227 = vmatpush1.msra.mxu0 %v4200
        %4228 = vmatprep.subr.mxu0 0.0
        %4229 = vmatpush1.msra.mxu0 %v4201
        %4230 = vmatprep.subr.mxu0 0.0
        %4231 = vmatpush1.msra.mxu0 %v4202
        %4232 = vmatprep.subr.mxu0 0.0
        %4233 = vmatpush1.msra.mxu0 %v4203
        %4234 = vmatprep.subr.mxu0 0.0
        %4235 = vmatpush1.msra.mxu0 %v4204
        %4236 = vmatprep.subr.mxu0 0.0
        %4237 = vmatpush1.msra.mxu0 %v4210
        %4238 = vmatprep.subr.mxu0 0.0
        %4239 = vmatpush1.msra.mxu0 0.0
        %4240 = vmatprep.subr.mxu0 0.0
        %4241 = vmatpush1.msra.mxu0 0.0
        %4242 = vmatprep.subr.mxu0 0.0
        %4243 = vmatpush1.msra.mxu0 0.0
        %4244 = vmatprep.subr.mxu0 0.0
        %4245 = vmatpush1.msra.mxu0 0.0
        %4246 = vmatprep.subr.mxu0 0.0
        %4247 = vmatpush1.msra.mxu0 0.0
        %4248 = vmatprep.subr.mxu0 0.0
        %4249 = vmatpush1.msra.mxu0 0.0
        %4250 = vmatprep.subr.mxu0 0.0
        %4251 = vmatpush1.msra.mxu0 0.0
        %4252 = vmatprep.subr.mxu0 0.0
        %4253 = vmatpush1.msra.mxu0 0.0
        %4254 = vmatprep.subr.mxu0 0.0
        %4255 = vmatpush1.msra.mxu0 0.0
        %4256 = vmatprep.subr.mxu0 0.0
        %4257 = vmatpush1.msra.mxu0 0.0
        %4258 = vmatprep.subr.mxu0 0.0
        %4259 = vmatpush1.msra.mxu0 0.0
        %4260 = vmatprep.subr.mxu0 0.0
        %4261 = vmatpush1.msra.mxu0 0.0
        %4262 = vmatprep.subr.mxu0 0.0
        %4263 = vmatpush1.msra.mxu0 0.0
        %4264 = vmatprep.subr.mxu0 0.0
        %4265 = vmatpush1.msra.mxu0 0.0
        %4266 = vmatprep.subr.mxu0 0.0
        %4267 = vmatpush1.msra.mxu0 0.0
        %4268 = vmatprep.subr.mxu0 0.0
        %4269 = vmatpush1.msra.mxu0 0.0
        %4270 = vmatprep.subr.mxu0 0.0
        %4271 = vmatpush1.msra.mxu0 0.0
        %4272 = vmatprep.subr.mxu0 0.0
        %4273 = vmatpush1.msra.mxu0 0.0
        %4274 = vmatprep.subr.mxu0 0.0
        %4275 = vmatpush1.msra.mxu0 0.0
        %4276 = vmatprep.mubr.f32.mxu0 0.0
        %4277 = vmatmul.mubr.f32.gmra.mrb[0].mxu0 %v4207
        %v4278 = vpop.f32.mrb[0].mxu0
        %v4279 = vadd.f32 0.0, %v4278
        %v4280 = vpop.f32.mrb[0].mxu0
        %4281 = vdwg.mxu0
        %v4282 = vadd.f32 %v4190, %v4279
        %v4283 = vld [vmem:[#allocation2 + $0x5] sm:$0x1]
        %s4284 = scalar_lea.vmem %s5, 520
        %v4285 = vld [vmem:[%s4284] sm:$0xff]
        %v4286 = vld [vmem:[%s4284 + $0x8] sm:$0xff]
        %v4287 = vld [vmem:[%s4284 + $0x10] sm:$0xff]
        %v4288 = vld [vmem:[%s4284 + $0x18] sm:$0xff]
        %v4289 = vld [vmem:[%s4284 + $0x20] sm:$0xff]
        %v4290 = vld [vmem:[%s4284 + $0x28] sm:$0xff]
        %v4291 = vld [vmem:[%s4284 + $0x30] sm:$0xff]
        %v4292 = vld [vmem:[%s4284 + $0x38] sm:$0xff]
        %v4293 = vld [vmem:[%s4284 + $0x40] sm:$0xff]
        %v4294 = vld [vmem:[%s4284 + $0x48] sm:$0xff]
        %v4295 = vld [vmem:[%s4284 + $0x50] sm:$0xff]
        %v4296 = vld [vmem:[%s4284 + $0x58] sm:$0xff]
        %v4297 = vld [vmem:[%s4284 + $0x60] sm:$0xf]
        %v4299 = vsel %vm3818, %v4283, 0
        %v4302 = vsel %vm3840, %v4297, 0
        %4304 = vmatprep.subr.mxu0 0.0
        %4305 = vmatpush1.msra.mxu0 %v4285
        %4306 = vmatprep.subr.mxu0 0.0
        %4307 = vmatpush1.msra.mxu0 %v4286
        %4308 = vmatprep.subr.mxu0 0.0
        %4309 = vmatpush1.msra.mxu0 %v4287
        %4310 = vmatprep.subr.mxu0 0.0
        %4311 = vmatpush1.msra.mxu0 %v4288
        %4312 = vmatprep.subr.mxu0 0.0
        %4313 = vmatpush1.msra.mxu0 %v4289
        %4314 = vmatprep.subr.mxu0 0.0
        %4315 = vmatpush1.msra.mxu0 %v4290
        %4316 = vmatprep.subr.mxu0 0.0
        %4317 = vmatpush1.msra.mxu0 %v4291
        %4318 = vmatprep.subr.mxu0 0.0
        %4319 = vmatpush1.msra.mxu0 %v4292
        %4320 = vmatprep.subr.mxu0 0.0
        %4321 = vmatpush1.msra.mxu0 %v4293
        %4322 = vmatprep.subr.mxu0 0.0
        %4323 = vmatpush1.msra.mxu0 %v4294
        %4324 = vmatprep.subr.mxu0 0.0
        %4325 = vmatpush1.msra.mxu0 %v4295
        %4326 = vmatprep.subr.mxu0 0.0
        %4327 = vmatpush1.msra.mxu0 %v4296
        %4328 = vmatprep.subr.mxu0 0.0
        %4329 = vmatpush1.msra.mxu0 %v4302
        %4330 = vmatprep.subr.mxu0 0.0
        %4331 = vmatpush1.msra.mxu0 0.0
        %4332 = vmatprep.subr.mxu0 0.0
        %4333 = vmatpush1.msra.mxu0 0.0
        %4334 = vmatprep.subr.mxu0 0.0
        %4335 = vmatpush1.msra.mxu0 0.0
        %4336 = vmatprep.subr.mxu0 0.0
        %4337 = vmatpush1.msra.mxu0 0.0
        %4338 = vmatprep.subr.mxu0 0.0
        %4339 = vmatpush1.msra.mxu0 0.0
        %4340 = vmatprep.subr.mxu0 0.0
        %4341 = vmatpush1.msra.mxu0 0.0
        %4342 = vmatprep.subr.mxu0 0.0
        %4343 = vmatpush1.msra.mxu0 0.0
        %4344 = vmatprep.subr.mxu0 0.0
        %4345 = vmatpush1.msra.mxu0 0.0
        %4346 = vmatprep.subr.mxu0 0.0
        %4347 = vmatpush1.msra.mxu0 0.0
        %4348 = vmatprep.subr.mxu0 0.0
        %4349 = vmatpush1.msra.mxu0 0.0
        %4350 = vmatprep.subr.mxu0 0.0
        %4351 = vmatpush1.msra.mxu0 0.0
        %4352 = vmatprep.subr.mxu0 0.0
        %4353 = vmatpush1.msra.mxu0 0.0
        %4354 = vmatprep.subr.mxu0 0.0
        %4355 = vmatpush1.msra.mxu0 0.0
        %4356 = vmatprep.subr.mxu0 0.0
        %4357 = vmatpush1.msra.mxu0 0.0
        %4358 = vmatprep.subr.mxu0 0.0
        %4359 = vmatpush1.msra.mxu0 0.0
        %4360 = vmatprep.subr.mxu0 0.0
        %4361 = vmatpush1.msra.mxu0 0.0
        %4362 = vmatprep.subr.mxu0 0.0
        %4363 = vmatpush1.msra.mxu0 0.0
        %4364 = vmatprep.subr.mxu0 0.0
        %4365 = vmatpush1.msra.mxu0 0.0
        %4366 = vmatprep.subr.mxu0 0.0
        %4367 = vmatpush1.msra.mxu0 0.0
        %4368 = vmatprep.mubr.f32.mxu0 0.0
        %4369 = vmatmul.mubr.f32.gmra.mrb[0].mxu0 %v4299
        %v4370 = vpop.f32.mrb[0].mxu0
        %v4371 = vadd.f32 0.0, %v4370
        %v4372 = vpop.f32.mrb[0].mxu0
        %4373 = vdwg.mxu0
        %v4374 = vadd.f32 %v4282, %v4371
        %v4375 = vld [vmem:[#allocation2 + $0x6] sm:$0x1]
        %s4376 = scalar_lea.vmem %s5, 624
        %v4377 = vld [vmem:[%s4376] sm:$0xff]
        %v4378 = vld [vmem:[%s4376 + $0x8] sm:$0xff]
        %v4379 = vld [vmem:[%s4376 + $0x10] sm:$0xff]
        %v4380 = vld [vmem:[%s4376 + $0x18] sm:$0xff]
        %v4381 = vld [vmem:[%s4376 + $0x20] sm:$0xff]
        %v4382 = vld [vmem:[%s4376 + $0x28] sm:$0xff]
        %v4383 = vld [vmem:[%s4376 + $0x30] sm:$0xff]
        %v4384 = vld [vmem:[%s4376 + $0x38] sm:$0xff]
        %v4385 = vld [vmem:[%s4376 + $0x40] sm:$0xff]
        %v4386 = vld [vmem:[%s4376 + $0x48] sm:$0xff]
        %v4387 = vld [vmem:[%s4376 + $0x50] sm:$0xff]
        %v4388 = vld [vmem:[%s4376 + $0x58] sm:$0xff]
        %v4389 = vld [vmem:[%s4376 + $0x60] sm:$0xf]
        %v4391 = vsel %vm3818, %v4375, 0
        %v4394 = vsel %vm3840, %v4389, 0
        %4396 = vmatprep.subr.mxu0 0.0
        %4397 = vmatpush1.msra.mxu0 %v4377
        %4398 = vmatprep.subr.mxu0 0.0
        %4399 = vmatpush1.msra.mxu0 %v4378
        %4400 = vmatprep.subr.mxu0 0.0
        %4401 = vmatpush1.msra.mxu0 %v4379
        %4402 = vmatprep.subr.mxu0 0.0
        %4403 = vmatpush1.msra.mxu0 %v4380
        %4404 = vmatprep.subr.mxu0 0.0
        %4405 = vmatpush1.msra.mxu0 %v4381
        %4406 = vmatprep.subr.mxu0 0.0
        %4407 = vmatpush1.msra.mxu0 %v4382
        %4408 = vmatprep.subr.mxu0 0.0
        %4409 = vmatpush1.msra.mxu0 %v4383
        %4410 = vmatprep.subr.mxu0 0.0
        %4411 = vmatpush1.msra.mxu0 %v4384
        %4412 = vmatprep.subr.mxu0 0.0
        %4413 = vmatpush1.msra.mxu0 %v4385
        %4414 = vmatprep.subr.mxu0 0.0
        %4415 = vmatpush1.msra.mxu0 %v4386
        %4416 = vmatprep.subr.mxu0 0.0
        %4417 = vmatpush1.msra.mxu0 %v4387
        %4418 = vmatprep.subr.mxu0 0.0
        %4419 = vmatpush1.msra.mxu0 %v4388
        %4420 = vmatprep.subr.mxu0 0.0
        %4421 = vmatpush1.msra.mxu0 %v4394
        %4422 = vmatprep.subr.mxu0 0.0
        %4423 = vmatpush1.msra.mxu0 0.0
        %4424 = vmatprep.subr.mxu0 0.0
        %4425 = vmatpush1.msra.mxu0 0.0
        %4426 = vmatprep.subr.mxu0 0.0
        %4427 = vmatpush1.msra.mxu0 0.0
        %4428 = vmatprep.subr.mxu0 0.0
        %4429 = vmatpush1.msra.mxu0 0.0
        %4430 = vmatprep.subr.mxu0 0.0
        %4431 = vmatpush1.msra.mxu0 0.0
        %4432 = vmatprep.subr.mxu0 0.0
        %4433 = vmatpush1.msra.mxu0 0.0
        %4434 = vmatprep.subr.mxu0 0.0
        %4435 = vmatpush1.msra.mxu0 0.0
        %4436 = vmatprep.subr.mxu0 0.0
        %4437 = vmatpush1.msra.mxu0 0.0
        %4438 = vmatprep.subr.mxu0 0.0
        %4439 = vmatpush1.msra.mxu0 0.0
        %4440 = vmatprep.subr.mxu0 0.0
        %4441 = vmatpush1.msra.mxu0 0.0
        %4442 = vmatprep.subr.mxu0 0.0
        %4443 = vmatpush1.msra.mxu0 0.0
        %4444 = vmatprep.subr.mxu0 0.0
        %4445 = vmatpush1.msra.mxu0 0.0
        %4446 = vmatprep.subr.mxu0 0.0
        %4447 = vmatpush1.msra.mxu0 0.0
        %4448 = vmatprep.subr.mxu0 0.0
        %4449 = vmatpush1.msra.mxu0 0.0
        %4450 = vmatprep.subr.mxu0 0.0
        %4451 = vmatpush1.msra.mxu0 0.0
        %4452 = vmatprep.subr.mxu0 0.0
        %4453 = vmatpush1.msra.mxu0 0.0
        %4454 = vmatprep.subr.mxu0 0.0
        %4455 = vmatpush1.msra.mxu0 0.0
        %4456 = vmatprep.subr.mxu0 0.0
        %4457 = vmatpush1.msra.mxu0 0.0
        %4458 = vmatprep.subr.mxu0 0.0
        %4459 = vmatpush1.msra.mxu0 0.0
        %4460 = vmatprep.mubr.f32.mxu0 0.0
        %4461 = vmatmul.mubr.f32.gmra.mrb[0].mxu0 %v4391
        %v4462 = vpop.f32.mrb[0].mxu0
        %v4463 = vadd.f32 0.0, %v4462
        %v4464 = vpop.f32.mrb[0].mxu0
        %4465 = vdwg.mxu0
        %v4466 = vadd.f32 %v4374, %v4463
        %v4467 = vld [vmem:[#allocation2 + $0x7] sm:$0x1]
        %s4468 = scalar_lea.vmem %s5, 728
        %v4469 = vld [vmem:[%s4468] sm:$0xff]
        %v4470 = vld [vmem:[%s4468 + $0x8] sm:$0xff]
        %v4471 = vld [vmem:[%s4468 + $0x10] sm:$0xff]
        %v4472 = vld [vmem:[%s4468 + $0x18] sm:$0xff]
        %v4473 = vld [vmem:[%s4468 + $0x20] sm:$0xff]
        %v4474 = vld [vmem:[%s4468 + $0x28] sm:$0xff]
        %v4475 = vld [vmem:[%s4468 + $0x30] sm:$0xff]
        %v4476 = vld [vmem:[%s4468 + $0x38] sm:$0xff]
        %v4477 = vld [vmem:[%s4468 + $0x40] sm:$0xff]
        %v4478 = vld [vmem:[%s4468 + $0x48] sm:$0xff]
        %v4479 = vld [vmem:[%s4468 + $0x50] sm:$0xff]
        %v4480 = vld [vmem:[%s4468 + $0x58] sm:$0xff]
        %v4481 = vld [vmem:[%s4468 + $0x60] sm:$0xf]
        %v4483 = vsel %vm3818, %v4467, 0
        %v4486 = vsel %vm3840, %v4481, 0
        %4488 = vmatprep.subr.mxu0 0.0
        %4489 = vmatpush1.msra.mxu0 %v4469
        %4490 = vmatprep.subr.mxu0 0.0
        %4491 = vmatpush1.msra.mxu0 %v4470
        %4492 = vmatprep.subr.mxu0 0.0
        %4493 = vmatpush1.msra.mxu0 %v4471
        %4494 = vmatprep.subr.mxu0 0.0
        %4495 = vmatpush1.msra.mxu0 %v4472
        %4496 = vmatprep.subr.mxu0 0.0
        %4497 = vmatpush1.msra.mxu0 %v4473
        %4498 = vmatprep.subr.mxu0 0.0
        %4499 = vmatpush1.msra.mxu0 %v4474
        %4500 = vmatprep.subr.mxu0 0.0
        %4501 = vmatpush1.msra.mxu0 %v4475
        %4502 = vmatprep.subr.mxu0 0.0
        %4503 = vmatpush1.msra.mxu0 %v4476
        %4504 = vmatprep.subr.mxu0 0.0
        %4505 = vmatpush1.msra.mxu0 %v4477
        %4506 = vmatprep.subr.mxu0 0.0
        %4507 = vmatpush1.msra.mxu0 %v4478
        %4508 = vmatprep.subr.mxu0 0.0
        %4509 = vmatpush1.msra.mxu0 %v4479
        %4510 = vmatprep.subr.mxu0 0.0
        %4511 = vmatpush1.msra.mxu0 %v4480
        %4512 = vmatprep.subr.mxu0 0.0
        %4513 = vmatpush1.msra.mxu0 %v4486
        %4514 = vmatprep.subr.mxu0 0.0
        %4515 = vmatpush1.msra.mxu0 0.0
        %4516 = vmatprep.subr.mxu0 0.0
        %4517 = vmatpush1.msra.mxu0 0.0
        %4518 = vmatprep.subr.mxu0 0.0
        %4519 = vmatpush1.msra.mxu0 0.0
        %4520 = vmatprep.subr.mxu0 0.0
        %4521 = vmatpush1.msra.mxu0 0.0
        %4522 = vmatprep.subr.mxu0 0.0
        %4523 = vmatpush1.msra.mxu0 0.0
        %4524 = vmatprep.subr.mxu0 0.0
        %4525 = vmatpush1.msra.mxu0 0.0
        %4526 = vmatprep.subr.mxu0 0.0
        %4527 = vmatpush1.msra.mxu0 0.0
        %4528 = vmatprep.subr.mxu0 0.0
        %4529 = vmatpush1.msra.mxu0 0.0
        %4530 = vmatprep.subr.mxu0 0.0
        %4531 = vmatpush1.msra.mxu0 0.0
        %4532 = vmatprep.subr.mxu0 0.0
        %4533 = vmatpush1.msra.mxu0 0.0
        %4534 = vmatprep.subr.mxu0 0.0
        %4535 = vmatpush1.msra.mxu0 0.0
        %4536 = vmatprep.subr.mxu0 0.0
        %4537 = vmatpush1.msra.mxu0 0.0
        %4538 = vmatprep.subr.mxu0 0.0
        %4539 = vmatpush1.msra.mxu0 0.0
        %4540 = vmatprep.subr.mxu0 0.0
        %4541 = vmatpush1.msra.mxu0 0.0
        %4542 = vmatprep.subr.mxu0 0.0
        %4543 = vmatpush1.msra.mxu0 0.0
        %4544 = vmatprep.subr.mxu0 0.0
        %4545 = vmatpush1.msra.mxu0 0.0
        %4546 = vmatprep.subr.mxu0 0.0
        %4547 = vmatpush1.msra.mxu0 0.0
        %4548 = vmatprep.subr.mxu0 0.0
        %4549 = vmatpush1.msra.mxu0 0.0
        %4550 = vmatprep.subr.mxu0 0.0
        %4551 = vmatpush1.msra.mxu0 0.0
        %4552 = vmatprep.mubr.f32.mxu0 0.0
        %4553 = vmatmul.mubr.f32.gmra.mrb[0].mxu0 %v4483
        %v4554 = vpop.f32.mrb[0].mxu0
        %v4555 = vadd.f32 0.0, %v4554
        %v4556 = vpop.f32.mrb[0].mxu0
        %4557 = vdwg.mxu0
        %v4558 = vadd.f32 %v4466, %v4555
        %v4559 = vld [vmem:[#allocation2 + $0x8] sm:$0x1]
        %s4560 = scalar_lea.vmem %s5, 832
        %v4561 = vld [vmem:[%s4560] sm:$0xff]
        %v4562 = vld [vmem:[%s4560 + $0x8] sm:$0xff]
        %v4563 = vld [vmem:[%s4560 + $0x10] sm:$0xff]
        %v4564 = vld [vmem:[%s4560 + $0x18] sm:$0xff]
        %v4565 = vld [vmem:[%s4560 + $0x20] sm:$0xff]
        %v4566 = vld [vmem:[%s4560 + $0x28] sm:$0xff]
        %v4567 = vld [vmem:[%s4560 + $0x30] sm:$0xff]
        %v4568 = vld [vmem:[%s4560 + $0x38] sm:$0xff]
        %v4569 = vld [vmem:[%s4560 + $0x40] sm:$0xff]
        %v4570 = vld [vmem:[%s4560 + $0x48] sm:$0xff]
        %v4571 = vld [vmem:[%s4560 + $0x50] sm:$0xff]
        %v4572 = vld [vmem:[%s4560 + $0x58] sm:$0xff]
        %v4573 = vld [vmem:[%s4560 + $0x60] sm:$0xf]
        %v4575 = vsel %vm3818, %v4559, 0
        %v4578 = vsel %vm3840, %v4573, 0
        %4580 = vmatprep.subr.mxu0 0.0
        %4581 = vmatpush1.msra.mxu0 %v4561
        %4582 = vmatprep.subr.mxu0 0.0
        %4583 = vmatpush1.msra.mxu0 %v4562
        %4584 = vmatprep.subr.mxu0 0.0
        %4585 = vmatpush1.msra.mxu0 %v4563
        %4586 = vmatprep.subr.mxu0 0.0
        %4587 = vmatpush1.msra.mxu0 %v4564
        %4588 = vmatprep.subr.mxu0 0.0
        %4589 = vmatpush1.msra.mxu0 %v4565
        %4590 = vmatprep.subr.mxu0 0.0
        %4591 = vmatpush1.msra.mxu0 %v4566
        %4592 = vmatprep.subr.mxu0 0.0
        %4593 = vmatpush1.msra.mxu0 %v4567
        %4594 = vmatprep.subr.mxu0 0.0
        %4595 = vmatpush1.msra.mxu0 %v4568
        %4596 = vmatprep.subr.mxu0 0.0
        %4597 = vmatpush1.msra.mxu0 %v4569
        %4598 = vmatprep.subr.mxu0 0.0
        %4599 = vmatpush1.msra.mxu0 %v4570
        %4600 = vmatprep.subr.mxu0 0.0
        %4601 = vmatpush1.msra.mxu0 %v4571
        %4602 = vmatprep.subr.mxu0 0.0
        %4603 = vmatpush1.msra.mxu0 %v4572
        %4604 = vmatprep.subr.mxu0 0.0
        %4605 = vmatpush1.msra.mxu0 %v4578
        %4606 = vmatprep.subr.mxu0 0.0
        %4607 = vmatpush1.msra.mxu0 0.0
        %4608 = vmatprep.subr.mxu0 0.0
        %4609 = vmatpush1.msra.mxu0 0.0
        %4610 = vmatprep.subr.mxu0 0.0
        %4611 = vmatpush1.msra.mxu0 0.0
        %4612 = vmatprep.subr.mxu0 0.0
        %4613 = vmatpush1.msra.mxu0 0.0
        %4614 = vmatprep.subr.mxu0 0.0
        %4615 = vmatpush1.msra.mxu0 0.0
        %4616 = vmatprep.subr.mxu0 0.0
        %4617 = vmatpush1.msra.mxu0 0.0
        %4618 = vmatprep.subr.mxu0 0.0
        %4619 = vmatpush1.msra.mxu0 0.0
        %4620 = vmatprep.subr.mxu0 0.0
        %4621 = vmatpush1.msra.mxu0 0.0
        %4622 = vmatprep.subr.mxu0 0.0
        %4623 = vmatpush1.msra.mxu0 0.0
        %4624 = vmatprep.subr.mxu0 0.0
        %4625 = vmatpush1.msra.mxu0 0.0
        %4626 = vmatprep.subr.mxu0 0.0
        %4627 = vmatpush1.msra.mxu0 0.0
        %4628 = vmatprep.subr.mxu0 0.0
        %4629 = vmatpush1.msra.mxu0 0.0
        %4630 = vmatprep.subr.mxu0 0.0
        %4631 = vmatpush1.msra.mxu0 0.0
        %4632 = vmatprep.subr.mxu0 0.0
        %4633 = vmatpush1.msra.mxu0 0.0
        %4634 = vmatprep.subr.mxu0 0.0
        %4635 = vmatpush1.msra.mxu0 0.0
        %4636 = vmatprep.subr.mxu0 0.0
        %4637 = vmatpush1.msra.mxu0 0.0
        %4638 = vmatprep.subr.mxu0 0.0
        %4639 = vmatpush1.msra.mxu0 0.0
        %4640 = vmatprep.subr.mxu0 0.0
        %4641 = vmatpush1.msra.mxu0 0.0
        %4642 = vmatprep.subr.mxu0 0.0
        %4643 = vmatpush1.msra.mxu0 0.0
        %4644 = vmatprep.mubr.f32.mxu0 0.0
        %4645 = vmatmul.mubr.f32.gmra.mrb[0].mxu0 %v4575
        %v4646 = vpop.f32.mrb[0].mxu0
        %v4647 = vadd.f32 0.0, %v4646
        %v4648 = vpop.f32.mrb[0].mxu0
        %4649 = vdwg.mxu0
        %v4650 = vadd.f32 %v4558, %v4647
        %v4651 = vld [vmem:[#allocation2 + $0x9] sm:$0x1]
        %s4652 = scalar_lea.vmem %s5, 936
        %v4653 = vld [vmem:[%s4652] sm:$0xff]
        %v4654 = vld [vmem:[%s4652 + $0x8] sm:$0xff]
        %v4655 = vld [vmem:[%s4652 + $0x10] sm:$0xff]
        %v4656 = vld [vmem:[%s4652 + $0x18] sm:$0xff]
        %v4657 = vld [vmem:[%s4652 + $0x20] sm:$0xff]
        %v4658 = vld [vmem:[%s4652 + $0x28] sm:$0xff]
        %v4659 = vld [vmem:[%s4652 + $0x30] sm:$0xff]
        %v4660 = vld [vmem:[%s4652 + $0x38] sm:$0xff]
        %v4661 = vld [vmem:[%s4652 + $0x40] sm:$0xff]
        %v4662 = vld [vmem:[%s4652 + $0x48] sm:$0xff]
        %v4663 = vld [vmem:[%s4652 + $0x50] sm:$0xff]
        %v4664 = vld [vmem:[%s4652 + $0x58] sm:$0xff]
        %v4665 = vld [vmem:[%s4652 + $0x60] sm:$0xf]
        %v4667 = vsel %vm3818, %v4651, 0
        %v4670 = vsel %vm3840, %v4665, 0
        %4672 = vmatprep.subr.mxu0 0.0
        %4673 = vmatpush1.msra.mxu0 %v4653
        %4674 = vmatprep.subr.mxu0 0.0
        %4675 = vmatpush1.msra.mxu0 %v4654
        %4676 = vmatprep.subr.mxu0 0.0
        %4677 = vmatpush1.msra.mxu0 %v4655
        %4678 = vmatprep.subr.mxu0 0.0
        %4679 = vmatpush1.msra.mxu0 %v4656
        %4680 = vmatprep.subr.mxu0 0.0
        %4681 = vmatpush1.msra.mxu0 %v4657
        %4682 = vmatprep.subr.mxu0 0.0
        %4683 = vmatpush1.msra.mxu0 %v4658
        %4684 = vmatprep.subr.mxu0 0.0
        %4685 = vmatpush1.msra.mxu0 %v4659
        %4686 = vmatprep.subr.mxu0 0.0
        %4687 = vmatpush1.msra.mxu0 %v4660
        %4688 = vmatprep.subr.mxu0 0.0
        %4689 = vmatpush1.msra.mxu0 %v4661
        %4690 = vmatprep.subr.mxu0 0.0
        %4691 = vmatpush1.msra.mxu0 %v4662
        %4692 = vmatprep.subr.mxu0 0.0
        %4693 = vmatpush1.msra.mxu0 %v4663
        %4694 = vmatprep.subr.mxu0 0.0
        %4695 = vmatpush1.msra.mxu0 %v4664
        %4696 = vmatprep.subr.mxu0 0.0
        %4697 = vmatpush1.msra.mxu0 %v4670
        %4698 = vmatprep.subr.mxu0 0.0
        %4699 = vmatpush1.msra.mxu0 0.0
        %4700 = vmatprep.subr.mxu0 0.0
        %4701 = vmatpush1.msra.mxu0 0.0
        %4702 = vmatprep.subr.mxu0 0.0
        %4703 = vmatpush1.msra.mxu0 0.0
        %4704 = vmatprep.subr.mxu0 0.0
        %4705 = vmatpush1.msra.mxu0 0.0
        %4706 = vmatprep.subr.mxu0 0.0
        %4707 = vmatpush1.msra.mxu0 0.0
        %4708 = vmatprep.subr.mxu0 0.0
        %4709 = vmatpush1.msra.mxu0 0.0
        %4710 = vmatprep.subr.mxu0 0.0
        %4711 = vmatpush1.msra.mxu0 0.0
        %4712 = vmatprep.subr.mxu0 0.0
        %4713 = vmatpush1.msra.mxu0 0.0
        %4714 = vmatprep.subr.mxu0 0.0
        %4715 = vmatpush1.msra.mxu0 0.0
        %4716 = vmatprep.subr.mxu0 0.0
        %4717 = vmatpush1.msra.mxu0 0.0
        %4718 = vmatprep.subr.mxu0 0.0
        %4719 = vmatpush1.msra.mxu0 0.0
        %4720 = vmatprep.subr.mxu0 0.0
        %4721 = vmatpush1.msra.mxu0 0.0
        %4722 = vmatprep.subr.mxu0 0.0
        %4723 = vmatpush1.msra.mxu0 0.0
        %4724 = vmatprep.subr.mxu0 0.0
        %4725 = vmatpush1.msra.mxu0 0.0
        %4726 = vmatprep.subr.mxu0 0.0
        %4727 = vmatpush1.msra.mxu0 0.0
        %4728 = vmatprep.subr.mxu0 0.0
        %4729 = vmatpush1.msra.mxu0 0.0
        %4730 = vmatprep.subr.mxu0 0.0
        %4731 = vmatpush1.msra.mxu0 0.0
        %4732 = vmatprep.subr.mxu0 0.0
        %4733 = vmatpush1.msra.mxu0 0.0
        %4734 = vmatprep.subr.mxu0 0.0
        %4735 = vmatpush1.msra.mxu0 0.0
        %4736 = vmatprep.mubr.f32.mxu0 0.0
        %4737 = vmatmul.mubr.f32.gmra.mrb[0].mxu0 %v4667
        %v4738 = vpop.f32.mrb[0].mxu0
        %v4739 = vadd.f32 0.0, %v4738
        %v4740 = vpop.f32.mrb[0].mxu0
        %4741 = vdwg.mxu0
        %v4742 = vadd.f32 %v4650, %v4739
        %v4743 = vld [vmem:[#allocation2 + $0xa] sm:$0x1]
        %s4744 = scalar_lea.vmem %s5, 1040
        %v4745 = vld [vmem:[%s4744] sm:$0xff]
        %v4746 = vld [vmem:[%s4744 + $0x8] sm:$0xff]
        %v4747 = vld [vmem:[%s4744 + $0x10] sm:$0xff]
        %v4748 = vld [vmem:[%s4744 + $0x18] sm:$0xff]
        %v4749 = vld [vmem:[%s4744 + $0x20] sm:$0xff]
        %v4750 = vld [vmem:[%s4744 + $0x28] sm:$0xff]
        %v4751 = vld [vmem:[%s4744 + $0x30] sm:$0xff]
        %v4752 = vld [vmem:[%s4744 + $0x38] sm:$0xff]
        %v4753 = vld [vmem:[%s4744 + $0x40] sm:$0xff]
        %v4754 = vld [vmem:[%s4744 + $0x48] sm:$0xff]
        %v4755 = vld [vmem:[%s4744 + $0x50] sm:$0xff]
        %v4756 = vld [vmem:[%s4744 + $0x58] sm:$0xff]
        %v4757 = vld [vmem:[%s4744 + $0x60] sm:$0xf]
        %v4759 = vsel %vm3818, %v4743, 0
        %v4762 = vsel %vm3840, %v4757, 0
        %4764 = vmatprep.subr.mxu0 0.0
        %4765 = vmatpush1.msra.mxu0 %v4745
        %4766 = vmatprep.subr.mxu0 0.0
        %4767 = vmatpush1.msra.mxu0 %v4746
        %4768 = vmatprep.subr.mxu0 0.0
        %4769 = vmatpush1.msra.mxu0 %v4747
        %4770 = vmatprep.subr.mxu0 0.0
        %4771 = vmatpush1.msra.mxu0 %v4748
        %4772 = vmatprep.subr.mxu0 0.0
        %4773 = vmatpush1.msra.mxu0 %v4749
        %4774 = vmatprep.subr.mxu0 0.0
        %4775 = vmatpush1.msra.mxu0 %v4750
        %4776 = vmatprep.subr.mxu0 0.0
        %4777 = vmatpush1.msra.mxu0 %v4751
        %4778 = vmatprep.subr.mxu0 0.0
        %4779 = vmatpush1.msra.mxu0 %v4752
        %4780 = vmatprep.subr.mxu0 0.0
        %4781 = vmatpush1.msra.mxu0 %v4753
        %4782 = vmatprep.subr.mxu0 0.0
        %4783 = vmatpush1.msra.mxu0 %v4754
        %4784 = vmatprep.subr.mxu0 0.0
        %4785 = vmatpush1.msra.mxu0 %v4755
        %4786 = vmatprep.subr.mxu0 0.0
        %4787 = vmatpush1.msra.mxu0 %v4756
        %4788 = vmatprep.subr.mxu0 0.0
        %4789 = vmatpush1.msra.mxu0 %v4762
        %4790 = vmatprep.subr.mxu0 0.0
        %4791 = vmatpush1.msra.mxu0 0.0
        %4792 = vmatprep.subr.mxu0 0.0
        %4793 = vmatpush1.msra.mxu0 0.0
        %4794 = vmatprep.subr.mxu0 0.0
        %4795 = vmatpush1.msra.mxu0 0.0
        %4796 = vmatprep.subr.mxu0 0.0
        %4797 = vmatpush1.msra.mxu0 0.0
        %4798 = vmatprep.subr.mxu0 0.0
        %4799 = vmatpush1.msra.mxu0 0.0
        %4800 = vmatprep.subr.mxu0 0.0
        %4801 = vmatpush1.msra.mxu0 0.0
        %4802 = vmatprep.subr.mxu0 0.0
        %4803 = vmatpush1.msra.mxu0 0.0
        %4804 = vmatprep.subr.mxu0 0.0
        %4805 = vmatpush1.msra.mxu0 0.0
        %4806 = vmatprep.subr.mxu0 0.0
        %4807 = vmatpush1.msra.mxu0 0.0
        %4808 = vmatprep.subr.mxu0 0.0
        %4809 = vmatpush1.msra.mxu0 0.0
        %4810 = vmatprep.subr.mxu0 0.0
        %4811 = vmatpush1.msra.mxu0 0.0
        %4812 = vmatprep.subr.mxu0 0.0
        %4813 = vmatpush1.msra.mxu0 0.0
        %4814 = vmatprep.subr.mxu0 0.0
        %4815 = vmatpush1.msra.mxu0 0.0
        %4816 = vmatprep.subr.mxu0 0.0
        %4817 = vmatpush1.msra.mxu0 0.0
        %4818 = vmatprep.subr.mxu0 0.0
        %4819 = vmatpush1.msra.mxu0 0.0
        %4820 = vmatprep.subr.mxu0 0.0
        %4821 = vmatpush1.msra.mxu0 0.0
        %4822 = vmatprep.subr.mxu0 0.0
        %4823 = vmatpush1.msra.mxu0 0.0
        %4824 = vmatprep.subr.mxu0 0.0
        %4825 = vmatpush1.msra.mxu0 0.0
        %4826 = vmatprep.subr.mxu0 0.0
        %4827 = vmatpush1.msra.mxu0 0.0
        %4828 = vmatprep.mubr.f32.mxu0 0.0
        %4829 = vmatmul.mubr.f32.gmra.mrb[0].mxu0 %v4759
        %v4830 = vpop.f32.mrb[0].mxu0
        %v4831 = vadd.f32 0.0, %v4830
        %v4832 = vpop.f32.mrb[0].mxu0
        %4833 = vdwg.mxu0
        %v4834 = vadd.f32 %v4742, %v4831
        %v4835 = vld [vmem:[#allocation2 + $0xb] sm:$0x1]
        %s4836 = scalar_lea.vmem %s5, 1144
        %v4837 = vld [vmem:[%s4836] sm:$0xff]
        %v4838 = vld [vmem:[%s4836 + $0x8] sm:$0xff]
        %v4839 = vld [vmem:[%s4836 + $0x10] sm:$0xff]
        %v4840 = vld [vmem:[%s4836 + $0x18] sm:$0xff]
        %v4841 = vld [vmem:[%s4836 + $0x20] sm:$0xff]
        %v4842 = vld [vmem:[%s4836 + $0x28] sm:$0xff]
        %v4843 = vld [vmem:[%s4836 + $0x30] sm:$0xff]
        %v4844 = vld [vmem:[%s4836 + $0x38] sm:$0xff]
        %v4845 = vld [vmem:[%s4836 + $0x40] sm:$0xff]
        %v4846 = vld [vmem:[%s4836 + $0x48] sm:$0xff]
        %v4847 = vld [vmem:[%s4836 + $0x50] sm:$0xff]
        %v4848 = vld [vmem:[%s4836 + $0x58] sm:$0xff]
        %v4849 = vld [vmem:[%s4836 + $0x60] sm:$0xf]
        %v4851 = vsel %vm3818, %v4835, 0
        %v4854 = vsel %vm3840, %v4849, 0
        %4856 = vmatprep.subr.mxu0 0.0
        %4857 = vmatpush1.msra.mxu0 %v4837
        %4858 = vmatprep.subr.mxu0 0.0
        %4859 = vmatpush1.msra.mxu0 %v4838
        %4860 = vmatprep.subr.mxu0 0.0
        %4861 = vmatpush1.msra.mxu0 %v4839
        %4862 = vmatprep.subr.mxu0 0.0
        %4863 = vmatpush1.msra.mxu0 %v4840
        %4864 = vmatprep.subr.mxu0 0.0
        %4865 = vmatpush1.msra.mxu0 %v4841
        %4866 = vmatprep.subr.mxu0 0.0
        %4867 = vmatpush1.msra.mxu0 %v4842
        %4868 = vmatprep.subr.mxu0 0.0
        %4869 = vmatpush1.msra.mxu0 %v4843
        %4870 = vmatprep.subr.mxu0 0.0
        %4871 = vmatpush1.msra.mxu0 %v4844
        %4872 = vmatprep.subr.mxu0 0.0
        %4873 = vmatpush1.msra.mxu0 %v4845
        %4874 = vmatprep.subr.mxu0 0.0
        %4875 = vmatpush1.msra.mxu0 %v4846
        %4876 = vmatprep.subr.mxu0 0.0
        %4877 = vmatpush1.msra.mxu0 %v4847
        %4878 = vmatprep.subr.mxu0 0.0
        %4879 = vmatpush1.msra.mxu0 %v4848
        %4880 = vmatprep.subr.mxu0 0.0
        %4881 = vmatpush1.msra.mxu0 %v4854
        %4882 = vmatprep.subr.mxu0 0.0
        %4883 = vmatpush1.msra.mxu0 0.0
        %4884 = vmatprep.subr.mxu0 0.0
        %4885 = vmatpush1.msra.mxu0 0.0
        %4886 = vmatprep.subr.mxu0 0.0
        %4887 = vmatpush1.msra.mxu0 0.0
        %4888 = vmatprep.subr.mxu0 0.0
        %4889 = vmatpush1.msra.mxu0 0.0
        %4890 = vmatprep.subr.mxu0 0.0
        %4891 = vmatpush1.msra.mxu0 0.0
        %4892 = vmatprep.subr.mxu0 0.0
        %4893 = vmatpush1.msra.mxu0 0.0
        %4894 = vmatprep.subr.mxu0 0.0
        %4895 = vmatpush1.msra.mxu0 0.0
        %4896 = vmatprep.subr.mxu0 0.0
        %4897 = vmatpush1.msra.mxu0 0.0
        %4898 = vmatprep.subr.mxu0 0.0
        %4899 = vmatpush1.msra.mxu0 0.0
        %4900 = vmatprep.subr.mxu0 0.0
        %4901 = vmatpush1.msra.mxu0 0.0
        %4902 = vmatprep.subr.mxu0 0.0
        %4903 = vmatpush1.msra.mxu0 0.0
        %4904 = vmatprep.subr.mxu0 0.0
        %4905 = vmatpush1.msra.mxu0 0.0
        %4906 = vmatprep.subr.mxu0 0.0
        %4907 = vmatpush1.msra.mxu0 0.0
        %4908 = vmatprep.subr.mxu0 0.0
        %4909 = vmatpush1.msra.mxu0 0.0
        %4910 = vmatprep.subr.mxu0 0.0
        %4911 = vmatpush1.msra.mxu0 0.0
        %4912 = vmatprep.subr.mxu0 0.0
        %4913 = vmatpush1.msra.mxu0 0.0
        %4914 = vmatprep.subr.mxu0 0.0
        %4915 = vmatpush1.msra.mxu0 0.0
        %4916 = vmatprep.subr.mxu0 0.0
        %4917 = vmatpush1.msra.mxu0 0.0
        %4918 = vmatprep.subr.mxu0 0.0
        %4919 = vmatpush1.msra.mxu0 0.0
        %4920 = vmatprep.mubr.f32.mxu0 0.0
        %4921 = vmatmul.mubr.f32.gmra.mrb[0].mxu0 %v4851
        %v4922 = vpop.f32.mrb[0].mxu0
        %v4923 = vadd.f32 0.0, %v4922
        %v4924 = vpop.f32.mrb[0].mxu0
        %4925 = vdwg.mxu0
        %v4926 = vadd.f32 %v4834, %v4923
        %v4927 = vld [vmem:[#allocation2 + $0xc] sm:$0x1]
        %s4928 = scalar_lea.vmem %s5, 1248
        %v4929 = vld [vmem:[%s4928] sm:$0xff]
        %v4930 = vld [vmem:[%s4928 + $0x8] sm:$0xff]
        %v4931 = vld [vmem:[%s4928 + $0x10] sm:$0xff]
        %v4932 = vld [vmem:[%s4928 + $0x18] sm:$0xff]
        %v4933 = vld [vmem:[%s4928 + $0x20] sm:$0xff]
        %v4934 = vld [vmem:[%s4928 + $0x28] sm:$0xff]
        %v4935 = vld [vmem:[%s4928 + $0x30] sm:$0xff]
        %v4936 = vld [vmem:[%s4928 + $0x38] sm:$0xff]
        %v4937 = vld [vmem:[%s4928 + $0x40] sm:$0xff]
        %v4938 = vld [vmem:[%s4928 + $0x48] sm:$0xff]
        %v4939 = vld [vmem:[%s4928 + $0x50] sm:$0xff]
        %v4940 = vld [vmem:[%s4928 + $0x58] sm:$0xff]
        %v4941 = vld [vmem:[%s4928 + $0x60] sm:$0xf]
        %v4943 = vsel %vm3818, %v4927, 0
        %v4946 = vsel %vm3840, %v4941, 0
        %4948 = vmatprep.subr.mxu0 0.0
        %4949 = vmatpush1.msra.mxu0 %v4929
        %4950 = vmatprep.subr.mxu0 0.0
        %4951 = vmatpush1.msra.mxu0 %v4930
        %4952 = vmatprep.subr.mxu0 0.0
        %4953 = vmatpush1.msra.mxu0 %v4931
        %4954 = vmatprep.subr.mxu0 0.0
        %4955 = vmatpush1.msra.mxu0 %v4932
        %4956 = vmatprep.subr.mxu0 0.0
        %4957 = vmatpush1.msra.mxu0 %v4933
        %4958 = vmatprep.subr.mxu0 0.0
        %4959 = vmatpush1.msra.mxu0 %v4934
        %4960 = vmatprep.subr.mxu0 0.0
        %4961 = vmatpush1.msra.mxu0 %v4935
        %4962 = vmatprep.subr.mxu0 0.0
        %4963 = vmatpush1.msra.mxu0 %v4936
        %4964 = vmatprep.subr.mxu0 0.0
        %4965 = vmatpush1.msra.mxu0 %v4937
        %4966 = vmatprep.subr.mxu0 0.0
        %4967 = vmatpush1.msra.mxu0 %v4938
        %4968 = vmatprep.subr.mxu0 0.0
        %4969 = vmatpush1.msra.mxu0 %v4939
        %4970 = vmatprep.subr.mxu0 0.0
        %4971 = vmatpush1.msra.mxu0 %v4940
        %4972 = vmatprep.subr.mxu0 0.0
        %4973 = vmatpush1.msra.mxu0 %v4946
        %4974 = vmatprep.subr.mxu0 0.0
        %4975 = vmatpush1.msra.mxu0 0.0
        %4976 = vmatprep.subr.mxu0 0.0
        %4977 = vmatpush1.msra.mxu0 0.0
        %4978 = vmatprep.subr.mxu0 0.0
        %4979 = vmatpush1.msra.mxu0 0.0
        %4980 = vmatprep.subr.mxu0 0.0
        %4981 = vmatpush1.msra.mxu0 0.0
        %4982 = vmatprep.subr.mxu0 0.0
        %4983 = vmatpush1.msra.mxu0 0.0
        %4984 = vmatprep.subr.mxu0 0.0
        %4985 = vmatpush1.msra.mxu0 0.0
        %4986 = vmatprep.subr.mxu0 0.0
        %4987 = vmatpush1.msra.mxu0 0.0
        %4988 = vmatprep.subr.mxu0 0.0
        %4989 = vmatpush1.msra.mxu0 0.0
        %4990 = vmatprep.subr.mxu0 0.0
        %4991 = vmatpush1.msra.mxu0 0.0
        %4992 = vmatprep.subr.mxu0 0.0
        %4993 = vmatpush1.msra.mxu0 0.0
        %4994 = vmatprep.subr.mxu0 0.0
        %4995 = vmatpush1.msra.mxu0 0.0
        %4996 = vmatprep.subr.mxu0 0.0
        %4997 = vmatpush1.msra.mxu0 0.0
        %4998 = vmatprep.subr.mxu0 0.0
        %4999 = vmatpush1.msra.mxu0 0.0
        %5000 = vmatprep.subr.mxu0 0.0
        %5001 = vmatpush1.msra.mxu0 0.0
        %5002 = vmatprep.subr.mxu0 0.0
        %5003 = vmatpush1.msra.mxu0 0.0
        %5004 = vmatprep.subr.mxu0 0.0
        %5005 = vmatpush1.msra.mxu0 0.0
        %5006 = vmatprep.subr.mxu0 0.0
        %5007 = vmatpush1.msra.mxu0 0.0
        %5008 = vmatprep.subr.mxu0 0.0
        %5009 = vmatpush1.msra.mxu0 0.0
        %5010 = vmatprep.subr.mxu0 0.0
        %5011 = vmatpush1.msra.mxu0 0.0
        %5012 = vmatprep.mubr.f32.mxu0 0.0
        %5013 = vmatmul.mubr.f32.gmra.mrb[0].mxu0 %v4943
        %v5014 = vpop.f32.mrb[0].mxu0
        %v5015 = vadd.f32 0.0, %v5014
        %v5016 = vpop.f32.mrb[0].mxu0
        %5017 = vdwg.mxu0
        %v5018 = vadd.f32 %v4926, %v5015
        %v5019 = vld [vmem:[#allocation2 + $0xd] sm:$0x1]
        %s5020 = scalar_lea.vmem %s5, 1352
        %v5021 = vld [vmem:[%s5020] sm:$0xff]
        %v5022 = vld [vmem:[%s5020 + $0x8] sm:$0xff]
        %v5023 = vld [vmem:[%s5020 + $0x10] sm:$0xff]
        %v5024 = vld [vmem:[%s5020 + $0x18] sm:$0xff]
        %v5025 = vld [vmem:[%s5020 + $0x20] sm:$0xff]
        %v5026 = vld [vmem:[%s5020 + $0x28] sm:$0xff]
        %v5027 = vld [vmem:[%s5020 + $0x30] sm:$0xff]
        %v5028 = vld [vmem:[%s5020 + $0x38] sm:$0xff]
        %v5029 = vld [vmem:[%s5020 + $0x40] sm:$0xff]
        %v5030 = vld [vmem:[%s5020 + $0x48] sm:$0xff]
        %v5031 = vld [vmem:[%s5020 + $0x50] sm:$0xff]
        %v5032 = vld [vmem:[%s5020 + $0x58] sm:$0xff]
        %v5033 = vld [vmem:[%s5020 + $0x60] sm:$0xf]
        %v5035 = vsel %vm3818, %v5019, 0
        %v5038 = vsel %vm3840, %v5033, 0
        %5040 = vmatprep.subr.mxu0 0.0
        %5041 = vmatpush1.msra.mxu0 %v5021
        %5042 = vmatprep.subr.mxu0 0.0
        %5043 = vmatpush1.msra.mxu0 %v5022
        %5044 = vmatprep.subr.mxu0 0.0
        %5045 = vmatpush1.msra.mxu0 %v5023
        %5046 = vmatprep.subr.mxu0 0.0
        %5047 = vmatpush1.msra.mxu0 %v5024
        %5048 = vmatprep.subr.mxu0 0.0
        %5049 = vmatpush1.msra.mxu0 %v5025
        %5050 = vmatprep.subr.mxu0 0.0
        %5051 = vmatpush1.msra.mxu0 %v5026
        %5052 = vmatprep.subr.mxu0 0.0
        %5053 = vmatpush1.msra.mxu0 %v5027
        %5054 = vmatprep.subr.mxu0 0.0
        %5055 = vmatpush1.msra.mxu0 %v5028
        %5056 = vmatprep.subr.mxu0 0.0
        %5057 = vmatpush1.msra.mxu0 %v5029
        %5058 = vmatprep.subr.mxu0 0.0
        %5059 = vmatpush1.msra.mxu0 %v5030
        %5060 = vmatprep.subr.mxu0 0.0
        %5061 = vmatpush1.msra.mxu0 %v5031
        %5062 = vmatprep.subr.mxu0 0.0
        %5063 = vmatpush1.msra.mxu0 %v5032
        %5064 = vmatprep.subr.mxu0 0.0
        %5065 = vmatpush1.msra.mxu0 %v5038
        %5066 = vmatprep.subr.mxu0 0.0
        %5067 = vmatpush1.msra.mxu0 0.0
        %5068 = vmatprep.subr.mxu0 0.0
        %5069 = vmatpush1.msra.mxu0 0.0
        %5070 = vmatprep.subr.mxu0 0.0
        %5071 = vmatpush1.msra.mxu0 0.0
        %5072 = vmatprep.subr.mxu0 0.0
        %5073 = vmatpush1.msra.mxu0 0.0
        %5074 = vmatprep.subr.mxu0 0.0
        %5075 = vmatpush1.msra.mxu0 0.0
        %5076 = vmatprep.subr.mxu0 0.0
        %5077 = vmatpush1.msra.mxu0 0.0
        %5078 = vmatprep.subr.mxu0 0.0
        %5079 = vmatpush1.msra.mxu0 0.0
        %5080 = vmatprep.subr.mxu0 0.0
        %5081 = vmatpush1.msra.mxu0 0.0
        %5082 = vmatprep.subr.mxu0 0.0
        %5083 = vmatpush1.msra.mxu0 0.0
        %5084 = vmatprep.subr.mxu0 0.0
        %5085 = vmatpush1.msra.mxu0 0.0
        %5086 = vmatprep.subr.mxu0 0.0
        %5087 = vmatpush1.msra.mxu0 0.0
        %5088 = vmatprep.subr.mxu0 0.0
        %5089 = vmatpush1.msra.mxu0 0.0
        %5090 = vmatprep.subr.mxu0 0.0
        %5091 = vmatpush1.msra.mxu0 0.0
        %5092 = vmatprep.subr.mxu0 0.0
        %5093 = vmatpush1.msra.mxu0 0.0
        %5094 = vmatprep.subr.mxu0 0.0
        %5095 = vmatpush1.msra.mxu0 0.0
        %5096 = vmatprep.subr.mxu0 0.0
        %5097 = vmatpush1.msra.mxu0 0.0
        %5098 = vmatprep.subr.mxu0 0.0
        %5099 = vmatpush1.msra.mxu0 0.0
        %5100 = vmatprep.subr.mxu0 0.0
        %5101 = vmatpush1.msra.mxu0 0.0
        %5102 = vmatprep.subr.mxu0 0.0
        %5103 = vmatpush1.msra.mxu0 0.0
        %5104 = vmatprep.mubr.f32.mxu0 0.0
        %5105 = vmatmul.mubr.f32.gmra.mrb[0].mxu0 %v5035
        %v5106 = vpop.f32.mrb[0].mxu0
        %v5107 = vadd.f32 0.0, %v5106
        %v5108 = vpop.f32.mrb[0].mxu0
        %5109 = vdwg.mxu0
        %v5110 = vadd.f32 %v5018, %v5107
        %v5111 = vld [vmem:[#allocation2 + $0xe] sm:$0x1]
        %s5112 = scalar_lea.vmem %s5, 1456
        %v5113 = vld [vmem:[%s5112] sm:$0xff]
        %v5114 = vld [vmem:[%s5112 + $0x8] sm:$0xff]
        %v5115 = vld [vmem:[%s5112 + $0x10] sm:$0xff]
        %v5116 = vld [vmem:[%s5112 + $0x18] sm:$0xff]
        %v5117 = vld [vmem:[%s5112 + $0x20] sm:$0xff]
        %v5118 = vld [vmem:[%s5112 + $0x28] sm:$0xff]
        %v5119 = vld [vmem:[%s5112 + $0x30] sm:$0xff]
        %v5120 = vld [vmem:[%s5112 + $0x38] sm:$0xff]
        %v5121 = vld [vmem:[%s5112 + $0x40] sm:$0xff]
        %v5122 = vld [vmem:[%s5112 + $0x48] sm:$0xff]
        %v5123 = vld [vmem:[%s5112 + $0x50] sm:$0xff]
        %v5124 = vld [vmem:[%s5112 + $0x58] sm:$0xff]
        %v5125 = vld [vmem:[%s5112 + $0x60] sm:$0xf]
        %v5127 = vsel %vm3818, %v5111, 0
        %v5130 = vsel %vm3840, %v5125, 0
        %5132 = vmatprep.subr.mxu0 0.0
        %5133 = vmatpush1.msra.mxu0 %v5113
        %5134 = vmatprep.subr.mxu0 0.0
        %5135 = vmatpush1.msra.mxu0 %v5114
        %5136 = vmatprep.subr.mxu0 0.0
        %5137 = vmatpush1.msra.mxu0 %v5115
        %5138 = vmatprep.subr.mxu0 0.0
        %5139 = vmatpush1.msra.mxu0 %v5116
        %5140 = vmatprep.subr.mxu0 0.0
        %5141 = vmatpush1.msra.mxu0 %v5117
        %5142 = vmatprep.subr.mxu0 0.0
        %5143 = vmatpush1.msra.mxu0 %v5118
        %5144 = vmatprep.subr.mxu0 0.0
        %5145 = vmatpush1.msra.mxu0 %v5119
        %5146 = vmatprep.subr.mxu0 0.0
        %5147 = vmatpush1.msra.mxu0 %v5120
        %5148 = vmatprep.subr.mxu0 0.0
        %5149 = vmatpush1.msra.mxu0 %v5121
        %5150 = vmatprep.subr.mxu0 0.0
        %5151 = vmatpush1.msra.mxu0 %v5122
        %5152 = vmatprep.subr.mxu0 0.0
        %5153 = vmatpush1.msra.mxu0 %v5123
        %5154 = vmatprep.subr.mxu0 0.0
        %5155 = vmatpush1.msra.mxu0 %v5124
        %5156 = vmatprep.subr.mxu0 0.0
        %5157 = vmatpush1.msra.mxu0 %v5130
        %5158 = vmatprep.subr.mxu0 0.0
        %5159 = vmatpush1.msra.mxu0 0.0
        %5160 = vmatprep.subr.mxu0 0.0
        %5161 = vmatpush1.msra.mxu0 0.0
        %5162 = vmatprep.subr.mxu0 0.0
        %5163 = vmatpush1.msra.mxu0 0.0
        %5164 = vmatprep.subr.mxu0 0.0
        %5165 = vmatpush1.msra.mxu0 0.0
        %5166 = vmatprep.subr.mxu0 0.0
        %5167 = vmatpush1.msra.mxu0 0.0
        %5168 = vmatprep.subr.mxu0 0.0
        %5169 = vmatpush1.msra.mxu0 0.0
        %5170 = vmatprep.subr.mxu0 0.0
        %5171 = vmatpush1.msra.mxu0 0.0
        %5172 = vmatprep.subr.mxu0 0.0
        %5173 = vmatpush1.msra.mxu0 0.0
        %5174 = vmatprep.subr.mxu0 0.0
        %5175 = vmatpush1.msra.mxu0 0.0
        %5176 = vmatprep.subr.mxu0 0.0
        %5177 = vmatpush1.msra.mxu0 0.0
        %5178 = vmatprep.subr.mxu0 0.0
        %5179 = vmatpush1.msra.mxu0 0.0
        %5180 = vmatprep.subr.mxu0 0.0
        %5181 = vmatpush1.msra.mxu0 0.0
        %5182 = vmatprep.subr.mxu0 0.0
        %5183 = vmatpush1.msra.mxu0 0.0
        %5184 = vmatprep.subr.mxu0 0.0
        %5185 = vmatpush1.msra.mxu0 0.0
        %5186 = vmatprep.subr.mxu0 0.0
        %5187 = vmatpush1.msra.mxu0 0.0
        %5188 = vmatprep.subr.mxu0 0.0
        %5189 = vmatpush1.msra.mxu0 0.0
        %5190 = vmatprep.subr.mxu0 0.0
        %5191 = vmatpush1.msra.mxu0 0.0
        %5192 = vmatprep.subr.mxu0 0.0
        %5193 = vmatpush1.msra.mxu0 0.0
        %5194 = vmatprep.subr.mxu0 0.0
        %5195 = vmatpush1.msra.mxu0 0.0
        %5196 = vmatprep.mubr.f32.mxu0 0.0
        %5197 = vmatmul.mubr.f32.gmra.mrb[0].mxu0 %v5127
        %v5198 = vpop.f32.mrb[0].mxu0
        %v5199 = vadd.f32 0.0, %v5198
        %v5200 = vpop.f32.mrb[0].mxu0
        %5201 = vdwg.mxu0
        %v5202 = vadd.f32 %v5110, %v5199
        %v5203 = vld [vmem:[#allocation2 + $0xf] sm:$0x1]
        %s5204 = scalar_lea.vmem %s5, 1560
        %v5205 = vld [vmem:[%s5204] sm:$0xff]
        %v5206 = vld [vmem:[%s5204 + $0x8] sm:$0xff]
        %v5207 = vld [vmem:[%s5204 + $0x10] sm:$0xff]
        %v5208 = vld [vmem:[%s5204 + $0x18] sm:$0xff]
        %v5209 = vld [vmem:[%s5204 + $0x20] sm:$0xff]
        %v5210 = vld [vmem:[%s5204 + $0x28] sm:$0xff]
        %v5211 = vld [vmem:[%s5204 + $0x30] sm:$0xff]
        %v5212 = vld [vmem:[%s5204 + $0x38] sm:$0xff]
        %v5213 = vld [vmem:[%s5204 + $0x40] sm:$0xff]
        %v5214 = vld [vmem:[%s5204 + $0x48] sm:$0xff]
        %v5215 = vld [vmem:[%s5204 + $0x50] sm:$0xff]
        %v5216 = vld [vmem:[%s5204 + $0x58] sm:$0xff]
        %v5217 = vld [vmem:[%s5204 + $0x60] sm:$0xf]
        %v5219 = vsel %vm3818, %v5203, 0
        %v5222 = vsel %vm3840, %v5217, 0
        %5224 = vmatprep.subr.mxu0 0.0
        %5225 = vmatpush1.msra.mxu0 %v5205
        %5226 = vmatprep.subr.mxu0 0.0
        %5227 = vmatpush1.msra.mxu0 %v5206
        %5228 = vmatprep.subr.mxu0 0.0
        %5229 = vmatpush1.msra.mxu0 %v5207
        %5230 = vmatprep.subr.mxu0 0.0
        %5231 = vmatpush1.msra.mxu0 %v5208
        %5232 = vmatprep.subr.mxu0 0.0
        %5233 = vmatpush1.msra.mxu0 %v5209
        %5234 = vmatprep.subr.mxu0 0.0
        %5235 = vmatpush1.msra.mxu0 %v5210
        %5236 = vmatprep.subr.mxu0 0.0
        %5237 = vmatpush1.msra.mxu0 %v5211
        %5238 = vmatprep.subr.mxu0 0.0
        %5239 = vmatpush1.msra.mxu0 %v5212
        %5240 = vmatprep.subr.mxu0 0.0
        %5241 = vmatpush1.msra.mxu0 %v5213
        %5242 = vmatprep.subr.mxu0 0.0
        %5243 = vmatpush1.msra.mxu0 %v5214
        %5244 = vmatprep.subr.mxu0 0.0
        %5245 = vmatpush1.msra.mxu0 %v5215
        %5246 = vmatprep.subr.mxu0 0.0
        %5247 = vmatpush1.msra.mxu0 %v5216
        %5248 = vmatprep.subr.mxu0 0.0
        %5249 = vmatpush1.msra.mxu0 %v5222
        %5250 = vmatprep.subr.mxu0 0.0
        %5251 = vmatpush1.msra.mxu0 0.0
        %5252 = vmatprep.subr.mxu0 0.0
        %5253 = vmatpush1.msra.mxu0 0.0
        %5254 = vmatprep.subr.mxu0 0.0
        %5255 = vmatpush1.msra.mxu0 0.0
        %5256 = vmatprep.subr.mxu0 0.0
        %5257 = vmatpush1.msra.mxu0 0.0
        %5258 = vmatprep.subr.mxu0 0.0
        %5259 = vmatpush1.msra.mxu0 0.0
        %5260 = vmatprep.subr.mxu0 0.0
        %5261 = vmatpush1.msra.mxu0 0.0
        %5262 = vmatprep.subr.mxu0 0.0
        %5263 = vmatpush1.msra.mxu0 0.0
        %5264 = vmatprep.subr.mxu0 0.0
        %5265 = vmatpush1.msra.mxu0 0.0
        %5266 = vmatprep.subr.mxu0 0.0
        %5267 = vmatpush1.msra.mxu0 0.0
        %5268 = vmatprep.subr.mxu0 0.0
        %5269 = vmatpush1.msra.mxu0 0.0
        %5270 = vmatprep.subr.mxu0 0.0
        %5271 = vmatpush1.msra.mxu0 0.0
        %5272 = vmatprep.subr.mxu0 0.0
        %5273 = vmatpush1.msra.mxu0 0.0
        %5274 = vmatprep.subr.mxu0 0.0
        %5275 = vmatpush1.msra.mxu0 0.0
        %5276 = vmatprep.subr.mxu0 0.0
        %5277 = vmatpush1.msra.mxu0 0.0
        %5278 = vmatprep.subr.mxu0 0.0
        %5279 = vmatpush1.msra.mxu0 0.0
        %5280 = vmatprep.subr.mxu0 0.0
        %5281 = vmatpush1.msra.mxu0 0.0
        %5282 = vmatprep.subr.mxu0 0.0
        %5283 = vmatpush1.msra.mxu0 0.0
        %5284 = vmatprep.subr.mxu0 0.0
        %5285 = vmatpush1.msra.mxu0 0.0
        %5286 = vmatprep.subr.mxu0 0.0
        %5287 = vmatpush1.msra.mxu0 0.0
        %5288 = vmatprep.mubr.f32.mxu0 0.0
        %5289 = vmatmul.mubr.f32.gmra.mrb[0].mxu0 %v5219
        %v5290 = vpop.f32.mrb[0].mxu0
        %v5291 = vadd.f32 0.0, %v5290
        %v5292 = vpop.f32.mrb[0].mxu0
        %5293 = vdwg.mxu0
        %v5294 = vadd.f32 %v5202, %v5291
        %v5295 = vmax.f32 %v5294, 0.0
        %v5296 = vld [vmem:[%s7] sm:$0xff]
        %v5297 = vld [vmem:[%s7 + $0x8] sm:$0xff]
        %v5298 = vld [vmem:[%s7 + $0x10] sm:$0xff]
        %v5299 = vld [vmem:[%s7 + $0x18] sm:$0xff]
        %v5300 = vld [vmem:[%s7 + $0x20] sm:$0xff]
        %v5301 = vld [vmem:[%s7 + $0x28] sm:$0xff]
        %v5302 = vld [vmem:[%s7 + $0x30] sm:$0xff]
        %v5303 = vld [vmem:[%s7 + $0x38] sm:$0xff]
        %v5304 = vld [vmem:[%s7 + $0x40] sm:$0xff]
        %v5305 = vld [vmem:[%s7 + $0x48] sm:$0xff]
        %v5306 = vld [vmem:[%s7 + $0x50] sm:$0xff]
        %v5307 = vld [vmem:[%s7 + $0x58] sm:$0xff]
        %v5308 = vld [vmem:[%s7 + $0x60] sm:$0xff]
        %v5309 = vld [vmem:[%s7 + $0x68] sm:$0xff]
        %v5310 = vld [vmem:[%s7 + $0x70] sm:$0xff]
        %v5311 = vld [vmem:[%s7 + $0x78] sm:$0xff]
        %v5312 = vld [vmem:[%s8] sm:$0x1]
        %5313 = vmatprep.subr.mxu0 0.0
        %5314 = vmatpush1.msra.mxu0 %v5296
        %5315 = vmatprep.subr.mxu0 0.0
        %5316 = vmatpush1.msra.mxu0 %v5297
        %5317 = vmatprep.subr.mxu0 0.0
        %5318 = vmatpush1.msra.mxu0 %v5298
        %5319 = vmatprep.subr.mxu0 0.0
        %5320 = vmatpush1.msra.mxu0 %v5299
        %5321 = vmatprep.subr.mxu0 0.0
        %5322 = vmatpush1.msra.mxu0 %v5300
        %5323 = vmatprep.subr.mxu0 0.0
        %5324 = vmatpush1.msra.mxu0 %v5301
        %5325 = vmatprep.subr.mxu0 0.0
        %5326 = vmatpush1.msra.mxu0 %v5302
        %5327 = vmatprep.subr.mxu0 0.0
        %5328 = vmatpush1.msra.mxu0 %v5303
        %5329 = vmatprep.subr.mxu0 0.0
        %5330 = vmatpush1.msra.mxu0 %v5304
        %5331 = vmatprep.subr.mxu0 0.0
        %5332 = vmatpush1.msra.mxu0 %v5305
        %5333 = vmatprep.subr.mxu0 0.0
        %5334 = vmatpush1.msra.mxu0 %v5306
        %5335 = vmatprep.subr.mxu0 0.0
        %5336 = vmatpush1.msra.mxu0 %v5307
        %5337 = vmatprep.subr.mxu0 0.0
        %5338 = vmatpush1.msra.mxu0 %v5308
        %5339 = vmatprep.subr.mxu0 0.0
        %5340 = vmatpush1.msra.mxu0 %v5309
        %5341 = vmatprep.subr.mxu0 0.0
        %5342 = vmatpush1.msra.mxu0 %v5310
        %5343 = vmatprep.subr.mxu0 0.0
        %5344 = vmatpush1.msra.mxu0 %v5311
        %5345 = vmatprep.subr.mxu0 0.0
        %5346 = vmatpush1.msra.mxu0 0.0
        %5347 = vmatprep.subr.mxu0 0.0
        %5348 = vmatpush1.msra.mxu0 0.0
        %5349 = vmatprep.subr.mxu0 0.0
        %5350 = vmatpush1.msra.mxu0 0.0
        %5351 = vmatprep.subr.mxu0 0.0
        %5352 = vmatpush1.msra.mxu0 0.0
        %5353 = vmatprep.subr.mxu0 0.0
        %5354 = vmatpush1.msra.mxu0 0.0
        %5355 = vmatprep.subr.mxu0 0.0
        %5356 = vmatpush1.msra.mxu0 0.0
        %5357 = vmatprep.subr.mxu0 0.0
        %5358 = vmatpush1.msra.mxu0 0.0
        %5359 = vmatprep.subr.mxu0 0.0
        %5360 = vmatpush1.msra.mxu0 0.0
        %5361 = vmatprep.subr.mxu0 0.0
        %5362 = vmatpush1.msra.mxu0 0.0
        %5363 = vmatprep.subr.mxu0 0.0
        %5364 = vmatpush1.msra.mxu0 0.0
        %5365 = vmatprep.subr.mxu0 0.0
        %5366 = vmatpush1.msra.mxu0 0.0
        %5367 = vmatprep.subr.mxu0 0.0
        %5368 = vmatpush1.msra.mxu0 0.0
        %5369 = vmatprep.subr.mxu0 0.0
        %5370 = vmatpush1.msra.mxu0 0.0
        %5371 = vmatprep.subr.mxu0 0.0
        %5372 = vmatpush1.msra.mxu0 0.0
        %5373 = vmatprep.subr.mxu0 0.0
        %5374 = vmatpush1.msra.mxu0 0.0
        %5375 = vmatprep.subr.mxu0 0.0
        %5376 = vmatpush1.msra.mxu0 0.0
        %5377 = vmatprep.mubr.f32.mxu0 0.0
        %5378 = vmatmul.mubr.f32.gmra.mrb[0].mxu0 %v5295
        %v5379 = vpop.f32.mrb[0].mxu0
        %v5380 = vadd.f32 %v5312, %v5379
        %v5381 = vpop.f32.mrb[0].mxu0
        %5382 = vdwg.mxu0
        %v5383 = vmax.f32 %v5380, 0.0
        %v5384 = vld [vmem:[%s9] sm:$0xff]
        %v5385 = vld [vmem:[%s9 + $0x8] sm:$0xff]
        %v5386 = vld [vmem:[%s9 + $0x10] sm:$0xff]
        %v5387 = vld [vmem:[%s9 + $0x18] sm:$0xff]
        %v5388 = vld [vmem:[%s9 + $0x20] sm:$0xff]
        %v5389 = vld [vmem:[%s9 + $0x28] sm:$0xff]
        %v5390 = vld [vmem:[%s9 + $0x30] sm:$0xff]
        %v5391 = vld [vmem:[%s9 + $0x38] sm:$0xff]
        %v5392 = vld [vmem:[%s9 + $0x40] sm:$0xff]
        %v5393 = vld [vmem:[%s9 + $0x48] sm:$0xff]
        %v5394 = vld [vmem:[%s9 + $0x50] sm:$0xff]
        %v5395 = vld [vmem:[%s9 + $0x58] sm:$0xff]
        %v5396 = vld [vmem:[%s9 + $0x60] sm:$0xff]
        %v5397 = vld [vmem:[%s9 + $0x68] sm:$0xff]
        %v5398 = vld [vmem:[%s9 + $0x70] sm:$0xff]
        %v5399 = vld [vmem:[%s9 + $0x78] sm:$0xff]
        %v5400 = vld [vmem:[%s10] sm:$0x1]
        %5401 = vmatprep.subr.mxu0 0.0
        %5402 = vmatpush1.msra.mxu0 %v5384
        %5403 = vmatprep.subr.mxu0 0.0
        %5404 = vmatpush1.msra.mxu0 %v5385
        %5405 = vmatprep.subr.mxu0 0.0
        %5406 = vmatpush1.msra.mxu0 %v5386
        %5407 = vmatprep.subr.mxu0 0.0
        %5408 = vmatpush1.msra.mxu0 %v5387
        %5409 = vmatprep.subr.mxu0 0.0
        %5410 = vmatpush1.msra.mxu0 %v5388
        %5411 = vmatprep.subr.mxu0 0.0
        %5412 = vmatpush1.msra.mxu0 %v5389
        %5413 = vmatprep.subr.mxu0 0.0
        %5414 = vmatpush1.msra.mxu0 %v5390
        %5415 = vmatprep.subr.mxu0 0.0
        %5416 = vmatpush1.msra.mxu0 %v5391
        %5417 = vmatprep.subr.mxu0 0.0
        %5418 = vmatpush1.msra.mxu0 %v5392
        %5419 = vmatprep.subr.mxu0 0.0
        %5420 = vmatpush1.msra.mxu0 %v5393
        %5421 = vmatprep.subr.mxu0 0.0
        %5422 = vmatpush1.msra.mxu0 %v5394
        %5423 = vmatprep.subr.mxu0 0.0
        %5424 = vmatpush1.msra.mxu0 %v5395
        %5425 = vmatprep.subr.mxu0 0.0
        %5426 = vmatpush1.msra.mxu0 %v5396
        %5427 = vmatprep.subr.mxu0 0.0
        %5428 = vmatpush1.msra.mxu0 %v5397
        %5429 = vmatprep.subr.mxu0 0.0
        %5430 = vmatpush1.msra.mxu0 %v5398
        %5431 = vmatprep.subr.mxu0 0.0
        %5432 = vmatpush1.msra.mxu0 %v5399
        %5433 = vmatprep.subr.mxu0 0.0
        %5434 = vmatpush1.msra.mxu0 0.0
        %5435 = vmatprep.subr.mxu0 0.0
        %5436 = vmatpush1.msra.mxu0 0.0
        %5437 = vmatprep.subr.mxu0 0.0
        %5438 = vmatpush1.msra.mxu0 0.0
        %5439 = vmatprep.subr.mxu0 0.0
        %5440 = vmatpush1.msra.mxu0 0.0
        %5441 = vmatprep.subr.mxu0 0.0
        %5442 = vmatpush1.msra.mxu0 0.0
        %5443 = vmatprep.subr.mxu0 0.0
        %5444 = vmatpush1.msra.mxu0 0.0
        %5445 = vmatprep.subr.mxu0 0.0
        %5446 = vmatpush1.msra.mxu0 0.0
        %5447 = vmatprep.subr.mxu0 0.0
        %5448 = vmatpush1.msra.mxu0 0.0
        %5449 = vmatprep.subr.mxu0 0.0
        %5450 = vmatpush1.msra.mxu0 0.0
        %5451 = vmatprep.subr.mxu0 0.0
        %5452 = vmatpush1.msra.mxu0 0.0
        %5453 = vmatprep.subr.mxu0 0.0
        %5454 = vmatpush1.msra.mxu0 0.0
        %5455 = vmatprep.subr.mxu0 0.0
        %5456 = vmatpush1.msra.mxu0 0.0
        %5457 = vmatprep.subr.mxu0 0.0
        %5458 = vmatpush1.msra.mxu0 0.0
        %5459 = vmatprep.subr.mxu0 0.0
        %5460 = vmatpush1.msra.mxu0 0.0
        %5461 = vmatprep.subr.mxu0 0.0
        %5462 = vmatpush1.msra.mxu0 0.0
        %5463 = vmatprep.subr.mxu0 0.0
        %5464 = vmatpush1.msra.mxu0 0.0
        %5465 = vmatprep.mubr.f32.mxu0 0.0
        %5466 = vmatmul.mubr.f32.gmra.mrb[0].mxu0 %v5383
        %v5467 = vpop.f32.mrb[0].mxu0
        %v5468 = vadd.f32 %v5400, %v5467
        %v5469 = vpop.f32.mrb[0].mxu0
        %5470 = vdwg.mxu0
        %vm5471 = vcmask 73728
        %5472 = vst.msk [vmem:[%s378] sm:$0x1] %vm5471, %v5468
        %s5473 = sand.u32 %s269, 1
        %s5474 = scalar_lea.sflag [#allocation4], %s5473
        %s5475 = sand.u32 %s269, 1
        %s5476 = scalar_lea.vmem [#allocation3], %s5475
        // Predicated region
        $region65: #{simplenet_forward.1} parent=63 // pred_check
          %p5477 = pneg %p279
        $region66: #{simplenet_forward.1} parent=63 // pred_check_branch
          %5479 = sbr.rel (%p5477) target = $region68
        $region67: #{simplenet_forward.1} parent=63 // pred_region
          %s5481 = ssub.s32 16, 16
          %5482 = vsyncadd %s5474, %s5481
          %s5483 = smul.addr %s25, 16
          %s5484 = scalar_lea.hbm %s11, %s5483
          %s5486 = sshll.u32 %s5476, 4
          %s5487 = int_to_ptr.vmem [resolvable:$true] %s5486
          %5489 = dma.vmem_to_hbm [thread:$0]  %s5487, 16, %s5484, %s5474
        $region68: #{simplenet_forward.1} parent=63 // pred_fallthru
          _
      $region64: #{simplenet_forward.1} parent=5 // pred_fallthru
        _
      %p5490 = scmp.le.s32.totalorder 2, %s20
      // Predicated region
      $region69: #{simplenet_forward.1} parent=5 // pred_check
        %p5491 = pneg %p5490
      $region70: #{simplenet_forward.1} parent=5 // pred_check_branch
        %5493 = sbr.rel (%p5491) target = $region72
      $region71: #{simplenet_forward.1} parent=5 // pred_region
        %s5494 = ssub.s32 %s20, 2
        // Predicated region
        $region73: #{simplenet_forward.1} parent=71 // pred_check
          %p5495 = pneg %p285
        $region74: #{simplenet_forward.1} parent=71 // pred_check_branch
          %5497 = sbr.rel (%p5495) target = $region76
        $region75: #{simplenet_forward.1} parent=71 // pred_region
          %s5498 = sand.u32 %s270, 1
          %s5499 = scalar_lea.sflag [#allocation4], %s5498
          %s5500 = sand.u32 %s270, 1
          %s5501 = scalar_lea.vmem [#allocation3], %s5500
          %5502 = dma.done %s5499, 16
        $region76: #{simplenet_forward.1} parent=71 // pred_fallthru
          _
      $region72: #{simplenet_forward.1} parent=5 // pred_fallthru
        _
    $region6: #{simplenet_forward.1} parent=1 // loop_footer
      %s24 = sadd.s32 1, %s20
    $region7: #{simplenet_forward.1} parent=1 // loop_footer_branch
      %19 = sbr.rel target = $region3
    $region8: #{simplenet_forward.1} parent=1 // loop_exit
      _
    %5503 = vsyncpa [#allocation4], 1
    %s5504 = scalar_lea.sflag [#allocation4], 1
    %5505 = vsyncpa %s5504, 1

</llo_original>
